<compile_context>
chip_gen: v7x
topology: tpu7x:2x2x1
jax: 0.10.0
libtpu: 0.0.40
codegen_flags: <defaults>
</compile_context>

<pallas_src>
import functools

import jax
import jax.numpy as jnp
from jax.experimental import pallas as pl
from jax.experimental.pallas import tpu as pltpu


# -----------------------------------------------------------------------------
# Kernel
# -----------------------------------------------------------------------------
def _resnet_pointnet_kernel(*refs, value_dtype):
    # refs layout:
    #   [0]      p            (Bt*T, Dp)
    #   [1:3]    fc_pos       w (Dp, 2Hp), b (1, 2Hp)
    #   [3:8]    block_0      w0a (2Hp,Hp), b0a, w0b (Hp,Hp), b0b, s0 (2Hp,Hp)
    #   [8:36]   blocks 1..4  (wat, wab, ba, wb, bb, st, sb) x 4  (all (Hp,Hp)/(1,Hp))
    #   [36:38]  fc_c         w (Hp, Cp), b (1, Cp)
    #   [38]     out          (1, Bt, Cp)
    f32 = jnp.float32
    p_ref = refs[0]
    wpos, bpos = refs[1], refs[2]
    w0a, b0a, w0b, b0b, s0 = refs[3:8]
    cat = refs[8:36]
    wc, bc = refs[36], refs[37]
    out_ref = refs[38]

    rows = p_ref.shape[0]
    Bt = out_ref.shape[1]
    T = rows // Bt
    vdt = value_dtype

    relu = lambda v: jnp.maximum(v, 0.0)

    def mm(x, w_ref):
        # MXU matmul: operands in the weight (compute) dtype, f32 accumulation.
        w = w_ref[...]
        return jnp.dot(x.astype(w.dtype), w, preferred_element_type=f32)

    def pool_rows(v):
        # per-batch-element max over the T points axis -> (Bt, C)
        return jnp.max(v.reshape(Bt, T, v.shape[-1]), axis=1)

    def add_rows(v, r):
        # add one (Bt, C) row per batch element onto the (Bt*T, C) slab
        return (v.reshape(Bt, T, v.shape[-1]) + r[:, None, :]).reshape(v.shape)

    x = p_ref[...]                                          # (Bt*T, Dp)

    # fc_pos
    net = (mm(x, wpos) + bpos[...]).astype(vdt)             # (Bt*T, 2Hp)

    # block_0 : ResnetBlockFC(2H -> H)
    h = (mm(relu(net), w0a) + b0a[...]).astype(vdt)
    dx = mm(relu(h), w0b) + b0b[...]
    net = (mm(net, s0) + dx).astype(vdt)                    # (Bt*T, Hp)

    # blocks 1..4 : ResnetBlockFC(concat([net, pooled], -1) -> H)
    # concat is realised by the pre-split weights; the pooled half (and the
    # fc_0 bias) is computed once per batch element on (Bt, Hp) rows.
    for i in range(4):
        wat, wab, ba, wb, bb, st, sb = cat[7 * i:7 * i + 7]
        pool = pool_rows(net)                               # (Bt, Hp)
        ph = mm(relu(pool), wab) + ba[...]                  # pooled half of fc_0 (+ bias)
        ps = mm(pool, sb)                                   # pooled half of shortcut
        h = add_rows(mm(relu(net), wat), ph).astype(vdt)
        dx = mm(relu(h), wb) + bb[...]
        net = (add_rows(mm(net, st), ps) + dx).astype(vdt)  # (Bt*T, Hp)

    # global max-pool + fc_c (output lane-padded to Cp, trimmed in the wrapper)
    pool = pool_rows(net)                                   # (Bt, Hp)
    out_ref[0] = (mm(relu(pool), wc) + bc[...]).astype(out_ref.dtype)


# -----------------------------------------------------------------------------
# Hardware-aware defaults
# -----------------------------------------------------------------------------
def _device_kind():
    try:
        return jax.devices()[0].device_kind.lower()
    except Exception:
        return ""


def _is_v5e():
    k = _device_kind()
    return ("v5 lite" in k) or ("v5e" in k) or ("v5litepod" in k)


def _default_vmem_limit_bytes():
    # ~3/4 of physical VMEM: 48 MiB on v7x (64 MiB/TC), 96 MiB on v5e/v6e
    # (128 MiB).  Leaves headroom for compiler-internal scratch.
    try:
        cap = int(pltpu.get_tpu_info().vmem_capacity_bytes)
        return cap * 3 // 4
    except Exception:
        return 48 << 20          # safe on every generation


# -----------------------------------------------------------------------------
# Wrapper
# -----------------------------------------------------------------------------
def resnet_pointnet_pallas(p, params, *, batch_tile=None,
                           compute_dtype=jnp.bfloat16, value_dtype=None,
                           vmem_limit_bytes=None):
    B, T, D = p.shape
    c_dim, H = params["fc_c"][0].shape
    cdt = compute_dtype

    if value_dtype is None:
        # bf16 residual carry halves activation VMEM on v6e/v7x; v5e has no
        # bf16 VPU, so keep elementwise values f32 there.
        value_dtype = jnp.float32 if _is_v5e() else cdt
    if vmem_limit_bytes is None:
        vmem_limit_bytes = _default_vmem_limit_bytes()

    # --- input padding --------------------------------------------------------
    # Points axis -> multiple of 8 sublanes by repeating the last point
    # (exact: duplicated points do not change any max-pool).
    T_pad = pl.cdiv(T, 8) * 8
    if T_pad != T:
        tail = jnp.broadcast_to(p[:, -1:, :], (B, T_pad - T, D))
        p = jnp.concatenate([p, tail], axis=1)

    # Point dimension (D=3) zero-padded to 8 (matched by zero rows in fc_pos).
    Dp = pl.cdiv(D, 8) * 8
    if Dp != D:
        p = jnp.pad(p, ((0, 0), (0, 0), (0, Dp - D)))

    # Batch tiling: target ~1024 rows per step (fills MXU M, amortises the
    # ~0.35 us per-step overhead) and guarantee >=2 grid steps so the
    # 'parallel' batch axis can be shed onto v7x's second TensorCore.
    if batch_tile is None:
        batch_tile = max(1, min(B, max(1, 1024 // T_pad)))
    Bt = int(batch_tile)
    if B >= 2:
        Bt = min(Bt, pl.cdiv(B, 2))
    nb = pl.cdiv(B, Bt)
    B_pad = nb * Bt
    if B_pad != B:
        p = jnp.concatenate([p, jnp.zeros((B_pad - B, T_pad, Dp), p.dtype)], axis=0)

    p_flat = p.reshape(B_pad * T_pad, Dp).astype(jnp.float32)

    # --- parameter padding / pre-splitting ------------------------------------
    # Lane-dense hidden dim: zero-padded weight rows/cols keep the padded
    # channels exactly zero through relu / max / residual adds.
    Hp = pl.cdiv(H, 128) * 128
    twoHp = 2 * Hp
    Cp = pl.cdiv(c_dim, 128) * 128

    def w_t(w):   # torch (out, in) -> (in, out), f32
        return jnp.asarray(w, jnp.float32).T

    def embed_w(wt, shape):   # zero-pad to `shape`, cast to matmul dtype
        out = jnp.zeros(shape, jnp.float32).at[:wt.shape[0], :wt.shape[1]].set(wt)
        return out.astype(cdt)

    def embed_b(b, n):        # zero-padded f32 bias row (added after f32 accum)
        b = jnp.asarray(b, jnp.float32)
        return jnp.zeros((1, n), jnp.float32).at[0, :b.shape[0]].set(b)

    wpos, bpos = params["fc_pos"]
    flat = [embed_w(w_t(wpos), (Dp, twoHp)), embed_b(bpos, twoHp)]

    # block_0 (plain ResnetBlockFC 2H -> H): no split needed.
    w0, b0, w1, b1, ws = params["blocks"][0]
    flat += [embed_w(w_t(w0), (twoHp, Hp)), embed_b(b0, Hp),
             embed_w(w_t(w1), (Hp, Hp)), embed_b(b1, Hp),
             embed_w(w_t(ws), (twoHp, Hp))]

    # blocks 1..4: pre-split the (2H, H) fc_0 / shortcut weights into the
    # "net" (:H) and "pooled" (H:) halves in the wrapper.
    for (w0, b0, w1, b1, ws) in params["blocks"][1:]:
        w0t, wst = w_t(w0), w_t(ws)
        flat += [embed_w(w0t[:H], (Hp, Hp)), embed_w(w0t[H:], (Hp, Hp)),
                 embed_b(b0, Hp),
                 embed_w(w_t(w1), (Hp, Hp)), embed_b(b1, Hp),
                 embed_w(wst[:H], (Hp, Hp)), embed_w(wst[H:], (Hp, Hp))]

    # fc_c: pad output channels to a multiple of 128 lanes (lane-dense store).
    wc, bc = params["fc_c"]
    flat += [embed_w(w_t(wc), (Hp, Cp)), embed_b(bc, Cp)]

    # --- specs ----------------------------------------------------------------
    in_specs = [pl.BlockSpec((Bt * T_pad, Dp), lambda b: (b, 0))]
    # Parameters: full-array blocks, constant index map (fetched once) and
    # single-buffered so only one resident copy lives in VMEM.
    in_specs += [pl.BlockSpec(a.shape, lambda b: (0, 0),
                              pipeline_mode=pl.Buffered(1)) for a in flat]

    kernel = functools.partial(_resnet_pointnet_kernel, value_dtype=value_dtype)

    out = pl.pallas_call(
        kernel,
        out_shape=jax.ShapeDtypeStruct((nb, Bt, Cp), jnp.float32),
        grid=(nb,),
        in_specs=in_specs,
        out_specs=pl.BlockSpec((1, Bt, Cp), lambda b: (b, 0, 0)),
        compiler_params=pltpu.CompilerParams(
            dimension_semantics=("parallel",),        # batch elements independent
            vmem_limit_bytes=int(vmem_limit_bytes)),
    )(p_flat, *flat)

    return out.reshape(B_pad, Cp)[:B, :c_dim]


# -----------------------------------------------------------------------------
# Deterministic parameter init (shapes from ResnetPointnet.__init__)
# -----------------------------------------------------------------------------
def init_params(key, dim=3, hidden_dim=32, c_dim=16):
    H = hidden_dim

    def lin(k, fan_in, fan_out):
        kw, kb = jax.random.split(k)
        w = jax.random.normal(kw, (fan_out, fan_in), jnp.float32) / jnp.sqrt(fan_in)
        b = 0.01 * jax.random.normal(kb, (fan_out,), jnp.float32)
        return w, b

    keys = jax.random.split(key, 2 + 5 * 3)
    params = {"fc_pos": lin(keys[0], dim, 2 * H), "blocks": [],
              "fc_c": lin(keys[1], H, c_dim)}
    # NOTE: PyTorch init zeroes fc_1.weight; random weights here exercise the
    # residual matmul path (forward semantics identical).
    for i in range(5):
        w0, b0 = lin(keys[2 + 3 * i], 2 * H, H)          # fc_0: 2H -> H
        w1, b1 = lin(keys[3 + 3 * i], H, H)              # fc_1: H -> H
        ws, _ = lin(keys[4 + 3 * i], 2 * H, H)           # shortcut, no bias
        params["blocks"].append((w0, b0, w1, b1, ws))
    return params


# -----------------------------------------------------------------------------
# Pure-JAX reference (mirrors the PyTorch forward literally, with concat)
# -----------------------------------------------------------------------------
def resnet_pointnet_ref(p, params):
    def lin(x, w, b=None):
        y = x @ w.T
        return y if b is None else y + b

    def resblock(x, w0, b0, w1, b1, ws):
        h = lin(jax.nn.relu(x), w0, b0)
        dx = lin(jax.nn.relu(h), w1, b1)
        xs = lin(x, ws)
        return xs + dx

    net = lin(p, *params["fc_pos"])
    net = resblock(net, *params["blocks"][0])
    for i in range(1, 5):
        pooled = jnp.max(net, axis=1, keepdims=True)
        pooled = jnp.broadcast_to(pooled, net.shape)
        net = jnp.concatenate([net, pooled], axis=2)
        net = resblock(net, *params["blocks"][i])
    net = jnp.max(net, axis=1)
    return lin(jax.nn.relu(net), *params["fc_c"])


# -----------------------------------------------------------------------------
if __name__ == "__main__":
    key = jax.random.PRNGKey(0)
    kp, kx = jax.random.split(key)

    B, T, D = 4, 32, 3           # batch, num points, point dim
    hidden_dim, c_dim = 32, 16

    params = init_params(kp, dim=D, hidden_dim=hidden_dim, c_dim=c_dim)
    p = jax.random.normal(kx, (B, T, D), jnp.float32)

    ref = resnet_pointnet_ref(p, params)

    # f32 matmuls + f32 residuals: tight-tolerance correctness check.
    out_f32 = resnet_pointnet_pallas(p, params, batch_tile=2,
                                     compute_dtype=jnp.float32,
                                     value_dtype=jnp.float32)
    out_f32 = jax.block_until_ready(out_f32)
    assert out_f32.shape == (B, c_dim)
    err = jnp.max(jnp.abs(out_f32 - ref))
    assert jnp.allclose(out_f32, ref, rtol=1e-4, atol=5e-4), f"f32 max abs err {err}"

    # Default path: bf16 MXU operands (+ bf16 residual carry on v6e/v7x,
    # f32 on v5e), f32 accumulation, auto batch tiling / VMEM limit.
    out = resnet_pointnet_pallas(p, params)
    out = jax.block_until_ready(out)
    assert out.shape == (B, c_dim)
    err_bf16 = jnp.max(jnp.abs(out - ref))
    assert jnp.allclose(out, ref, rtol=1e-1, atol=1e-1), \
        f"bf16 max abs err {err_bf16}"

    print("KERNEL_OK")
</pallas_src>

<mosaic_0001>
module attributes {stable_mosaic.version = 11 : i64} {
  func.func @_resnet_pointnet_kernel(%arg0: i32, %arg1: memref<64x8xf32, #tpu.memory_space<vmem>>, %arg2: memref<8x256xf32, #tpu.memory_space<vmem>>, %arg3: memref<1x256xf32, #tpu.memory_space<vmem>>, %arg4: memref<256x128xf32, #tpu.memory_space<vmem>>, %arg5: memref<1x128xf32, #tpu.memory_space<vmem>>, %arg6: memref<128x128xf32, #tpu.memory_space<vmem>>, %arg7: memref<1x128xf32, #tpu.memory_space<vmem>>, %arg8: memref<256x128xf32, #tpu.memory_space<vmem>>, %arg9: memref<128x128xf32, #tpu.memory_space<vmem>>, %arg10: memref<128x128xf32, #tpu.memory_space<vmem>>, %arg11: memref<1x128xf32, #tpu.memory_space<vmem>>, %arg12: memref<128x128xf32, #tpu.memory_space<vmem>>, %arg13: memref<1x128xf32, #tpu.memory_space<vmem>>, %arg14: memref<128x128xf32, #tpu.memory_space<vmem>>, %arg15: memref<128x128xf32, #tpu.memory_space<vmem>>, %arg16: memref<128x128xf32, #tpu.memory_space<vmem>>, %arg17: memref<128x128xf32, #tpu.memory_space<vmem>>, %arg18: memref<1x128xf32, #tpu.memory_space<vmem>>, %arg19: memref<128x128xf32, #tpu.memory_space<vmem>>, %arg20: memref<1x128xf32, #tpu.memory_space<vmem>>, %arg21: memref<128x128xf32, #tpu.memory_space<vmem>>, %arg22: memref<128x128xf32, #tpu.memory_space<vmem>>, %arg23: memref<128x128xf32, #tpu.memory_space<vmem>>, %arg24: memref<128x128xf32, #tpu.memory_space<vmem>>, %arg25: memref<1x128xf32, #tpu.memory_space<vmem>>, %arg26: memref<128x128xf32, #tpu.memory_space<vmem>>, %arg27: memref<1x128xf32, #tpu.memory_space<vmem>>, %arg28: memref<128x128xf32, #tpu.memory_space<vmem>>, %arg29: memref<128x128xf32, #tpu.memory_space<vmem>>, %arg30: memref<128x128xf32, #tpu.memory_space<vmem>>, %arg31: memref<128x128xf32, #tpu.memory_space<vmem>>, %arg32: memref<1x128xf32, #tpu.memory_space<vmem>>, %arg33: memref<128x128xf32, #tpu.memory_space<vmem>>, %arg34: memref<1x128xf32, #tpu.memory_space<vmem>>, %arg35: memref<128x128xf32, #tpu.memory_space<vmem>>, %arg36: memref<128x128xf32, #tpu.memory_space<vmem>>, %arg37: memref<128x128xf32, #tpu.memory_space<vmem>>, %arg38: memref<1x128xf32, #tpu.memory_space<vmem>>, %arg39: memref<1x2x128xf32, #tpu.memory_space<vmem>>) attributes {dimension_semantics = [#tpu.dimension_semantics<parallel>], iteration_bounds = array<i64: 2>, scalar_prefetch = 0 : i64, scratch_operands = 0 : i64, tpu.core_type = #tpu.core_type<tc>, window_params = [{transform_indices = @transform_0, window_bounds = array<i64: 64, 8>}, {pipeline_mode = #tpu.pipeline_mode<synchronous>, transform_indices = @transform_1, window_bounds = array<i64: 8, 256>}, {pipeline_mode = #tpu.pipeline_mode<synchronous>, transform_indices = @transform_2, window_bounds = array<i64: 1, 256>}, {pipeline_mode = #tpu.pipeline_mode<synchronous>, transform_indices = @transform_3, window_bounds = array<i64: 256, 128>}, {pipeline_mode = #tpu.pipeline_mode<synchronous>, transform_indices = @transform_4, window_bounds = array<i64: 1, 128>}, {pipeline_mode = #tpu.pipeline_mode<synchronous>, transform_indices = @transform_5, window_bounds = array<i64: 128, 128>}, {pipeline_mode = #tpu.pipeline_mode<synchronous>, transform_indices = @transform_6, window_bounds = array<i64: 1, 128>}, {pipeline_mode = #tpu.pipeline_mode<synchronous>, transform_indices = @transform_7, window_bounds = array<i64: 256, 128>}, {pipeline_mode = #tpu.pipeline_mode<synchronous>, transform_indices = @transform_8, window_bounds = array<i64: 128, 128>}, {pipeline_mode = #tpu.pipeline_mode<synchronous>, transform_indices = @transform_9, window_bounds = array<i64: 128, 128>}, {pipeline_mode = #tpu.pipeline_mode<synchronous>, transform_indices = @transform_10, window_bounds = array<i64: 1, 128>}, {pipeline_mode = #tpu.pipeline_mode<synchronous>, transform_indices = @transform_11, window_bounds = array<i64: 128, 128>}, {pipeline_mode = #tpu.pipeline_mode<synchronous>, transform_indices = @transform_12, window_bounds = array<i64: 1, 128>}, {pipeline_mode = #tpu.pipeline_mode<synchronous>, transform_indices = @transform_13, window_bounds = array<i64: 128, 128>}, {pipeline_mode = #tpu.pipeline_mode<synchronous>, transform_indices = @transform_14, window_bounds = array<i64: 128, 128>}, {pipeline_mode = #tpu.pipeline_mode<synchronous>, transform_indices = @transform_15, window_bounds = array<i64: 128, 128>}, {pipeline_mode = #tpu.pipeline_mode<synchronous>, transform_indices = @transform_16, window_bounds = array<i64: 128, 128>}, {pipeline_mode = #tpu.pipeline_mode<synchronous>, transform_indices = @transform_17, window_bounds = array<i64: 1, 128>}, {pipeline_mode = #tpu.pipeline_mode<synchronous>, transform_indices = @transform_18, window_bounds = array<i64: 128, 128>}, {pipeline_mode = #tpu.pipeline_mode<synchronous>, transform_indices = @transform_19, window_bounds = array<i64: 1, 128>}, {pipeline_mode = #tpu.pipeline_mode<synchronous>, transform_indices = @transform_20, window_bounds = array<i64: 128, 128>}, {pipeline_mode = #tpu.pipeline_mode<synchronous>, transform_indices = @transform_21, window_bounds = array<i64: 128, 128>}, {pipeline_mode = #tpu.pipeline_mode<synchronous>, transform_indices = @transform_22, window_bounds = array<i64: 128, 128>}, {pipeline_mode = #tpu.pipeline_mode<synchronous>, transform_indices = @transform_23, window_bounds = array<i64: 128, 128>}, {pipeline_mode = #tpu.pipeline_mode<synchronous>, transform_indices = @transform_24, window_bounds = array<i64: 1, 128>}, {pipeline_mode = #tpu.pipeline_mode<synchronous>, transform_indices = @transform_25, window_bounds = array<i64: 128, 128>}, {pipeline_mode = #tpu.pipeline_mode<synchronous>, transform_indices = @transform_26, window_bounds = array<i64: 1, 128>}, {pipeline_mode = #tpu.pipeline_mode<synchronous>, transform_indices = @transform_27, window_bounds = array<i64: 128, 128>}, {pipeline_mode = #tpu.pipeline_mode<synchronous>, transform_indices = @transform_28, window_bounds = array<i64: 128, 128>}, {pipeline_mode = #tpu.pipeline_mode<synchronous>, transform_indices = @transform_29, window_bounds = array<i64: 128, 128>}, {pipeline_mode = #tpu.pipeline_mode<synchronous>, transform_indices = @transform_30, window_bounds = array<i64: 128, 128>}, {pipeline_mode = #tpu.pipeline_mode<synchronous>, transform_indices = @transform_31, window_bounds = array<i64: 1, 128>}, {pipeline_mode = #tpu.pipeline_mode<synchronous>, transform_indices = @transform_32, window_bounds = array<i64: 128, 128>}, {pipeline_mode = #tpu.pipeline_mode<synchronous>, transform_indices = @transform_33, window_bounds = array<i64: 1, 128>}, {pipeline_mode = #tpu.pipeline_mode<synchronous>, transform_indices = @transform_34, window_bounds = array<i64: 128, 128>}, {pipeline_mode = #tpu.pipeline_mode<synchronous>, transform_indices = @transform_35, window_bounds = array<i64: 128, 128>}, {pipeline_mode = #tpu.pipeline_mode<synchronous>, transform_indices = @transform_36, window_bounds = array<i64: 128, 128>}, {pipeline_mode = #tpu.pipeline_mode<synchronous>, transform_indices = @transform_37, window_bounds = array<i64: 1, 128>}, {transform_indices = @transform_38, window_bounds = array<i64: 1, 2, 128>}]} {
    %c0 = arith.constant 0 : index
    %c0_0 = arith.constant 0 : index
    %0 = vector.load %arg1[%c0, %c0_0] : memref<64x8xf32, #tpu.memory_space<vmem>>, vector<64x8xf32>
    %c0_1 = arith.constant 0 : index
    %c0_2 = arith.constant 0 : index
    %1 = vector.load %arg2[%c0_1, %c0_2] : memref<8x256xf32, #tpu.memory_space<vmem>>, vector<8x256xf32>
    %cst = arith.constant dense<0.000000e+00> : vector<64x256xf32>
    %2 = tpu.matmul %0, %1, %cst {dimension_numbers = #tpu.dot_dimension_numbers<[1], [0], [0], [1], [0, 0, 1, 1], [], []>} : vector<64x8xf32>, vector<8x256xf32>, vector<64x256xf32> -> vector<64x256xf32>
    %c0_3 = arith.constant 0 : index
    %c0_4 = arith.constant 0 : index
    %3 = vector.load %arg3[%c0_3, %c0_4] : memref<1x256xf32, #tpu.memory_space<vmem>>, vector<1x256xf32>
    %4 = vector.broadcast %3 : vector<1x256xf32> to vector<64x256xf32>
    %5 = arith.addf %2, %4 : vector<64x256xf32>
    %cst_5 = arith.constant 0.000000e+00 : f32
    %6 = vector.broadcast %cst_5 : f32 to vector<64x256xf32>
    %7 = arith.maximumf %5, %6 : vector<64x256xf32>
    %c0_6 = arith.constant 0 : index
    %c0_7 = arith.constant 0 : index
    %8 = vector.load %arg4[%c0_6, %c0_7] : memref<256x128xf32, #tpu.memory_space<vmem>>, vector<256x128xf32>
    %cst_8 = arith.constant dense<0.000000e+00> : vector<64x128xf32>
    %9 = tpu.matmul %7, %8, %cst_8 {dimension_numbers = #tpu.dot_dimension_numbers<[1], [0], [0], [1], [0, 0, 1, 1], [], []>} : vector<64x256xf32>, vector<256x128xf32>, vector<64x128xf32> -> vector<64x128xf32>
    %c0_9 = arith.constant 0 : index
    %c0_10 = arith.constant 0 : index
    %10 = vector.load %arg5[%c0_9, %c0_10] : memref<1x128xf32, #tpu.memory_space<vmem>>, vector<1x128xf32>
    %11 = vector.broadcast %10 : vector<1x128xf32> to vector<64x128xf32>
    %12 = arith.addf %9, %11 : vector<64x128xf32>
    %cst_11 = arith.constant 0.000000e+00 : f32
    %13 = vector.broadcast %cst_11 : f32 to vector<64x128xf32>
    %14 = arith.maximumf %12, %13 : vector<64x128xf32>
    %c0_12 = arith.constant 0 : index
    %c0_13 = arith.constant 0 : index
    %15 = vector.load %arg6[%c0_12, %c0_13] : memref<128x128xf32, #tpu.memory_space<vmem>>, vector<128x128xf32>
    %cst_14 = arith.constant dense<0.000000e+00> : vector<64x128xf32>
    %16 = tpu.matmul %14, %15, %cst_14 {dimension_numbers = #tpu.dot_dimension_numbers<[1], [0], [0], [1], [0, 0, 1, 1], [], []>} : vector<64x128xf32>, vector<128x128xf32>, vector<64x128xf32> -> vector<64x128xf32>
    %c0_15 = arith.constant 0 : index
    %c0_16 = arith.constant 0 : index
    %17 = vector.load %arg7[%c0_15, %c0_16] : memref<1x128xf32, #tpu.memory_space<vmem>>, vector<1x128xf32>
    %18 = vector.broadcast %17 : vector<1x128xf32> to vector<64x128xf32>
    %19 = arith.addf %16, %18 : vector<64x128xf32>
    %c0_17 = arith.constant 0 : index
    %c0_18 = arith.constant 0 : index
    %20 = vector.load %arg8[%c0_17, %c0_18] : memref<256x128xf32, #tpu.memory_space<vmem>>, vector<256x128xf32>
    %cst_19 = arith.constant dense<0.000000e+00> : vector<64x128xf32>
    %21 = tpu.matmul %5, %20, %cst_19 {dimension_numbers = #tpu.dot_dimension_numbers<[1], [0], [0], [1], [0, 0, 1, 1], [], []>} : vector<64x256xf32>, vector<256x128xf32>, vector<64x128xf32> -> vector<64x128xf32>
    %22 = arith.addf %21, %19 : vector<64x128xf32>
    %23 = vector.shape_cast %22 : vector<64x128xf32> to vector<2x32x128xf32>
    %cst_20 = arith.constant dense<0xFF800000> : vector<2x128xf32>
    %24 = vector.multi_reduction <maximumf>, %23, %cst_20 [1] : vector<2x32x128xf32> to vector<2x128xf32>
    %cst_21 = arith.constant 0.000000e+00 : f32
    %25 = vector.broadcast %cst_21 : f32 to vector<2x128xf32>
    %26 = arith.maximumf %24, %25 : vector<2x128xf32>
    %c0_22 = arith.constant 0 : index
    %c0_23 = arith.constant 0 : index
    %27 = vector.load %arg10[%c0_22, %c0_23] : memref<128x128xf32, #tpu.memory_space<vmem>>, vector<128x128xf32>
    %cst_24 = arith.constant dense<0.000000e+00> : vector<2x128xf32>
    %28 = tpu.matmul %26, %27, %cst_24 {dimension_numbers = #tpu.dot_dimension_numbers<[1], [0], [0], [1], [0, 0, 1, 1], [], []>} : vector<2x128xf32>, vector<128x128xf32>, vector<2x128xf32> -> vector<2x128xf32>
    %c0_25 = arith.constant 0 : index
    %c0_26 = arith.constant 0 : index
    %29 = vector.load %arg11[%c0_25, %c0_26] : memref<1x128xf32, #tpu.memory_space<vmem>>, vector<1x128xf32>
    %30 = vector.broadcast %29 : vector<1x128xf32> to vector<2x128xf32>
    %31 = arith.addf %28, %30 : vector<2x128xf32>
    %c0_27 = arith.constant 0 : index
    %c0_28 = arith.constant 0 : index
    %32 = vector.load %arg15[%c0_27, %c0_28] : memref<128x128xf32, #tpu.memory_space<vmem>>, vector<128x128xf32>
    %cst_29 = arith.constant dense<0.000000e+00> : vector<2x128xf32>
    %33 = tpu.matmul %24, %32, %cst_29 {dimension_numbers = #tpu.dot_dimension_numbers<[1], [0], [0], [1], [0, 0, 1, 1], [], []>} : vector<2x128xf32>, vector<128x128xf32>, vector<2x128xf32> -> vector<2x128xf32>
    %cst_30 = arith.constant 0.000000e+00 : f32
    %34 = vector.broadcast %cst_30 : f32 to vector<64x128xf32>
    %35 = arith.maximumf %22, %34 : vector<64x128xf32>
    %c0_31 = arith.constant 0 : index
    %c0_32 = arith.constant 0 : index
    %36 = vector.load %arg9[%c0_31, %c0_32] : memref<128x128xf32, #tpu.memory_space<vmem>>, vector<128x128xf32>
    %cst_33 = arith.constant dense<0.000000e+00> : vector<64x128xf32>
    %37 = tpu.matmul %35, %36, %cst_33 {dimension_numbers = #tpu.dot_dimension_numbers<[1], [0], [0], [1], [0, 0, 1, 1], [], []>} : vector<64x128xf32>, vector<128x128xf32>, vector<64x128xf32> -> vector<64x128xf32>
    %38 = vector.shape_cast %37 : vector<64x128xf32> to vector<2x32x128xf32>
    %39 = vector.shape_cast %31 : vector<2x128xf32> to vector<2x1x128xf32>
    %40 = vector.broadcast %39 : vector<2x1x128xf32> to vector<2x32x128xf32>
    %41 = arith.addf %38, %40 : vector<2x32x128xf32>
    %42 = vector.shape_cast %41 : vector<2x32x128xf32> to vector<64x128xf32>
    %cst_34 = arith.constant 0.000000e+00 : f32
    %43 = vector.broadcast %cst_34 : f32 to vector<64x128xf32>
    %44 = arith.maximumf %42, %43 : vector<64x128xf32>
    %c0_35 = arith.constant 0 : index
    %c0_36 = arith.constant 0 : index
    %45 = vector.load %arg12[%c0_35, %c0_36] : memref<128x128xf32, #tpu.memory_space<vmem>>, vector<128x128xf32>
    %cst_37 = arith.constant dense<0.000000e+00> : vector<64x128xf32>
    %46 = tpu.matmul %44, %45, %cst_37 {dimension_numbers = #tpu.dot_dimension_numbers<[1], [0], [0], [1], [0, 0, 1, 1], [], []>} : vector<64x128xf32>, vector<128x128xf32>, vector<64x128xf32> -> vector<64x128xf32>
    %c0_38 = arith.constant 0 : index
    %c0_39 = arith.constant 0 : index
    %47 = vector.load %arg13[%c0_38, %c0_39] : memref<1x128xf32, #tpu.memory_space<vmem>>, vector<1x128xf32>
    %48 = vector.broadcast %47 : vector<1x128xf32> to vector<64x128xf32>
    %49 = arith.addf %46, %48 : vector<64x128xf32>
    %c0_40 = arith.constant 0 : index
    %c0_41 = arith.constant 0 : index
    %50 = vector.load %arg14[%c0_40, %c0_41] : memref<128x128xf32, #tpu.memory_space<vmem>>, vector<128x128xf32>
    %cst_42 = arith.constant dense<0.000000e+00> : vector<64x128xf32>
    %51 = tpu.matmul %22, %50, %cst_42 {dimension_numbers = #tpu.dot_dimension_numbers<[1], [0], [0], [1], [0, 0, 1, 1], [], []>} : vector<64x128xf32>, vector<128x128xf32>, vector<64x128xf32> -> vector<64x128xf32>
    %52 = vector.shape_cast %51 : vector<64x128xf32> to vector<2x32x128xf32>
    %53 = vector.shape_cast %33 : vector<2x128xf32> to vector<2x1x128xf32>
    %54 = vector.broadcast %53 : vector<2x1x128xf32> to vector<2x32x128xf32>
    %55 = arith.addf %52, %54 : vector<2x32x128xf32>
    %56 = vector.shape_cast %55 : vector<2x32x128xf32> to vector<64x128xf32>
    %57 = arith.addf %56, %49 : vector<64x128xf32>
    %58 = vector.shape_cast %57 : vector<64x128xf32> to vector<2x32x128xf32>
    %cst_43 = arith.constant dense<0xFF800000> : vector<2x128xf32>
    %59 = vector.multi_reduction <maximumf>, %58, %cst_43 [1] : vector<2x32x128xf32> to vector<2x128xf32>
    %cst_44 = arith.constant 0.000000e+00 : f32
    %60 = vector.broadcast %cst_44 : f32 to vector<2x128xf32>
    %61 = arith.maximumf %59, %60 : vector<2x128xf32>
    %c0_45 = arith.constant 0 : index
    %c0_46 = arith.constant 0 : index
    %62 = vector.load %arg17[%c0_45, %c0_46] : memref<128x128xf32, #tpu.memory_space<vmem>>, vector<128x128xf32>
    %cst_47 = arith.constant dense<0.000000e+00> : vector<2x128xf32>
    %63 = tpu.matmul %61, %62, %cst_47 {dimension_numbers = #tpu.dot_dimension_numbers<[1], [0], [0], [1], [0, 0, 1, 1], [], []>} : vector<2x128xf32>, vector<128x128xf32>, vector<2x128xf32> -> vector<2x128xf32>
    %c0_48 = arith.constant 0 : index
    %c0_49 = arith.constant 0 : index
    %64 = vector.load %arg18[%c0_48, %c0_49] : memref<1x128xf32, #tpu.memory_space<vmem>>, vector<1x128xf32>
    %65 = vector.broadcast %64 : vector<1x128xf32> to vector<2x128xf32>
    %66 = arith.addf %63, %65 : vector<2x128xf32>
    %c0_50 = arith.constant 0 : index
    %c0_51 = arith.constant 0 : index
    %67 = vector.load %arg22[%c0_50, %c0_51] : memref<128x128xf32, #tpu.memory_space<vmem>>, vector<128x128xf32>
    %cst_52 = arith.constant dense<0.000000e+00> : vector<2x128xf32>
    %68 = tpu.matmul %59, %67, %cst_52 {dimension_numbers = #tpu.dot_dimension_numbers<[1], [0], [0], [1], [0, 0, 1, 1], [], []>} : vector<2x128xf32>, vector<128x128xf32>, vector<2x128xf32> -> vector<2x128xf32>
    %cst_53 = arith.constant 0.000000e+00 : f32
    %69 = vector.broadcast %cst_53 : f32 to vector<64x128xf32>
    %70 = arith.maximumf %57, %69 : vector<64x128xf32>
    %c0_54 = arith.constant 0 : index
    %c0_55 = arith.constant 0 : index
    %71 = vector.load %arg16[%c0_54, %c0_55] : memref<128x128xf32, #tpu.memory_space<vmem>>, vector<128x128xf32>
    %cst_56 = arith.constant dense<0.000000e+00> : vector<64x128xf32>
    %72 = tpu.matmul %70, %71, %cst_56 {dimension_numbers = #tpu.dot_dimension_numbers<[1], [0], [0], [1], [0, 0, 1, 1], [], []>} : vector<64x128xf32>, vector<128x128xf32>, vector<64x128xf32> -> vector<64x128xf32>
    %73 = vector.shape_cast %72 : vector<64x128xf32> to vector<2x32x128xf32>
    %74 = vector.shape_cast %66 : vector<2x128xf32> to vector<2x1x128xf32>
    %75 = vector.broadcast %74 : vector<2x1x128xf32> to vector<2x32x128xf32>
    %76 = arith.addf %73, %75 : vector<2x32x128xf32>
    %77 = vector.shape_cast %76 : vector<2x32x128xf32> to vector<64x128xf32>
    %cst_57 = arith.constant 0.000000e+00 : f32
    %78 = vector.broadcast %cst_57 : f32 to vector<64x128xf32>
    %79 = arith.maximumf %77, %78 : vector<64x128xf32>
    %c0_58 = arith.constant 0 : index
    %c0_59 = arith.constant 0 : index
    %80 = vector.load %arg19[%c0_58, %c0_59] : memref<128x128xf32, #tpu.memory_space<vmem>>, vector<128x128xf32>
    %cst_60 = arith.constant dense<0.000000e+00> : vector<64x128xf32>
    %81 = tpu.matmul %79, %80, %cst_60 {dimension_numbers = #tpu.dot_dimension_numbers<[1], [0], [0], [1], [0, 0, 1, 1], [], []>} : vector<64x128xf32>, vector<128x128xf32>, vector<64x128xf32> -> vector<64x128xf32>
    %c0_61 = arith.constant 0 : index
    %c0_62 = arith.constant 0 : index
    %82 = vector.load %arg20[%c0_61, %c0_62] : memref<1x128xf32, #tpu.memory_space<vmem>>, vector<1x128xf32>
    %83 = vector.broadcast %82 : vector<1x128xf32> to vector<64x128xf32>
    %84 = arith.addf %81, %83 : vector<64x128xf32>
    %c0_63 = arith.constant 0 : index
    %c0_64 = arith.constant 0 : index
    %85 = vector.load %arg21[%c0_63, %c0_64] : memref<128x128xf32, #tpu.memory_space<vmem>>, vector<128x128xf32>
    %cst_65 = arith.constant dense<0.000000e+00> : vector<64x128xf32>
    %86 = tpu.matmul %57, %85, %cst_65 {dimension_numbers = #tpu.dot_dimension_numbers<[1], [0], [0], [1], [0, 0, 1, 1], [], []>} : vector<64x128xf32>, vector<128x128xf32>, vector<64x128xf32> -> vector<64x128xf32>
    %87 = vector.shape_cast %86 : vector<64x128xf32> to vector<2x32x128xf32>
    %88 = vector.shape_cast %68 : vector<2x128xf32> to vector<2x1x128xf32>
    %89 = vector.broadcast %88 : vector<2x1x128xf32> to vector<2x32x128xf32>
    %90 = arith.addf %87, %89 : vector<2x32x128xf32>
    %91 = vector.shape_cast %90 : vector<2x32x128xf32> to vector<64x128xf32>
    %92 = arith.addf %91, %84 : vector<64x128xf32>
    %93 = vector.shape_cast %92 : vector<64x128xf32> to vector<2x32x128xf32>
    %cst_66 = arith.constant dense<0xFF800000> : vector<2x128xf32>
    %94 = vector.multi_reduction <maximumf>, %93, %cst_66 [1] : vector<2x32x128xf32> to vector<2x128xf32>
    %cst_67 = arith.constant 0.000000e+00 : f32
    %95 = vector.broadcast %cst_67 : f32 to vector<2x128xf32>
    %96 = arith.maximumf %94, %95 : vector<2x128xf32>
    %c0_68 = arith.constant 0 : index
    %c0_69 = arith.constant 0 : index
    %97 = vector.load %arg24[%c0_68, %c0_69] : memref<128x128xf32, #tpu.memory_space<vmem>>, vector<128x128xf32>
    %cst_70 = arith.constant dense<0.000000e+00> : vector<2x128xf32>
    %98 = tpu.matmul %96, %97, %cst_70 {dimension_numbers = #tpu.dot_dimension_numbers<[1], [0], [0], [1], [0, 0, 1, 1], [], []>} : vector<2x128xf32>, vector<128x128xf32>, vector<2x128xf32> -> vector<2x128xf32>
    %c0_71 = arith.constant 0 : index
    %c0_72 = arith.constant 0 : index
    %99 = vector.load %arg25[%c0_71, %c0_72] : memref<1x128xf32, #tpu.memory_space<vmem>>, vector<1x128xf32>
    %100 = vector.broadcast %99 : vector<1x128xf32> to vector<2x128xf32>
    %101 = arith.addf %98, %100 : vector<2x128xf32>
    %c0_73 = arith.constant 0 : index
    %c0_74 = arith.constant 0 : index
    %102 = vector.load %arg29[%c0_73, %c0_74] : memref<128x128xf32, #tpu.memory_space<vmem>>, vector<128x128xf32>
    %cst_75 = arith.constant dense<0.000000e+00> : vector<2x128xf32>
    %103 = tpu.matmul %94, %102, %cst_75 {dimension_numbers = #tpu.dot_dimension_numbers<[1], [0], [0], [1], [0, 0, 1, 1], [], []>} : vector<2x128xf32>, vector<128x128xf32>, vector<2x128xf32> -> vector<2x128xf32>
    %cst_76 = arith.constant 0.000000e+00 : f32
    %104 = vector.broadcast %cst_76 : f32 to vector<64x128xf32>
    %105 = arith.maximumf %92, %104 : vector<64x128xf32>
    %c0_77 = arith.constant 0 : index
    %c0_78 = arith.constant 0 : index
    %106 = vector.load %arg23[%c0_77, %c0_78] : memref<128x128xf32, #tpu.memory_space<vmem>>, vector<128x128xf32>
    %cst_79 = arith.constant dense<0.000000e+00> : vector<64x128xf32>
    %107 = tpu.matmul %105, %106, %cst_79 {dimension_numbers = #tpu.dot_dimension_numbers<[1], [0], [0], [1], [0, 0, 1, 1], [], []>} : vector<64x128xf32>, vector<128x128xf32>, vector<64x128xf32> -> vector<64x128xf32>
    %108 = vector.shape_cast %107 : vector<64x128xf32> to vector<2x32x128xf32>
    %109 = vector.shape_cast %101 : vector<2x128xf32> to vector<2x1x128xf32>
    %110 = vector.broadcast %109 : vector<2x1x128xf32> to vector<2x32x128xf32>
    %111 = arith.addf %108, %110 : vector<2x32x128xf32>
    %112 = vector.shape_cast %111 : vector<2x32x128xf32> to vector<64x128xf32>
    %cst_80 = arith.constant 0.000000e+00 : f32
    %113 = vector.broadcast %cst_80 : f32 to vector<64x128xf32>
    %114 = arith.maximumf %112, %113 : vector<64x128xf32>
    %c0_81 = arith.constant 0 : index
    %c0_82 = arith.constant 0 : index
    %115 = vector.load %arg26[%c0_81, %c0_82] : memref<128x128xf32, #tpu.memory_space<vmem>>, vector<128x128xf32>
    %cst_83 = arith.constant dense<0.000000e+00> : vector<64x128xf32>
    %116 = tpu.matmul %114, %115, %cst_83 {dimension_numbers = #tpu.dot_dimension_numbers<[1], [0], [0], [1], [0, 0, 1, 1], [], []>} : vector<64x128xf32>, vector<128x128xf32>, vector<64x128xf32> -> vector<64x128xf32>
    %c0_84 = arith.constant 0 : index
    %c0_85 = arith.constant 0 : index
    %117 = vector.load %arg27[%c0_84, %c0_85] : memref<1x128xf32, #tpu.memory_space<vmem>>, vector<1x128xf32>
    %118 = vector.broadcast %117 : vector<1x128xf32> to vector<64x128xf32>
    %119 = arith.addf %116, %118 : vector<64x128xf32>
    %c0_86 = arith.constant 0 : index
    %c0_87 = arith.constant 0 : index
    %120 = vector.load %arg28[%c0_86, %c0_87] : memref<128x128xf32, #tpu.memory_space<vmem>>, vector<128x128xf32>
    %cst_88 = arith.constant dense<0.000000e+00> : vector<64x128xf32>
    %121 = tpu.matmul %92, %120, %cst_88 {dimension_numbers = #tpu.dot_dimension_numbers<[1], [0], [0], [1], [0, 0, 1, 1], [], []>} : vector<64x128xf32>, vector<128x128xf32>, vector<64x128xf32> -> vector<64x128xf32>
    %122 = vector.shape_cast %121 : vector<64x128xf32> to vector<2x32x128xf32>
    %123 = vector.shape_cast %103 : vector<2x128xf32> to vector<2x1x128xf32>
    %124 = vector.broadcast %123 : vector<2x1x128xf32> to vector<2x32x128xf32>
    %125 = arith.addf %122, %124 : vector<2x32x128xf32>
    %126 = vector.shape_cast %125 : vector<2x32x128xf32> to vector<64x128xf32>
    %127 = arith.addf %126, %119 : vector<64x128xf32>
    %128 = vector.shape_cast %127 : vector<64x128xf32> to vector<2x32x128xf32>
    %cst_89 = arith.constant dense<0xFF800000> : vector<2x128xf32>
    %129 = vector.multi_reduction <maximumf>, %128, %cst_89 [1] : vector<2x32x128xf32> to vector<2x128xf32>
    %cst_90 = arith.constant 0.000000e+00 : f32
    %130 = vector.broadcast %cst_90 : f32 to vector<2x128xf32>
    %131 = arith.maximumf %129, %130 : vector<2x128xf32>
    %c0_91 = arith.constant 0 : index
    %c0_92 = arith.constant 0 : index
    %132 = vector.load %arg31[%c0_91, %c0_92] : memref<128x128xf32, #tpu.memory_space<vmem>>, vector<128x128xf32>
    %cst_93 = arith.constant dense<0.000000e+00> : vector<2x128xf32>
    %133 = tpu.matmul %131, %132, %cst_93 {dimension_numbers = #tpu.dot_dimension_numbers<[1], [0], [0], [1], [0, 0, 1, 1], [], []>} : vector<2x128xf32>, vector<128x128xf32>, vector<2x128xf32> -> vector<2x128xf32>
    %c0_94 = arith.constant 0 : index
    %c0_95 = arith.constant 0 : index
    %134 = vector.load %arg32[%c0_94, %c0_95] : memref<1x128xf32, #tpu.memory_space<vmem>>, vector<1x128xf32>
    %135 = vector.broadcast %134 : vector<1x128xf32> to vector<2x128xf32>
    %136 = arith.addf %133, %135 : vector<2x128xf32>
    %c0_96 = arith.constant 0 : index
    %c0_97 = arith.constant 0 : index
    %137 = vector.load %arg36[%c0_96, %c0_97] : memref<128x128xf32, #tpu.memory_space<vmem>>, vector<128x128xf32>
    %cst_98 = arith.constant dense<0.000000e+00> : vector<2x128xf32>
    %138 = tpu.matmul %129, %137, %cst_98 {dimension_numbers = #tpu.dot_dimension_numbers<[1], [0], [0], [1], [0, 0, 1, 1], [], []>} : vector<2x128xf32>, vector<128x128xf32>, vector<2x128xf32> -> vector<2x128xf32>
    %cst_99 = arith.constant 0.000000e+00 : f32
    %139 = vector.broadcast %cst_99 : f32 to vector<64x128xf32>
    %140 = arith.maximumf %127, %139 : vector<64x128xf32>
    %c0_100 = arith.constant 0 : index
    %c0_101 = arith.constant 0 : index
    %141 = vector.load %arg30[%c0_100, %c0_101] : memref<128x128xf32, #tpu.memory_space<vmem>>, vector<128x128xf32>
    %cst_102 = arith.constant dense<0.000000e+00> : vector<64x128xf32>
    %142 = tpu.matmul %140, %141, %cst_102 {dimension_numbers = #tpu.dot_dimension_numbers<[1], [0], [0], [1], [0, 0, 1, 1], [], []>} : vector<64x128xf32>, vector<128x128xf32>, vector<64x128xf32> -> vector<64x128xf32>
    %143 = vector.shape_cast %142 : vector<64x128xf32> to vector<2x32x128xf32>
    %144 = vector.shape_cast %136 : vector<2x128xf32> to vector<2x1x128xf32>
    %145 = vector.broadcast %144 : vector<2x1x128xf32> to vector<2x32x128xf32>
    %146 = arith.addf %143, %145 : vector<2x32x128xf32>
    %147 = vector.shape_cast %146 : vector<2x32x128xf32> to vector<64x128xf32>
    %cst_103 = arith.constant 0.000000e+00 : f32
    %148 = vector.broadcast %cst_103 : f32 to vector<64x128xf32>
    %149 = arith.maximumf %147, %148 : vector<64x128xf32>
    %c0_104 = arith.constant 0 : index
    %c0_105 = arith.constant 0 : index
    %150 = vector.load %arg33[%c0_104, %c0_105] : memref<128x128xf32, #tpu.memory_space<vmem>>, vector<128x128xf32>
    %cst_106 = arith.constant dense<0.000000e+00> : vector<64x128xf32>
    %151 = tpu.matmul %149, %150, %cst_106 {dimension_numbers = #tpu.dot_dimension_numbers<[1], [0], [0], [1], [0, 0, 1, 1], [], []>} : vector<64x128xf32>, vector<128x128xf32>, vector<64x128xf32> -> vector<64x128xf32>
    %c0_107 = arith.constant 0 : index
    %c0_108 = arith.constant 0 : index
    %152 = vector.load %arg34[%c0_107, %c0_108] : memref<1x128xf32, #tpu.memory_space<vmem>>, vector<1x128xf32>
    %153 = vector.broadcast %152 : vector<1x128xf32> to vector<64x128xf32>
    %154 = arith.addf %151, %153 : vector<64x128xf32>
    %c0_109 = arith.constant 0 : index
    %c0_110 = arith.constant 0 : index
    %155 = vector.load %arg35[%c0_109, %c0_110] : memref<128x128xf32, #tpu.memory_space<vmem>>, vector<128x128xf32>
    %cst_111 = arith.constant dense<0.000000e+00> : vector<64x128xf32>
    %156 = tpu.matmul %127, %155, %cst_111 {dimension_numbers = #tpu.dot_dimension_numbers<[1], [0], [0], [1], [0, 0, 1, 1], [], []>} : vector<64x128xf32>, vector<128x128xf32>, vector<64x128xf32> -> vector<64x128xf32>
    %157 = vector.shape_cast %156 : vector<64x128xf32> to vector<2x32x128xf32>
    %158 = vector.shape_cast %138 : vector<2x128xf32> to vector<2x1x128xf32>
    %159 = vector.broadcast %158 : vector<2x1x128xf32> to vector<2x32x128xf32>
    %160 = arith.addf %157, %159 : vector<2x32x128xf32>
    %161 = vector.shape_cast %160 : vector<2x32x128xf32> to vector<64x128xf32>
    %162 = arith.addf %161, %154 : vector<64x128xf32>
    %163 = vector.shape_cast %162 : vector<64x128xf32> to vector<2x32x128xf32>
    %cst_112 = arith.constant dense<0xFF800000> : vector<2x128xf32>
    %164 = vector.multi_reduction <maximumf>, %163, %cst_112 [1] : vector<2x32x128xf32> to vector<2x128xf32>
    %cst_113 = arith.constant 0.000000e+00 : f32
    %165 = vector.broadcast %cst_113 : f32 to vector<2x128xf32>
    %166 = arith.maximumf %164, %165 : vector<2x128xf32>
    %c0_114 = arith.constant 0 : index
    %c0_115 = arith.constant 0 : index
    %167 = vector.load %arg37[%c0_114, %c0_115] : memref<128x128xf32, #tpu.memory_space<vmem>>, vector<128x128xf32>
    %cst_116 = arith.constant dense<0.000000e+00> : vector<2x128xf32>
    %168 = tpu.matmul %166, %167, %cst_116 {dimension_numbers = #tpu.dot_dimension_numbers<[1], [0], [0], [1], [0, 0, 1, 1], [], []>} : vector<2x128xf32>, vector<128x128xf32>, vector<2x128xf32> -> vector<2x128xf32>
    %c0_117 = arith.constant 0 : index
    %c0_118 = arith.constant 0 : index
    %169 = vector.load %arg38[%c0_117, %c0_118] : memref<1x128xf32, #tpu.memory_space<vmem>>, vector<1x128xf32>
    %170 = vector.broadcast %169 : vector<1x128xf32> to vector<2x128xf32>
    %171 = arith.addf %168, %170 : vector<2x128xf32>
    %c0_119 = arith.constant 0 : index
    %c0_120 = arith.constant 0 : index
    %c0_121 = arith.constant 0 : index
    %172 = vector.load %arg39[%c0_119, %c0_120, %c0_121] : memref<1x2x128xf32, #tpu.memory_space<vmem>>, vector<1x2x128xf32>
    %173 = vector.shape_cast %172 : vector<1x2x128xf32> to vector<2x128xf32>
    %174 = vector.shape_cast %171 : vector<2x128xf32> to vector<1x2x128xf32>
    tpu.vector_store %arg39[%c0_119, %c0_120, %c0_121], %174 {strides = array<i32>} : memref<1x2x128xf32, #tpu.memory_space<vmem>>, vector<1x2x128xf32>,
    return
  }
  func.func @transform_0(%arg0: i32) -> (i32, i32) {
    %c0_i32 = arith.constant 0 : i32
    %c0_i32_0 = arith.constant 0 : i32
    return %arg0, %c0_i32 : i32, i32
  }
  func.func @transform_1(%arg0: i32) -> (i32, i32) {
    %c0_i32 = arith.constant 0 : i32
    %c0_i32_0 = arith.constant 0 : i32
    %c0_i32_1 = arith.constant 0 : i32
    return %c0_i32, %c0_i32_0 : i32, i32
  }
  func.func @transform_2(%arg0: i32) -> (i32, i32) {
    %c0_i32 = arith.constant 0 : i32
    %c0_i32_0 = arith.constant 0 : i32
    %c0_i32_1 = arith.constant 0 : i32
    return %c0_i32, %c0_i32_0 : i32, i32
  }
  func.func @transform_3(%arg0: i32) -> (i32, i32) {
    %c0_i32 = arith.constant 0 : i32
    %c0_i32_0 = arith.constant 0 : i32
    %c0_i32_1 = arith.constant 0 : i32
    return %c0_i32, %c0_i32_0 : i32, i32
  }
  func.func @transform_4(%arg0: i32) -> (i32, i32) {
    %c0_i32 = arith.constant 0 : i32
    %c0_i32_0 = arith.constant 0 : i32
    %c0_i32_1 = arith.constant 0 : i32
    return %c0_i32, %c0_i32_0 : i32, i32
  }
  func.func @transform_5(%arg0: i32) -> (i32, i32) {
    %c0_i32 = arith.constant 0 : i32
    %c0_i32_0 = arith.constant 0 : i32
    %c0_i32_1 = arith.constant 0 : i32
    return %c0_i32, %c0_i32_0 : i32, i32
  }
  func.func @transform_6(%arg0: i32) -> (i32, i32) {
    %c0_i32 = arith.constant 0 : i32
    %c0_i32_0 = arith.constant 0 : i32
    %c0_i32_1 = arith.constant 0 : i32
    return %c0_i32, %c0_i32_0 : i32, i32
  }
  func.func @transform_7(%arg0: i32) -> (i32, i32) {
    %c0_i32 = arith.constant 0 : i32
    %c0_i32_0 = arith.constant 0 : i32
    %c0_i32_1 = arith.constant 0 : i32
    return %c0_i32, %c0_i32_0 : i32, i32
  }
  func.func @transform_8(%arg0: i32) -> (i32, i32) {
    %c0_i32 = arith.constant 0 : i32
    %c0_i32_0 = arith.constant 0 : i32
    %c0_i32_1 = arith.constant 0 : i32
    return %c0_i32, %c0_i32_0 : i32, i32
  }
  func.func @transform_9(%arg0: i32) -> (i32, i32) {
    %c0_i32 = arith.constant 0 : i32
    %c0_i32_0 = arith.constant 0 : i32
    %c0_i32_1 = arith.constant 0 : i32
    return %c0_i32, %c0_i32_0 : i32, i32
  }
  func.func @transform_10(%arg0: i32) -> (i32, i32) {
    %c0_i32 = arith.constant 0 : i32
    %c0_i32_0 = arith.constant 0 : i32
    %c0_i32_1 = arith.constant 0 : i32
    return %c0_i32, %c0_i32_0 : i32, i32
  }
  func.func @transform_11(%arg0: i32) -> (i32, i32) {
    %c0_i32 = arith.constant 0 : i32
    %c0_i32_0 = arith.constant 0 : i32
    %c0_i32_1 = arith.constant 0 : i32
    return %c0_i32, %c0_i32_0 : i32, i32
  }
  func.func @transform_12(%arg0: i32) -> (i32, i32) {
    %c0_i32 = arith.constant 0 : i32
    %c0_i32_0 = arith.constant 0 : i32
    %c0_i32_1 = arith.constant 0 : i32
    return %c0_i32, %c0_i32_0 : i32, i32
  }
  func.func @transform_13(%arg0: i32) -> (i32, i32) {
    %c0_i32 = arith.constant 0 : i32
    %c0_i32_0 = arith.constant 0 : i32
    %c0_i32_1 = arith.constant 0 : i32
    return %c0_i32, %c0_i32_0 : i32, i32
  }
  func.func @transform_14(%arg0: i32) -> (i32, i32) {
    %c0_i32 = arith.constant 0 : i32
    %c0_i32_0 = arith.constant 0 : i32
    %c0_i32_1 = arith.constant 0 : i32
    return %c0_i32, %c0_i32_0 : i32, i32
  }
  func.func @transform_15(%arg0: i32) -> (i32, i32) {
    %c0_i32 = arith.constant 0 : i32
    %c0_i32_0 = arith.constant 0 : i32
    %c0_i32_1 = arith.constant 0 : i32
    return %c0_i32, %c0_i32_0 : i32, i32
  }
  func.func @transform_16(%arg0: i32) -> (i32, i32) {
    %c0_i32 = arith.constant 0 : i32
    %c0_i32_0 = arith.constant 0 : i32
    %c0_i32_1 = arith.constant 0 : i32
    return %c0_i32, %c0_i32_0 : i32, i32
  }
  func.func @transform_17(%arg0: i32) -> (i32, i32) {
    %c0_i32 = arith.constant 0 : i32
    %c0_i32_0 = arith.constant 0 : i32
    %c0_i32_1 = arith.constant 0 : i32
    return %c0_i32, %c0_i32_0 : i32, i32
  }
  func.func @transform_18(%arg0: i32) -> (i32, i32) {
    %c0_i32 = arith.constant 0 : i32
    %c0_i32_0 = arith.constant 0 : i32
    %c0_i32_1 = arith.constant 0 : i32
    return %c0_i32, %c0_i32_0 : i32, i32
  }
  func.func @transform_19(%arg0: i32) -> (i32, i32) {
    %c0_i32 = arith.constant 0 : i32
    %c0_i32_0 = arith.constant 0 : i32
    %c0_i32_1 = arith.constant 0 : i32
    return %c0_i32, %c0_i32_0 : i32, i32
  }
  func.func @transform_20(%arg0: i32) -> (i32, i32) {
    %c0_i32 = arith.constant 0 : i32
    %c0_i32_0 = arith.constant 0 : i32
    %c0_i32_1 = arith.constant 0 : i32
    return %c0_i32, %c0_i32_0 : i32, i32
  }
  func.func @transform_21(%arg0: i32) -> (i32, i32) {
    %c0_i32 = arith.constant 0 : i32
    %c0_i32_0 = arith.constant 0 : i32
    %c0_i32_1 = arith.constant 0 : i32
    return %c0_i32, %c0_i32_0 : i32, i32
  }
  func.func @transform_22(%arg0: i32) -> (i32, i32) {
    %c0_i32 = arith.constant 0 : i32
    %c0_i32_0 = arith.constant 0 : i32
    %c0_i32_1 = arith.constant 0 : i32
    return %c0_i32, %c0_i32_0 : i32, i32
  }
  func.func @transform_23(%arg0: i32) -> (i32, i32) {
    %c0_i32 = arith.constant 0 : i32
    %c0_i32_0 = arith.constant 0 : i32
    %c0_i32_1 = arith.constant 0 : i32
    return %c0_i32, %c0_i32_0 : i32, i32
  }
  func.func @transform_24(%arg0: i32) -> (i32, i32) {
    %c0_i32 = arith.constant 0 : i32
    %c0_i32_0 = arith.constant 0 : i32
    %c0_i32_1 = arith.constant 0 : i32
    return %c0_i32, %c0_i32_0 : i32, i32
  }
  func.func @transform_25(%arg0: i32) -> (i32, i32) {
    %c0_i32 = arith.constant 0 : i32
    %c0_i32_0 = arith.constant 0 : i32
    %c0_i32_1 = arith.constant 0 : i32
    return %c0_i32, %c0_i32_0 : i32, i32
  }
  func.func @transform_26(%arg0: i32) -> (i32, i32) {
    %c0_i32 = arith.constant 0 : i32
    %c0_i32_0 = arith.constant 0 : i32
    %c0_i32_1 = arith.constant 0 : i32
    return %c0_i32, %c0_i32_0 : i32, i32
  }
  func.func @transform_27(%arg0: i32) -> (i32, i32) {
    %c0_i32 = arith.constant 0 : i32
    %c0_i32_0 = arith.constant 0 : i32
    %c0_i32_1 = arith.constant 0 : i32
    return %c0_i32, %c0_i32_0 : i32, i32
  }
  func.func @transform_28(%arg0: i32) -> (i32, i32) {
    %c0_i32 = arith.constant 0 : i32
    %c0_i32_0 = arith.constant 0 : i32
    %c0_i32_1 = arith.constant 0 : i32
    return %c0_i32, %c0_i32_0 : i32, i32
  }
  func.func @transform_29(%arg0: i32) -> (i32, i32) {
    %c0_i32 = arith.constant 0 : i32
    %c0_i32_0 = arith.constant 0 : i32
    %c0_i32_1 = arith.constant 0 : i32
    return %c0_i32, %c0_i32_0 : i32, i32
  }
  func.func @transform_30(%arg0: i32) -> (i32, i32) {
    %c0_i32 = arith.constant 0 : i32
    %c0_i32_0 = arith.constant 0 : i32
    %c0_i32_1 = arith.constant 0 : i32
    return %c0_i32, %c0_i32_0 : i32, i32
  }
  func.func @transform_31(%arg0: i32) -> (i32, i32) {
    %c0_i32 = arith.constant 0 : i32
    %c0_i32_0 = arith.constant 0 : i32
    %c0_i32_1 = arith.constant 0 : i32
    return %c0_i32, %c0_i32_0 : i32, i32
  }
  func.func @transform_32(%arg0: i32) -> (i32, i32) {
    %c0_i32 = arith.constant 0 : i32
    %c0_i32_0 = arith.constant 0 : i32
    %c0_i32_1 = arith.constant 0 : i32
    return %c0_i32, %c0_i32_0 : i32, i32
  }
  func.func @transform_33(%arg0: i32) -> (i32, i32) {
    %c0_i32 = arith.constant 0 : i32
    %c0_i32_0 = arith.constant 0 : i32
    %c0_i32_1 = arith.constant 0 : i32
    return %c0_i32, %c0_i32_0 : i32, i32
  }
  func.func @transform_34(%arg0: i32) -> (i32, i32) {
    %c0_i32 = arith.constant 0 : i32
    %c0_i32_0 = arith.constant 0 : i32
    %c0_i32_1 = arith.constant 0 : i32
    return %c0_i32, %c0_i32_0 : i32, i32
  }
  func.func @transform_35(%arg0: i32) -> (i32, i32) {
    %c0_i32 = arith.constant 0 : i32
    %c0_i32_0 = arith.constant 0 : i32
    %c0_i32_1 = arith.constant 0 : i32
    return %c0_i32, %c0_i32_0 : i32, i32
  }
  func.func @transform_36(%arg0: i32) -> (i32, i32) {
    %c0_i32 = arith.constant 0 : i32
    %c0_i32_0 = arith.constant 0 : i32
    %c0_i32_1 = arith.constant 0 : i32
    return %c0_i32, %c0_i32_0 : i32, i32
  }
  func.func @transform_37(%arg0: i32) -> (i32, i32) {
    %c0_i32 = arith.constant 0 : i32
    %c0_i32_0 = arith.constant 0 : i32
    %c0_i32_1 = arith.constant 0 : i32
    return %c0_i32, %c0_i32_0 : i32, i32
  }
  func.func @transform_38(%arg0: i32) -> (i32, i32, i32) {
    %c0_i32 = arith.constant 0 : i32
    %c0_i32_0 = arith.constant 0 : i32
    %c0_i32_1 = arith.constant 0 : i32
    return %arg0, %c0_i32, %c0_i32_0 : i32, i32, i32
  }
}

</mosaic_0001>

<llo_original>
// kernel: tpu_custom_call.1
$region0: #{tpu_custom_call.1}
  #allocation0 [shape = 'u32[]', space=smem, size = 0x4, offset = 0x4, fixed_abs, tag = 'smem constant byte address 0x4 - core index']
  #allocation1 [shape = 'u32[144,128]{1,0:T(1,128)}', space=vmem, size = 0x12000, scoped, tag = 'internal scratch']
  %s0 = inlined_call_operand.smem [shape: u32[39], index: -1, kind: input, shape index: {}]
  %s1 = sld [smem:[%s0]]
  %s2 = scalar_lea.smem %s0, 1
  %s3 = sld [smem:[%s2]]
  %s4 = scalar_lea.smem %s0, 2
  %s5 = sld [smem:[%s4]]
  %s6 = scalar_lea.smem %s0, 3
  %s7 = sld [smem:[%s6]]
  %s8 = scalar_lea.smem %s0, 4
  %s9 = sld [smem:[%s8]]
  %s10 = scalar_lea.smem %s0, 5
  %s11 = sld [smem:[%s10]]
  %s12 = scalar_lea.smem %s0, 6
  %s13 = sld [smem:[%s12]]
  %s14 = scalar_lea.smem %s0, 7
  %s15 = sld [smem:[%s14]]
  %s16 = scalar_lea.smem %s0, 8
  %s17 = sld [smem:[%s16]]
  %s18 = scalar_lea.smem %s0, 9
  %s19 = sld [smem:[%s18]]
  %s20 = scalar_lea.smem %s0, 10
  %s21 = sld [smem:[%s20]]
  %s22 = scalar_lea.smem %s0, 11
  %s23 = sld [smem:[%s22]]
  %s24 = scalar_lea.smem %s0, 12
  %s25 = sld [smem:[%s24]]
  %s26 = scalar_lea.smem %s0, 13
  %s27 = sld [smem:[%s26]]
  %s28 = scalar_lea.smem %s0, 14
  %s29 = sld [smem:[%s28]]
  %s30 = scalar_lea.smem %s0, 15
  %s31 = sld [smem:[%s30]]
  %s32 = scalar_lea.smem %s0, 16
  %s33 = sld [smem:[%s32]]
  %s34 = scalar_lea.smem %s0, 17
  %s35 = sld [smem:[%s34]]
  %s36 = scalar_lea.smem %s0, 18
  %s37 = sld [smem:[%s36]]
  %s38 = scalar_lea.smem %s0, 19
  %s39 = sld [smem:[%s38]]
  %s40 = scalar_lea.smem %s0, 20
  %s41 = sld [smem:[%s40]]
  %s42 = scalar_lea.smem %s0, 21
  %s43 = sld [smem:[%s42]]
  %s44 = scalar_lea.smem %s0, 22
  %s45 = sld [smem:[%s44]]
  %s46 = scalar_lea.smem %s0, 23
  %s47 = sld [smem:[%s46]]
  %s48 = scalar_lea.smem %s0, 24
  %s49 = sld [smem:[%s48]]
  %s50 = scalar_lea.smem %s0, 25
  %s51 = sld [smem:[%s50]]
  %s52 = scalar_lea.smem %s0, 26
  %s53 = sld [smem:[%s52]]
  %s54 = scalar_lea.smem %s0, 27
  %s55 = sld [smem:[%s54]]
  %s56 = scalar_lea.smem %s0, 28
  %s57 = sld [smem:[%s56]]
  %s58 = scalar_lea.smem %s0, 29
  %s59 = sld [smem:[%s58]]
  %s60 = scalar_lea.smem %s0, 30
  %s61 = sld [smem:[%s60]]
  %s62 = scalar_lea.smem %s0, 31
  %s63 = sld [smem:[%s62]]
  %s64 = scalar_lea.smem %s0, 32
  %s65 = sld [smem:[%s64]]
  %s66 = scalar_lea.smem %s0, 33
  %s67 = sld [smem:[%s66]]
  %s68 = scalar_lea.smem %s0, 34
  %s69 = sld [smem:[%s68]]
  %s70 = scalar_lea.smem %s0, 35
  %s71 = sld [smem:[%s70]]
  %s72 = scalar_lea.smem %s0, 36
  %s73 = sld [smem:[%s72]]
  %s74 = scalar_lea.smem %s0, 37
  %s75 = sld [smem:[%s74]]
  %s76 = scalar_lea.smem %s0, 38
  %s77 = sld [smem:[%s76]]
  %s78 = sld [smem:[#allocation0]]
  $region313: #{tpu_custom_call.1} parent=0
    _
  %s80 = ssub.s32 1, %s78
  %s81 = scalar_select 0, %s80, %s78
  $region1: #{tpu_custom_call.1} parent=0
    #allocation2 [shape = 'u8[8192]{0}', space=vmem, size = 0x2000, scoped, tag = 'input window, operand 1, single buffered']
    #allocation3 [shape = 's32[2]{0}', space=sflag, size = 0x8, scoped, tag = 'scoped memory for tpu_custom_call.1']
    #allocation4 [shape = 's32[2]{0}', space=sflag, size = 0x8, scoped, tag = 'scoped memory for tpu_custom_call.1']
    #allocation5 [shape = 'u8[1024]{0}', space=vmem, size = 0x400, scoped, tag = 'input window, operand 2, single buffered']
    #allocation6 [shape = 's32[1]{0}', space=sflag, size = 0x4, scoped, tag = 'scoped memory for tpu_custom_call.1']
    #allocation7 [shape = 'u8[131072]{0}', space=vmem, size = 0x20000, scoped, tag = 'input window, operand 3, single buffered']
    #allocation8 [shape = 'u8[512]{0}', space=vmem, size = 0x400, scoped, tag = 'input window, operand 6, single buffered']
    #allocation9 [shape = 's32[1]{0}', space=sflag, size = 0x4, scoped, tag = 'scoped memory for tpu_custom_call.1']
    #allocation10 [shape = 'u8[131072]{0}', space=vmem, size = 0x20000, scoped, tag = 'input window, operand 7, single buffered']
    #allocation11 [shape = 'u8[65536]{0}', space=vmem, size = 0x10000, scoped, tag = 'input window, operand 8, single buffered']
    #allocation12 [shape = 's32[1]{0}', space=sflag, size = 0x4, scoped, tag = 'scoped memory for tpu_custom_call.1']
    #allocation13 [shape = 'u8[65536]{0}', space=vmem, size = 0x10000, scoped, tag = 'input window, operand 9, single buffered']
    #allocation14 [shape = 'u8[512]{0}', space=vmem, size = 0x400, scoped, tag = 'input window, operand 10, single buffered']
    #allocation15 [shape = 's32[1]{0}', space=sflag, size = 0x4, scoped, tag = 'scoped memory for tpu_custom_call.1']
    #allocation16 [shape = 'u8[65536]{0}', space=vmem, size = 0x10000, scoped, tag = 'input window, operand 11, single buffered']
    #allocation17 [shape = 'u8[512]{0}', space=vmem, size = 0x400, scoped, tag = 'input window, operand 12, single buffered']
    #allocation18 [shape = 's32[1]{0}', space=sflag, size = 0x4, scoped, tag = 'scoped memory for tpu_custom_call.1']
    #allocation19 [shape = 'u8[65536]{0}', space=vmem, size = 0x10000, scoped, tag = 'input window, operand 13, single buffered']
    #allocation20 [shape = 'u8[65536]{0}', space=vmem, size = 0x10000, scoped, tag = 'input window, operand 14, single buffered']
    #allocation21 [shape = 's32[1]{0}', space=sflag, size = 0x4, scoped, tag = 'scoped memory for tpu_custom_call.1']
    #allocation22 [shape = 'u8[65536]{0}', space=vmem, size = 0x10000, scoped, tag = 'input window, operand 15, single buffered']
    #allocation23 [shape = 'u8[65536]{0}', space=vmem, size = 0x10000, scoped, tag = 'input window, operand 16, single buffered']
    #allocation24 [shape = 's32[1]{0}', space=sflag, size = 0x4, scoped, tag = 'scoped memory for tpu_custom_call.1']
    #allocation25 [shape = 'u8[512]{0}', space=vmem, size = 0x400, scoped, tag = 'input window, operand 17, single buffered']
    #allocation26 [shape = 'u8[65536]{0}', space=vmem, size = 0x10000, scoped, tag = 'input window, operand 18, single buffered']
    #allocation27 [shape = 's32[1]{0}', space=sflag, size = 0x4, scoped, tag = 'scoped memory for tpu_custom_call.1']
    #allocation28 [shape = 'u8[512]{0}', space=vmem, size = 0x400, scoped, tag = 'input window, operand 19, single buffered']
    #allocation29 [shape = 'u8[65536]{0}', space=vmem, size = 0x10000, scoped, tag = 'input window, operand 20, single buffered']
    #allocation30 [shape = 's32[1]{0}', space=sflag, size = 0x4, scoped, tag = 'scoped memory for tpu_custom_call.1']
    #allocation31 [shape = 'u8[65536]{0}', space=vmem, size = 0x10000, scoped, tag = 'input window, operand 21, single buffered']
    #allocation32 [shape = 'u8[65536]{0}', space=vmem, size = 0x10000, scoped, tag = 'input window, operand 22, single buffered']
    #allocation33 [shape = 's32[1]{0}', space=sflag, size = 0x4, scoped, tag = 'scoped memory for tpu_custom_call.1']
    #allocation34 [shape = 'u8[65536]{0}', space=vmem, size = 0x10000, scoped, tag = 'input window, operand 23, single buffered']
    #allocation35 [shape = 'u8[512]{0}', space=vmem, size = 0x400, scoped, tag = 'input window, operand 24, single buffered']
    #allocation36 [shape = 's32[1]{0}', space=sflag, size = 0x4, scoped, tag = 'scoped memory for tpu_custom_call.1']
    #allocation37 [shape = 'u8[65536]{0}', space=vmem, size = 0x10000, scoped, tag = 'input window, operand 25, single buffered']
    #allocation38 [shape = 'u8[512]{0}', space=vmem, size = 0x400, scoped, tag = 'input window, operand 26, single buffered']
    #allocation39 [shape = 's32[1]{0}', space=sflag, size = 0x4, scoped, tag = 'scoped memory for tpu_custom_call.1']
    #allocation40 [shape = 'u8[65536]{0}', space=vmem, size = 0x10000, scoped, tag = 'input window, operand 27, single buffered']
    #allocation41 [shape = 'u8[65536]{0}', space=vmem, size = 0x10000, scoped, tag = 'input window, operand 28, single buffered']
    #allocation42 [shape = 's32[1]{0}', space=sflag, size = 0x4, scoped, tag = 'scoped memory for tpu_custom_call.1']
    #allocation43 [shape = 'u8[65536]{0}', space=vmem, size = 0x10000, scoped, tag = 'input window, operand 29, single buffered']
    #allocation44 [shape = 'u8[65536]{0}', space=vmem, size = 0x10000, scoped, tag = 'input window, operand 30, single buffered']
    #allocation45 [shape = 's32[1]{0}', space=sflag, size = 0x4, scoped, tag = 'scoped memory for tpu_custom_call.1']
    #allocation46 [shape = 'u8[512]{0}', space=vmem, size = 0x400, scoped, tag = 'input window, operand 31, single buffered']
    #allocation47 [shape = 'u8[65536]{0}', space=vmem, size = 0x10000, scoped, tag = 'input window, operand 34, single buffered']
    #allocation48 [shape = 's32[1]{0}', space=sflag, size = 0x4, scoped, tag = 'scoped memory for tpu_custom_call.1']
    #allocation49 [shape = 'u8[65536]{0}', space=vmem, size = 0x10000, scoped, tag = 'input window, operand 35, single buffered']
    #allocation50 [shape = 'u8[65536]{0}', space=vmem, size = 0x10000, scoped, tag = 'input window, operand 36, single buffered']
    #allocation51 [shape = 's32[1]{0}', space=sflag, size = 0x4, scoped, tag = 'scoped memory for tpu_custom_call.1']
    #allocation52 [shape = 'u8[2048]{0}', space=vmem, size = 0x800, scoped, tag = 'output window, operand 0']
    %82 = vsyncpa [#allocation3], 0
    %83 = vsyncpa [#allocation6], 0
    %84 = vsyncpa [#allocation9], 0
    %85 = vsyncpa [#allocation12], 0
    %86 = vsyncpa [#allocation15], 0
    %87 = vsyncpa [#allocation18], 0
    %88 = vsyncpa [#allocation21], 0
    %89 = vsyncpa [#allocation24], 0
    %90 = vsyncpa [#allocation27], 0
    %91 = vsyncpa [#allocation30], 0
    %92 = vsyncpa [#allocation33], 0
    %93 = vsyncpa [#allocation36], 0
    %94 = vsyncpa [#allocation39], 0
    %95 = vsyncpa [#allocation42], 0
    %96 = vsyncpa [#allocation45], 0
    %97 = vsyncpa [#allocation48], 0
    %98 = vsyncpa [#allocation51], 0
    %99 = vsyncpa [#allocation4], 0
    %s100 = scalar_lea.sflag [#allocation4], 1
    %101 = vsyncpa %s100, 0
    loop: start=0, step=1, limit=4
    $region2: #{tpu_custom_call.1} parent=1 // loop_pre_header
      _
    $region3: #{tpu_custom_call.1} parent=1 // loop_header
      %s103 = sphi 0, %s107
      %p104 = scmp.ge.s32.totalorder %s103, 4
      %s113 = sphi 0, %s115
      %s116 = sphi 0, %s113
      %s117 = sphi 0, %s116
      %s133 = sphi 0, %s117
      %s137 = sphi 0, %s137
      %s139 = sphi 0, %s137
      %s140 = sphi 0, %s139
      %s154 = sphi 0, %s140
      %s158 = sphi 0, %s158
      %s160 = sphi 0, %s158
      %s161 = sphi 0, %s160
      %s175 = sphi 0, %s161
      %s179 = sphi 0, %s179
      %s181 = sphi 0, %s179
      %s182 = sphi 0, %s181
      %s196 = sphi 0, %s182
      %s200 = sphi 0, %s200
      %s202 = sphi 0, %s200
      %s203 = sphi 0, %s202
      %s217 = sphi 0, %s203
      %s221 = sphi 0, %s221
      %s223 = sphi 0, %s221
      %s224 = sphi 0, %s223
      %s238 = sphi 0, %s224
      %s242 = sphi 0, %s242
      %s244 = sphi 0, %s242
      %s245 = sphi 0, %s244
      %s259 = sphi 0, %s245
      %s263 = sphi 0, %s263
      %s265 = sphi 0, %s263
      %s266 = sphi 0, %s265
      %s280 = sphi 0, %s266
      %s284 = sphi 0, %s284
      %s286 = sphi 0, %s284
      %s287 = sphi 0, %s286
      %s301 = sphi 0, %s287
      %s305 = sphi 0, %s305
      %s307 = sphi 0, %s305
      %s308 = sphi 0, %s307
      %s322 = sphi 0, %s308
      %s326 = sphi 0, %s326
      %s328 = sphi 0, %s326
      %s329 = sphi 0, %s328
      %s343 = sphi 0, %s329
      %s347 = sphi 0, %s347
      %s349 = sphi 0, %s347
      %s350 = sphi 0, %s349
      %s364 = sphi 0, %s350
      %s368 = sphi 0, %s368
      %s370 = sphi 0, %s368
      %s371 = sphi 0, %s370
      %s385 = sphi 0, %s371
      %s389 = sphi 0, %s389
      %s391 = sphi 0, %s389
      %s392 = sphi 0, %s391
      %s406 = sphi 0, %s392
      %s410 = sphi 0, %s410
      %s412 = sphi 0, %s410
      %s413 = sphi 0, %s412
      %s427 = sphi 0, %s413
      %s431 = sphi 0, %s431
      %s433 = sphi 0, %s431
      %s434 = sphi 0, %s433
      %s448 = sphi 0, %s434
      %s452 = sphi 0, %s452
      %s454 = sphi 0, %s452
      %s455 = sphi 0, %s454
      %s469 = sphi 0, %s455
      %s473 = sphi 0, %s473
      %s475 = sphi 0, %s473
      %s476 = sphi 0, %s475
      %s490 = sphi 0, %s476
      %s494 = sphi 0, %s494
      %s496 = sphi 0, %s494
      %s497 = sphi 0, %s496
      %s511 = sphi 0, %s497
      %s515 = sphi 0, %s515
      %s517 = sphi 0, %s515
      %s518 = sphi 0, %s517
      %s532 = sphi 0, %s518
      %s536 = sphi 0, %s536
      %s538 = sphi 0, %s536
      %s539 = sphi 0, %s538
      %s553 = sphi 0, %s539
      %s557 = sphi 0, %s557
      %s559 = sphi 0, %s557
      %s560 = sphi 0, %s559
      %s574 = sphi 0, %s560
      %s578 = sphi 0, %s578
      %s580 = sphi 0, %s578
      %s581 = sphi 0, %s580
      %s595 = sphi 0, %s581
      %s599 = sphi 0, %s599
      %s601 = sphi 0, %s599
      %s602 = sphi 0, %s601
      %s616 = sphi 0, %s602
      %s620 = sphi 0, %s620
      %s622 = sphi 0, %s620
      %s623 = sphi 0, %s622
      %s637 = sphi 0, %s623
      %s641 = sphi 0, %s641
      %s643 = sphi 0, %s641
      %s644 = sphi 0, %s643
      %s658 = sphi 0, %s644
      %s662 = sphi 0, %s662
      %s664 = sphi 0, %s662
      %s665 = sphi 0, %s664
      %s679 = sphi 0, %s665
      %s683 = sphi 0, %s683
      %s685 = sphi 0, %s683
      %s686 = sphi 0, %s685
      %s700 = sphi 0, %s686
      %s704 = sphi 0, %s704
      %s706 = sphi 0, %s704
      %s707 = sphi 0, %s706
      %s721 = sphi 0, %s707
      %s725 = sphi 0, %s725
      %s727 = sphi 0, %s725
      %s728 = sphi 0, %s727
      %s742 = sphi 0, %s728
      %s746 = sphi 0, %s746
      %s748 = sphi 0, %s746
      %s749 = sphi 0, %s748
      %s763 = sphi 0, %s749
      %s767 = sphi 0, %s767
      %s769 = sphi 0, %s767
      %s770 = sphi 0, %s769
      %s784 = sphi 0, %s770
      %s788 = sphi 0, %s788
      %s790 = sphi 0, %s788
      %s791 = sphi 0, %s790
      %s805 = sphi 0, %s791
      %s809 = sphi 0, %s809
      %s811 = sphi 0, %s809
      %s812 = sphi 0, %s811
      %s826 = sphi 0, %s812
      %s830 = sphi 0, %s830
      %s832 = sphi 0, %s830
      %s833 = sphi 0, %s832
      %s847 = sphi 0, %s833
      %s851 = sphi 0, %s851
      %s853 = sphi 0, %s851
      %s854 = sphi 0, %s853
      %s868 = sphi 0, %s854
      %s872 = sphi 0, %s872
      %s874 = sphi 0, %s872
      %s875 = sphi 0, %s874
      %s889 = sphi 0, %s875
      %s893 = sphi 0, %s893
      %s895 = sphi 0, %s893
      %s896 = sphi 0, %s895
      %s910 = sphi 0, %s896
      %s916 = sphi 0, %s918
      %s919 = sphi 0, %s916
      %s920 = sphi 0, %s919
      %s936 = sphi 0, %s920
    $region4: #{tpu_custom_call.1} parent=1 // loop_header_branch
      %106 = sbr.rel (%p104) target = $region8
    $region5: #{tpu_custom_call.1} parent=1 // loop_body
      %s108 = ssub.s32 %s103, 1
      %s109 = ssub.s32 %s103, 2
      %s110 = sadd.s32 %s103, 1
      %s111 = ssub.s32 %s103, %s110
      %p112 = scmp.eq.s32.totalorder %s111, 0
      %s114 = sadd.s32 %s113, 1
      %s115 = scalar_select %p112, %s113, %s114
      %p118 = pneg %p112
      %p119 = scmp.eq.s32.totalorder %s103, 1
      %p120 = por %p118, %p119
      %p121 = scmp.ne.s32.totalorder %s113, %s116
      %p122 = scmp.eq.s32.totalorder %s103, 0
      %p123 = por %p121, %p122
      %p124 = scmp.ne.s32.totalorder %s113, %s116
      %p125 = scmp.eq.s32.totalorder %s108, 1
      %p126 = por %p124, %p125
      %p127 = scmp.ne.s32.totalorder %s116, %s117
      %p128 = scmp.eq.s32.totalorder %s108, 0
      %p129 = por %p127, %p128
      %p130 = scmp.ne.s32.totalorder %s116, %s117
      %p131 = scmp.eq.s32.totalorder %s109, 1
      %p132 = por %p130, %p131
      %p134 = scmp.ne.s32.totalorder %s117, %s133
      %p135 = scmp.eq.s32.totalorder %s109, 0
      %p136 = por %p134, %p135
      %s138 = sadd.s32 %s137, 1
      %p141 = scmp.eq.s32.totalorder %s103, 1
      %p142 = scmp.ne.s32.totalorder %s137, %s139
      %p143 = scmp.eq.s32.totalorder %s103, 0
      %p144 = por %p142, %p143
      %p145 = scmp.ne.s32.totalorder %s137, %s139
      %p146 = scmp.eq.s32.totalorder %s108, 1
      %p147 = por %p145, %p146
      %p148 = scmp.ne.s32.totalorder %s139, %s140
      %p149 = scmp.eq.s32.totalorder %s108, 0
      %p150 = por %p148, %p149
      %p151 = scmp.ne.s32.totalorder %s139, %s140
      %p152 = scmp.eq.s32.totalorder %s109, 1
      %p153 = por %p151, %p152
      %p155 = scmp.ne.s32.totalorder %s140, %s154
      %p156 = scmp.eq.s32.totalorder %s109, 0
      %p157 = por %p155, %p156
      %s159 = sadd.s32 %s158, 1
      %p162 = scmp.eq.s32.totalorder %s103, 1
      %p163 = scmp.ne.s32.totalorder %s158, %s160
      %p164 = scmp.eq.s32.totalorder %s103, 0
      %p165 = por %p163, %p164
      %p166 = scmp.ne.s32.totalorder %s158, %s160
      %p167 = scmp.eq.s32.totalorder %s108, 1
      %p168 = por %p166, %p167
      %p169 = scmp.ne.s32.totalorder %s160, %s161
      %p170 = scmp.eq.s32.totalorder %s108, 0
      %p171 = por %p169, %p170
      %p172 = scmp.ne.s32.totalorder %s160, %s161
      %p173 = scmp.eq.s32.totalorder %s109, 1
      %p174 = por %p172, %p173
      %p176 = scmp.ne.s32.totalorder %s161, %s175
      %p177 = scmp.eq.s32.totalorder %s109, 0
      %p178 = por %p176, %p177
      %s180 = sadd.s32 %s179, 1
      %p183 = scmp.eq.s32.totalorder %s103, 1
      %p184 = scmp.ne.s32.totalorder %s179, %s181
      %p185 = scmp.eq.s32.totalorder %s103, 0
      %p186 = por %p184, %p185
      %p187 = scmp.ne.s32.totalorder %s179, %s181
      %p188 = scmp.eq.s32.totalorder %s108, 1
      %p189 = por %p187, %p188
      %p190 = scmp.ne.s32.totalorder %s181, %s182
      %p191 = scmp.eq.s32.totalorder %s108, 0
      %p192 = por %p190, %p191
      %p193 = scmp.ne.s32.totalorder %s181, %s182
      %p194 = scmp.eq.s32.totalorder %s109, 1
      %p195 = por %p193, %p194
      %p197 = scmp.ne.s32.totalorder %s182, %s196
      %p198 = scmp.eq.s32.totalorder %s109, 0
      %p199 = por %p197, %p198
      %s201 = sadd.s32 %s200, 1
      %p204 = scmp.eq.s32.totalorder %s103, 1
      %p205 = scmp.ne.s32.totalorder %s200, %s202
      %p206 = scmp.eq.s32.totalorder %s103, 0
      %p207 = por %p205, %p206
      %p208 = scmp.ne.s32.totalorder %s200, %s202
      %p209 = scmp.eq.s32.totalorder %s108, 1
      %p210 = por %p208, %p209
      %p211 = scmp.ne.s32.totalorder %s202, %s203
      %p212 = scmp.eq.s32.totalorder %s108, 0
      %p213 = por %p211, %p212
      %p214 = scmp.ne.s32.totalorder %s202, %s203
      %p215 = scmp.eq.s32.totalorder %s109, 1
      %p216 = por %p214, %p215
      %p218 = scmp.ne.s32.totalorder %s203, %s217
      %p219 = scmp.eq.s32.totalorder %s109, 0
      %p220 = por %p218, %p219
      %s222 = sadd.s32 %s221, 1
      %p225 = scmp.eq.s32.totalorder %s103, 1
      %p226 = scmp.ne.s32.totalorder %s221, %s223
      %p227 = scmp.eq.s32.totalorder %s103, 0
      %p228 = por %p226, %p227
      %p229 = scmp.ne.s32.totalorder %s221, %s223
      %p230 = scmp.eq.s32.totalorder %s108, 1
      %p231 = por %p229, %p230
      %p232 = scmp.ne.s32.totalorder %s223, %s224
      %p233 = scmp.eq.s32.totalorder %s108, 0
      %p234 = por %p232, %p233
      %p235 = scmp.ne.s32.totalorder %s223, %s224
      %p236 = scmp.eq.s32.totalorder %s109, 1
      %p237 = por %p235, %p236
      %p239 = scmp.ne.s32.totalorder %s224, %s238
      %p240 = scmp.eq.s32.totalorder %s109, 0
      %p241 = por %p239, %p240
      %s243 = sadd.s32 %s242, 1
      %p246 = scmp.eq.s32.totalorder %s103, 1
      %p247 = scmp.ne.s32.totalorder %s242, %s244
      %p248 = scmp.eq.s32.totalorder %s103, 0
      %p249 = por %p247, %p248
      %p250 = scmp.ne.s32.totalorder %s242, %s244
      %p251 = scmp.eq.s32.totalorder %s108, 1
      %p252 = por %p250, %p251
      %p253 = scmp.ne.s32.totalorder %s244, %s245
      %p254 = scmp.eq.s32.totalorder %s108, 0
      %p255 = por %p253, %p254
      %p256 = scmp.ne.s32.totalorder %s244, %s245
      %p257 = scmp.eq.s32.totalorder %s109, 1
      %p258 = por %p256, %p257
      %p260 = scmp.ne.s32.totalorder %s245, %s259
      %p261 = scmp.eq.s32.totalorder %s109, 0
      %p262 = por %p260, %p261
      %s264 = sadd.s32 %s263, 1
      %p267 = scmp.eq.s32.totalorder %s103, 1
      %p268 = scmp.ne.s32.totalorder %s263, %s265
      %p269 = scmp.eq.s32.totalorder %s103, 0
      %p270 = por %p268, %p269
      %p271 = scmp.ne.s32.totalorder %s263, %s265
      %p272 = scmp.eq.s32.totalorder %s108, 1
      %p273 = por %p271, %p272
      %p274 = scmp.ne.s32.totalorder %s265, %s266
      %p275 = scmp.eq.s32.totalorder %s108, 0
      %p276 = por %p274, %p275
      %p277 = scmp.ne.s32.totalorder %s265, %s266
      %p278 = scmp.eq.s32.totalorder %s109, 1
      %p279 = por %p277, %p278
      %p281 = scmp.ne.s32.totalorder %s266, %s280
      %p282 = scmp.eq.s32.totalorder %s109, 0
      %p283 = por %p281, %p282
      %s285 = sadd.s32 %s284, 1
      %p288 = scmp.eq.s32.totalorder %s103, 1
      %p289 = scmp.ne.s32.totalorder %s284, %s286
      %p290 = scmp.eq.s32.totalorder %s103, 0
      %p291 = por %p289, %p290
      %p292 = scmp.ne.s32.totalorder %s284, %s286
      %p293 = scmp.eq.s32.totalorder %s108, 1
      %p294 = por %p292, %p293
      %p295 = scmp.ne.s32.totalorder %s286, %s287
      %p296 = scmp.eq.s32.totalorder %s108, 0
      %p297 = por %p295, %p296
      %p298 = scmp.ne.s32.totalorder %s286, %s287
      %p299 = scmp.eq.s32.totalorder %s109, 1
      %p300 = por %p298, %p299
      %p302 = scmp.ne.s32.totalorder %s287, %s301
      %p303 = scmp.eq.s32.totalorder %s109, 0
      %p304 = por %p302, %p303
      %s306 = sadd.s32 %s305, 1
      %p309 = scmp.eq.s32.totalorder %s103, 1
      %p310 = scmp.ne.s32.totalorder %s305, %s307
      %p311 = scmp.eq.s32.totalorder %s103, 0
      %p312 = por %p310, %p311
      %p313 = scmp.ne.s32.totalorder %s305, %s307
      %p314 = scmp.eq.s32.totalorder %s108, 1
      %p315 = por %p313, %p314
      %p316 = scmp.ne.s32.totalorder %s307, %s308
      %p317 = scmp.eq.s32.totalorder %s108, 0
      %p318 = por %p316, %p317
      %p319 = scmp.ne.s32.totalorder %s307, %s308
      %p320 = scmp.eq.s32.totalorder %s109, 1
      %p321 = por %p319, %p320
      %p323 = scmp.ne.s32.totalorder %s308, %s322
      %p324 = scmp.eq.s32.totalorder %s109, 0
      %p325 = por %p323, %p324
      %s327 = sadd.s32 %s326, 1
      %p330 = scmp.eq.s32.totalorder %s103, 1
      %p331 = scmp.ne.s32.totalorder %s326, %s328
      %p332 = scmp.eq.s32.totalorder %s103, 0
      %p333 = por %p331, %p332
      %p334 = scmp.ne.s32.totalorder %s326, %s328
      %p335 = scmp.eq.s32.totalorder %s108, 1
      %p336 = por %p334, %p335
      %p337 = scmp.ne.s32.totalorder %s328, %s329
      %p338 = scmp.eq.s32.totalorder %s108, 0
      %p339 = por %p337, %p338
      %p340 = scmp.ne.s32.totalorder %s328, %s329
      %p341 = scmp.eq.s32.totalorder %s109, 1
      %p342 = por %p340, %p341
      %p344 = scmp.ne.s32.totalorder %s329, %s343
      %p345 = scmp.eq.s32.totalorder %s109, 0
      %p346 = por %p344, %p345
      %s348 = sadd.s32 %s347, 1
      %p351 = scmp.eq.s32.totalorder %s103, 1
      %p352 = scmp.ne.s32.totalorder %s347, %s349
      %p353 = scmp.eq.s32.totalorder %s103, 0
      %p354 = por %p352, %p353
      %p355 = scmp.ne.s32.totalorder %s347, %s349
      %p356 = scmp.eq.s32.totalorder %s108, 1
      %p357 = por %p355, %p356
      %p358 = scmp.ne.s32.totalorder %s349, %s350
      %p359 = scmp.eq.s32.totalorder %s108, 0
      %p360 = por %p358, %p359
      %p361 = scmp.ne.s32.totalorder %s349, %s350
      %p362 = scmp.eq.s32.totalorder %s109, 1
      %p363 = por %p361, %p362
      %p365 = scmp.ne.s32.totalorder %s350, %s364
      %p366 = scmp.eq.s32.totalorder %s109, 0
      %p367 = por %p365, %p366
      %s369 = sadd.s32 %s368, 1
      %p372 = scmp.eq.s32.totalorder %s103, 1
      %p373 = scmp.ne.s32.totalorder %s368, %s370
      %p374 = scmp.eq.s32.totalorder %s103, 0
      %p375 = por %p373, %p374
      %p376 = scmp.ne.s32.totalorder %s368, %s370
      %p377 = scmp.eq.s32.totalorder %s108, 1
      %p378 = por %p376, %p377
      %p379 = scmp.ne.s32.totalorder %s370, %s371
      %p380 = scmp.eq.s32.totalorder %s108, 0
      %p381 = por %p379, %p380
      %p382 = scmp.ne.s32.totalorder %s370, %s371
      %p383 = scmp.eq.s32.totalorder %s109, 1
      %p384 = por %p382, %p383
      %p386 = scmp.ne.s32.totalorder %s371, %s385
      %p387 = scmp.eq.s32.totalorder %s109, 0
      %p388 = por %p386, %p387
      %s390 = sadd.s32 %s389, 1
      %p393 = scmp.eq.s32.totalorder %s103, 1
      %p394 = scmp.ne.s32.totalorder %s389, %s391
      %p395 = scmp.eq.s32.totalorder %s103, 0
      %p396 = por %p394, %p395
      %p397 = scmp.ne.s32.totalorder %s389, %s391
      %p398 = scmp.eq.s32.totalorder %s108, 1
      %p399 = por %p397, %p398
      %p400 = scmp.ne.s32.totalorder %s391, %s392
      %p401 = scmp.eq.s32.totalorder %s108, 0
      %p402 = por %p400, %p401
      %p403 = scmp.ne.s32.totalorder %s391, %s392
      %p404 = scmp.eq.s32.totalorder %s109, 1
      %p405 = por %p403, %p404
      %p407 = scmp.ne.s32.totalorder %s392, %s406
      %p408 = scmp.eq.s32.totalorder %s109, 0
      %p409 = por %p407, %p408
      %s411 = sadd.s32 %s410, 1
      %p414 = scmp.eq.s32.totalorder %s103, 1
      %p415 = scmp.ne.s32.totalorder %s410, %s412
      %p416 = scmp.eq.s32.totalorder %s103, 0
      %p417 = por %p415, %p416
      %p418 = scmp.ne.s32.totalorder %s410, %s412
      %p419 = scmp.eq.s32.totalorder %s108, 1
      %p420 = por %p418, %p419
      %p421 = scmp.ne.s32.totalorder %s412, %s413
      %p422 = scmp.eq.s32.totalorder %s108, 0
      %p423 = por %p421, %p422
      %p424 = scmp.ne.s32.totalorder %s412, %s413
      %p425 = scmp.eq.s32.totalorder %s109, 1
      %p426 = por %p424, %p425
      %p428 = scmp.ne.s32.totalorder %s413, %s427
      %p429 = scmp.eq.s32.totalorder %s109, 0
      %p430 = por %p428, %p429
      %s432 = sadd.s32 %s431, 1
      %p435 = scmp.eq.s32.totalorder %s103, 1
      %p436 = scmp.ne.s32.totalorder %s431, %s433
      %p437 = scmp.eq.s32.totalorder %s103, 0
      %p438 = por %p436, %p437
      %p439 = scmp.ne.s32.totalorder %s431, %s433
      %p440 = scmp.eq.s32.totalorder %s108, 1
      %p441 = por %p439, %p440
      %p442 = scmp.ne.s32.totalorder %s433, %s434
      %p443 = scmp.eq.s32.totalorder %s108, 0
      %p444 = por %p442, %p443
      %p445 = scmp.ne.s32.totalorder %s433, %s434
      %p446 = scmp.eq.s32.totalorder %s109, 1
      %p447 = por %p445, %p446
      %p449 = scmp.ne.s32.totalorder %s434, %s448
      %p450 = scmp.eq.s32.totalorder %s109, 0
      %p451 = por %p449, %p450
      %s453 = sadd.s32 %s452, 1
      %p456 = scmp.eq.s32.totalorder %s103, 1
      %p457 = scmp.ne.s32.totalorder %s452, %s454
      %p458 = scmp.eq.s32.totalorder %s103, 0
      %p459 = por %p457, %p458
      %p460 = scmp.ne.s32.totalorder %s452, %s454
      %p461 = scmp.eq.s32.totalorder %s108, 1
      %p462 = por %p460, %p461
      %p463 = scmp.ne.s32.totalorder %s454, %s455
      %p464 = scmp.eq.s32.totalorder %s108, 0
      %p465 = por %p463, %p464
      %p466 = scmp.ne.s32.totalorder %s454, %s455
      %p467 = scmp.eq.s32.totalorder %s109, 1
      %p468 = por %p466, %p467
      %p470 = scmp.ne.s32.totalorder %s455, %s469
      %p471 = scmp.eq.s32.totalorder %s109, 0
      %p472 = por %p470, %p471
      %s474 = sadd.s32 %s473, 1
      %p477 = scmp.eq.s32.totalorder %s103, 1
      %p478 = scmp.ne.s32.totalorder %s473, %s475
      %p479 = scmp.eq.s32.totalorder %s103, 0
      %p480 = por %p478, %p479
      %p481 = scmp.ne.s32.totalorder %s473, %s475
      %p482 = scmp.eq.s32.totalorder %s108, 1
      %p483 = por %p481, %p482
      %p484 = scmp.ne.s32.totalorder %s475, %s476
      %p485 = scmp.eq.s32.totalorder %s108, 0
      %p486 = por %p484, %p485
      %p487 = scmp.ne.s32.totalorder %s475, %s476
      %p488 = scmp.eq.s32.totalorder %s109, 1
      %p489 = por %p487, %p488
      %p491 = scmp.ne.s32.totalorder %s476, %s490
      %p492 = scmp.eq.s32.totalorder %s109, 0
      %p493 = por %p491, %p492
      %s495 = sadd.s32 %s494, 1
      %p498 = scmp.eq.s32.totalorder %s103, 1
      %p499 = scmp.ne.s32.totalorder %s494, %s496
      %p500 = scmp.eq.s32.totalorder %s103, 0
      %p501 = por %p499, %p500
      %p502 = scmp.ne.s32.totalorder %s494, %s496
      %p503 = scmp.eq.s32.totalorder %s108, 1
      %p504 = por %p502, %p503
      %p505 = scmp.ne.s32.totalorder %s496, %s497
      %p506 = scmp.eq.s32.totalorder %s108, 0
      %p507 = por %p505, %p506
      %p508 = scmp.ne.s32.totalorder %s496, %s497
      %p509 = scmp.eq.s32.totalorder %s109, 1
      %p510 = por %p508, %p509
      %p512 = scmp.ne.s32.totalorder %s497, %s511
      %p513 = scmp.eq.s32.totalorder %s109, 0
      %p514 = por %p512, %p513
      %s516 = sadd.s32 %s515, 1
      %p519 = scmp.eq.s32.totalorder %s103, 1
      %p520 = scmp.ne.s32.totalorder %s515, %s517
      %p521 = scmp.eq.s32.totalorder %s103, 0
      %p522 = por %p520, %p521
      %p523 = scmp.ne.s32.totalorder %s515, %s517
      %p524 = scmp.eq.s32.totalorder %s108, 1
      %p525 = por %p523, %p524
      %p526 = scmp.ne.s32.totalorder %s517, %s518
      %p527 = scmp.eq.s32.totalorder %s108, 0
      %p528 = por %p526, %p527
      %p529 = scmp.ne.s32.totalorder %s517, %s518
      %p530 = scmp.eq.s32.totalorder %s109, 1
      %p531 = por %p529, %p530
      %p533 = scmp.ne.s32.totalorder %s518, %s532
      %p534 = scmp.eq.s32.totalorder %s109, 0
      %p535 = por %p533, %p534
      %s537 = sadd.s32 %s536, 1
      %p540 = scmp.eq.s32.totalorder %s103, 1
      %p541 = scmp.ne.s32.totalorder %s536, %s538
      %p542 = scmp.eq.s32.totalorder %s103, 0
      %p543 = por %p541, %p542
      %p544 = scmp.ne.s32.totalorder %s536, %s538
      %p545 = scmp.eq.s32.totalorder %s108, 1
      %p546 = por %p544, %p545
      %p547 = scmp.ne.s32.totalorder %s538, %s539
      %p548 = scmp.eq.s32.totalorder %s108, 0
      %p549 = por %p547, %p548
      %p550 = scmp.ne.s32.totalorder %s538, %s539
      %p551 = scmp.eq.s32.totalorder %s109, 1
      %p552 = por %p550, %p551
      %p554 = scmp.ne.s32.totalorder %s539, %s553
      %p555 = scmp.eq.s32.totalorder %s109, 0
      %p556 = por %p554, %p555
      %s558 = sadd.s32 %s557, 1
      %p561 = scmp.eq.s32.totalorder %s103, 1
      %p562 = scmp.ne.s32.totalorder %s557, %s559
      %p563 = scmp.eq.s32.totalorder %s103, 0
      %p564 = por %p562, %p563
      %p565 = scmp.ne.s32.totalorder %s557, %s559
      %p566 = scmp.eq.s32.totalorder %s108, 1
      %p567 = por %p565, %p566
      %p568 = scmp.ne.s32.totalorder %s559, %s560
      %p569 = scmp.eq.s32.totalorder %s108, 0
      %p570 = por %p568, %p569
      %p571 = scmp.ne.s32.totalorder %s559, %s560
      %p572 = scmp.eq.s32.totalorder %s109, 1
      %p573 = por %p571, %p572
      %p575 = scmp.ne.s32.totalorder %s560, %s574
      %p576 = scmp.eq.s32.totalorder %s109, 0
      %p577 = por %p575, %p576
      %s579 = sadd.s32 %s578, 1
      %p582 = scmp.eq.s32.totalorder %s103, 1
      %p583 = scmp.ne.s32.totalorder %s578, %s580
      %p584 = scmp.eq.s32.totalorder %s103, 0
      %p585 = por %p583, %p584
      %p586 = scmp.ne.s32.totalorder %s578, %s580
      %p587 = scmp.eq.s32.totalorder %s108, 1
      %p588 = por %p586, %p587
      %p589 = scmp.ne.s32.totalorder %s580, %s581
      %p590 = scmp.eq.s32.totalorder %s108, 0
      %p591 = por %p589, %p590
      %p592 = scmp.ne.s32.totalorder %s580, %s581
      %p593 = scmp.eq.s32.totalorder %s109, 1
      %p594 = por %p592, %p593
      %p596 = scmp.ne.s32.totalorder %s581, %s595
      %p597 = scmp.eq.s32.totalorder %s109, 0
      %p598 = por %p596, %p597
      %s600 = sadd.s32 %s599, 1
      %p603 = scmp.eq.s32.totalorder %s103, 1
      %p604 = scmp.ne.s32.totalorder %s599, %s601
      %p605 = scmp.eq.s32.totalorder %s103, 0
      %p606 = por %p604, %p605
      %p607 = scmp.ne.s32.totalorder %s599, %s601
      %p608 = scmp.eq.s32.totalorder %s108, 1
      %p609 = por %p607, %p608
      %p610 = scmp.ne.s32.totalorder %s601, %s602
      %p611 = scmp.eq.s32.totalorder %s108, 0
      %p612 = por %p610, %p611
      %p613 = scmp.ne.s32.totalorder %s601, %s602
      %p614 = scmp.eq.s32.totalorder %s109, 1
      %p615 = por %p613, %p614
      %p617 = scmp.ne.s32.totalorder %s602, %s616
      %p618 = scmp.eq.s32.totalorder %s109, 0
      %p619 = por %p617, %p618
      %s621 = sadd.s32 %s620, 1
      %p624 = scmp.eq.s32.totalorder %s103, 1
      %p625 = scmp.ne.s32.totalorder %s620, %s622
      %p626 = scmp.eq.s32.totalorder %s103, 0
      %p627 = por %p625, %p626
      %p628 = scmp.ne.s32.totalorder %s620, %s622
      %p629 = scmp.eq.s32.totalorder %s108, 1
      %p630 = por %p628, %p629
      %p631 = scmp.ne.s32.totalorder %s622, %s623
      %p632 = scmp.eq.s32.totalorder %s108, 0
      %p633 = por %p631, %p632
      %p634 = scmp.ne.s32.totalorder %s622, %s623
      %p635 = scmp.eq.s32.totalorder %s109, 1
      %p636 = por %p634, %p635
      %p638 = scmp.ne.s32.totalorder %s623, %s637
      %p639 = scmp.eq.s32.totalorder %s109, 0
      %p640 = por %p638, %p639
      %s642 = sadd.s32 %s641, 1
      %p645 = scmp.eq.s32.totalorder %s103, 1
      %p646 = scmp.ne.s32.totalorder %s641, %s643
      %p647 = scmp.eq.s32.totalorder %s103, 0
      %p648 = por %p646, %p647
      %p649 = scmp.ne.s32.totalorder %s641, %s643
      %p650 = scmp.eq.s32.totalorder %s108, 1
      %p651 = por %p649, %p650
      %p652 = scmp.ne.s32.totalorder %s643, %s644
      %p653 = scmp.eq.s32.totalorder %s108, 0
      %p654 = por %p652, %p653
      %p655 = scmp.ne.s32.totalorder %s643, %s644
      %p656 = scmp.eq.s32.totalorder %s109, 1
      %p657 = por %p655, %p656
      %p659 = scmp.ne.s32.totalorder %s644, %s658
      %p660 = scmp.eq.s32.totalorder %s109, 0
      %p661 = por %p659, %p660
      %s663 = sadd.s32 %s662, 1
      %p666 = scmp.eq.s32.totalorder %s103, 1
      %p667 = scmp.ne.s32.totalorder %s662, %s664
      %p668 = scmp.eq.s32.totalorder %s103, 0
      %p669 = por %p667, %p668
      %p670 = scmp.ne.s32.totalorder %s662, %s664
      %p671 = scmp.eq.s32.totalorder %s108, 1
      %p672 = por %p670, %p671
      %p673 = scmp.ne.s32.totalorder %s664, %s665
      %p674 = scmp.eq.s32.totalorder %s108, 0
      %p675 = por %p673, %p674
      %p676 = scmp.ne.s32.totalorder %s664, %s665
      %p677 = scmp.eq.s32.totalorder %s109, 1
      %p678 = por %p676, %p677
      %p680 = scmp.ne.s32.totalorder %s665, %s679
      %p681 = scmp.eq.s32.totalorder %s109, 0
      %p682 = por %p680, %p681
      %s684 = sadd.s32 %s683, 1
      %p687 = scmp.eq.s32.totalorder %s103, 1
      %p688 = scmp.ne.s32.totalorder %s683, %s685
      %p689 = scmp.eq.s32.totalorder %s103, 0
      %p690 = por %p688, %p689
      %p691 = scmp.ne.s32.totalorder %s683, %s685
      %p692 = scmp.eq.s32.totalorder %s108, 1
      %p693 = por %p691, %p692
      %p694 = scmp.ne.s32.totalorder %s685, %s686
      %p695 = scmp.eq.s32.totalorder %s108, 0
      %p696 = por %p694, %p695
      %p697 = scmp.ne.s32.totalorder %s685, %s686
      %p698 = scmp.eq.s32.totalorder %s109, 1
      %p699 = por %p697, %p698
      %p701 = scmp.ne.s32.totalorder %s686, %s700
      %p702 = scmp.eq.s32.totalorder %s109, 0
      %p703 = por %p701, %p702
      %s705 = sadd.s32 %s704, 1
      %p708 = scmp.eq.s32.totalorder %s103, 1
      %p709 = scmp.ne.s32.totalorder %s704, %s706
      %p710 = scmp.eq.s32.totalorder %s103, 0
      %p711 = por %p709, %p710
      %p712 = scmp.ne.s32.totalorder %s704, %s706
      %p713 = scmp.eq.s32.totalorder %s108, 1
      %p714 = por %p712, %p713
      %p715 = scmp.ne.s32.totalorder %s706, %s707
      %p716 = scmp.eq.s32.totalorder %s108, 0
      %p717 = por %p715, %p716
      %p718 = scmp.ne.s32.totalorder %s706, %s707
      %p719 = scmp.eq.s32.totalorder %s109, 1
      %p720 = por %p718, %p719
      %p722 = scmp.ne.s32.totalorder %s707, %s721
      %p723 = scmp.eq.s32.totalorder %s109, 0
      %p724 = por %p722, %p723
      %s726 = sadd.s32 %s725, 1
      %p729 = scmp.eq.s32.totalorder %s103, 1
      %p730 = scmp.ne.s32.totalorder %s725, %s727
      %p731 = scmp.eq.s32.totalorder %s103, 0
      %p732 = por %p730, %p731
      %p733 = scmp.ne.s32.totalorder %s725, %s727
      %p734 = scmp.eq.s32.totalorder %s108, 1
      %p735 = por %p733, %p734
      %p736 = scmp.ne.s32.totalorder %s727, %s728
      %p737 = scmp.eq.s32.totalorder %s108, 0
      %p738 = por %p736, %p737
      %p739 = scmp.ne.s32.totalorder %s727, %s728
      %p740 = scmp.eq.s32.totalorder %s109, 1
      %p741 = por %p739, %p740
      %p743 = scmp.ne.s32.totalorder %s728, %s742
      %p744 = scmp.eq.s32.totalorder %s109, 0
      %p745 = por %p743, %p744
      %s747 = sadd.s32 %s746, 1
      %p750 = scmp.eq.s32.totalorder %s103, 1
      %p751 = scmp.ne.s32.totalorder %s746, %s748
      %p752 = scmp.eq.s32.totalorder %s103, 0
      %p753 = por %p751, %p752
      %p754 = scmp.ne.s32.totalorder %s746, %s748
      %p755 = scmp.eq.s32.totalorder %s108, 1
      %p756 = por %p754, %p755
      %p757 = scmp.ne.s32.totalorder %s748, %s749
      %p758 = scmp.eq.s32.totalorder %s108, 0
      %p759 = por %p757, %p758
      %p760 = scmp.ne.s32.totalorder %s748, %s749
      %p761 = scmp.eq.s32.totalorder %s109, 1
      %p762 = por %p760, %p761
      %p764 = scmp.ne.s32.totalorder %s749, %s763
      %p765 = scmp.eq.s32.totalorder %s109, 0
      %p766 = por %p764, %p765
      %s768 = sadd.s32 %s767, 1
      %p771 = scmp.eq.s32.totalorder %s103, 1
      %p772 = scmp.ne.s32.totalorder %s767, %s769
      %p773 = scmp.eq.s32.totalorder %s103, 0
      %p774 = por %p772, %p773
      %p775 = scmp.ne.s32.totalorder %s767, %s769
      %p776 = scmp.eq.s32.totalorder %s108, 1
      %p777 = por %p775, %p776
      %p778 = scmp.ne.s32.totalorder %s769, %s770
      %p779 = scmp.eq.s32.totalorder %s108, 0
      %p780 = por %p778, %p779
      %p781 = scmp.ne.s32.totalorder %s769, %s770
      %p782 = scmp.eq.s32.totalorder %s109, 1
      %p783 = por %p781, %p782
      %p785 = scmp.ne.s32.totalorder %s770, %s784
      %p786 = scmp.eq.s32.totalorder %s109, 0
      %p787 = por %p785, %p786
      %s789 = sadd.s32 %s788, 1
      %p792 = scmp.eq.s32.totalorder %s103, 1
      %p793 = scmp.ne.s32.totalorder %s788, %s790
      %p794 = scmp.eq.s32.totalorder %s103, 0
      %p795 = por %p793, %p794
      %p796 = scmp.ne.s32.totalorder %s788, %s790
      %p797 = scmp.eq.s32.totalorder %s108, 1
      %p798 = por %p796, %p797
      %p799 = scmp.ne.s32.totalorder %s790, %s791
      %p800 = scmp.eq.s32.totalorder %s108, 0
      %p801 = por %p799, %p800
      %p802 = scmp.ne.s32.totalorder %s790, %s791
      %p803 = scmp.eq.s32.totalorder %s109, 1
      %p804 = por %p802, %p803
      %p806 = scmp.ne.s32.totalorder %s791, %s805
      %p807 = scmp.eq.s32.totalorder %s109, 0
      %p808 = por %p806, %p807
      %s810 = sadd.s32 %s809, 1
      %p813 = scmp.eq.s32.totalorder %s103, 1
      %p814 = scmp.ne.s32.totalorder %s809, %s811
      %p815 = scmp.eq.s32.totalorder %s103, 0
      %p816 = por %p814, %p815
      %p817 = scmp.ne.s32.totalorder %s809, %s811
      %p818 = scmp.eq.s32.totalorder %s108, 1
      %p819 = por %p817, %p818
      %p820 = scmp.ne.s32.totalorder %s811, %s812
      %p821 = scmp.eq.s32.totalorder %s108, 0
      %p822 = por %p820, %p821
      %p823 = scmp.ne.s32.totalorder %s811, %s812
      %p824 = scmp.eq.s32.totalorder %s109, 1
      %p825 = por %p823, %p824
      %p827 = scmp.ne.s32.totalorder %s812, %s826
      %p828 = scmp.eq.s32.totalorder %s109, 0
      %p829 = por %p827, %p828
      %s831 = sadd.s32 %s830, 1
      %p834 = scmp.eq.s32.totalorder %s103, 1
      %p835 = scmp.ne.s32.totalorder %s830, %s832
      %p836 = scmp.eq.s32.totalorder %s103, 0
      %p837 = por %p835, %p836
      %p838 = scmp.ne.s32.totalorder %s830, %s832
      %p839 = scmp.eq.s32.totalorder %s108, 1
      %p840 = por %p838, %p839
      %p841 = scmp.ne.s32.totalorder %s832, %s833
      %p842 = scmp.eq.s32.totalorder %s108, 0
      %p843 = por %p841, %p842
      %p844 = scmp.ne.s32.totalorder %s832, %s833
      %p845 = scmp.eq.s32.totalorder %s109, 1
      %p846 = por %p844, %p845
      %p848 = scmp.ne.s32.totalorder %s833, %s847
      %p849 = scmp.eq.s32.totalorder %s109, 0
      %p850 = por %p848, %p849
      %s852 = sadd.s32 %s851, 1
      %p855 = scmp.eq.s32.totalorder %s103, 1
      %p856 = scmp.ne.s32.totalorder %s851, %s853
      %p857 = scmp.eq.s32.totalorder %s103, 0
      %p858 = por %p856, %p857
      %p859 = scmp.ne.s32.totalorder %s851, %s853
      %p860 = scmp.eq.s32.totalorder %s108, 1
      %p861 = por %p859, %p860
      %p862 = scmp.ne.s32.totalorder %s853, %s854
      %p863 = scmp.eq.s32.totalorder %s108, 0
      %p864 = por %p862, %p863
      %p865 = scmp.ne.s32.totalorder %s853, %s854
      %p866 = scmp.eq.s32.totalorder %s109, 1
      %p867 = por %p865, %p866
      %p869 = scmp.ne.s32.totalorder %s854, %s868
      %p870 = scmp.eq.s32.totalorder %s109, 0
      %p871 = por %p869, %p870
      %s873 = sadd.s32 %s872, 1
      %p876 = scmp.eq.s32.totalorder %s103, 1
      %p877 = scmp.ne.s32.totalorder %s872, %s874
      %p878 = scmp.eq.s32.totalorder %s103, 0
      %p879 = por %p877, %p878
      %p880 = scmp.ne.s32.totalorder %s872, %s874
      %p881 = scmp.eq.s32.totalorder %s108, 1
      %p882 = por %p880, %p881
      %p883 = scmp.ne.s32.totalorder %s874, %s875
      %p884 = scmp.eq.s32.totalorder %s108, 0
      %p885 = por %p883, %p884
      %p886 = scmp.ne.s32.totalorder %s874, %s875
      %p887 = scmp.eq.s32.totalorder %s109, 1
      %p888 = por %p886, %p887
      %p890 = scmp.ne.s32.totalorder %s875, %s889
      %p891 = scmp.eq.s32.totalorder %s109, 0
      %p892 = por %p890, %p891
      %s894 = sadd.s32 %s893, 1
      %p897 = scmp.eq.s32.totalorder %s103, 1
      %p898 = scmp.ne.s32.totalorder %s893, %s895
      %p899 = scmp.eq.s32.totalorder %s103, 0
      %p900 = por %p898, %p899
      %p901 = scmp.ne.s32.totalorder %s893, %s895
      %p902 = scmp.eq.s32.totalorder %s108, 1
      %p903 = por %p901, %p902
      %p904 = scmp.ne.s32.totalorder %s895, %s896
      %p905 = scmp.eq.s32.totalorder %s108, 0
      %p906 = por %p904, %p905
      %p907 = scmp.ne.s32.totalorder %s895, %s896
      %p908 = scmp.eq.s32.totalorder %s109, 1
      %p909 = por %p907, %p908
      %p911 = scmp.ne.s32.totalorder %s896, %s910
      %p912 = scmp.eq.s32.totalorder %s109, 0
      %p913 = por %p911, %p912
      %s914 = ssub.s32 %s103, %s110
      %p915 = scmp.eq.s32.totalorder %s914, 0
      %s917 = sadd.s32 %s916, 1
      %s918 = scalar_select %p915, %s916, %s917
      %p921 = pneg %p915
      %p922 = scmp.eq.s32.totalorder %s103, 1
      %p923 = por %p921, %p922
      %p924 = scmp.ne.s32.totalorder %s916, %s919
      %p925 = scmp.eq.s32.totalorder %s103, 0
      %p926 = por %p924, %p925
      %p927 = scmp.ne.s32.totalorder %s916, %s919
      %p928 = scmp.eq.s32.totalorder %s108, 1
      %p929 = por %p927, %p928
      %p930 = scmp.ne.s32.totalorder %s919, %s920
      %p931 = scmp.eq.s32.totalorder %s108, 0
      %p932 = por %p930, %p931
      %p933 = scmp.ne.s32.totalorder %s919, %s920
      %p934 = scmp.eq.s32.totalorder %s109, 1
      %p935 = por %p933, %p934
      %p937 = scmp.ne.s32.totalorder %s920, %s936
      %p938 = scmp.eq.s32.totalorder %s109, 0
      %p939 = por %p937, %p938
      %p940 = scmp.le.s32.totalorder 1, %s103
      %p941 = scmp.lt.s32.totalorder %s103, 3
      %p942 = pnand %p940, %p941
      %p943 = pneg %p942
      // Predicated region
      $region9: #{tpu_custom_call.1} parent=5 // pred_check
        _
      $region10: #{tpu_custom_call.1} parent=5 // pred_check_branch
        %945 = sbr.rel (%p942) target = $region12
      $region11: #{tpu_custom_call.1} parent=5 // pred_region
        %s946 = ssub.s32 %s103, 1
        // Predicated region
        $region13: #{tpu_custom_call.1} parent=11 // pred_check
          %p947 = pneg %p150
        $region14: #{tpu_custom_call.1} parent=11 // pred_check_branch
          %949 = sbr.rel (%p947) target = $region16
        $region15: #{tpu_custom_call.1} parent=11 // pred_region
          %s951 = ssub.s32 256, 256
          %952 = vsyncadd [#allocation3], %s951
          %s954 = sshll.u32 [#allocation2], 4
          %s955 = int_to_ptr.vmem [resolvable:$true] %s954
          %957 = dma.hbm_to_vmem [thread:$0]  %s3, 256, %s955, [#allocation3]
        $region16: #{tpu_custom_call.1} parent=11 // pred_fallthru
          _
        // Predicated region
        $region17: #{tpu_custom_call.1} parent=11 // pred_check
          %p958 = pneg %p171
        $region18: #{tpu_custom_call.1} parent=11 // pred_check_branch
          %960 = sbr.rel (%p958) target = $region20
        $region19: #{tpu_custom_call.1} parent=11 // pred_region
          %s962 = ssub.s32 32, 32
          %963 = vsyncadd [#allocation6], %s962
          %s965 = sshll.u32 [#allocation5], 4
          %s966 = int_to_ptr.vmem [resolvable:$true] %s965
          %968 = dma.hbm_to_vmem [thread:$0]  %s5, 32, %s966, [#allocation6]
        $region20: #{tpu_custom_call.1} parent=11 // pred_fallthru
          _
        // Predicated region
        $region21: #{tpu_custom_call.1} parent=11 // pred_check
          %p969 = pneg %p192
        $region22: #{tpu_custom_call.1} parent=11 // pred_check_branch
          %971 = sbr.rel (%p969) target = $region24
        $region23: #{tpu_custom_call.1} parent=11 // pred_region
          %s973 = ssub.s32 4096, 4096
          %974 = vsyncadd [#allocation6], %s973
          %s975 = sshll.u32 [#allocation7], 4
          %s976 = int_to_ptr.vmem [resolvable:$true] %s975
          %981 = dma.hbm_to_vmem [thread:$0]  %s7, 4096, %s976, [#allocation6], 128, 128, 8
        $region24: #{tpu_custom_call.1} parent=11 // pred_fallthru
          _
        // Predicated region
        $region25: #{tpu_custom_call.1} parent=11 // pred_check
          %p982 = pneg %p213
        $region26: #{tpu_custom_call.1} parent=11 // pred_check_branch
          %984 = sbr.rel (%p982) target = $region28
        $region27: #{tpu_custom_call.1} parent=11 // pred_region
          _
        $region28: #{tpu_custom_call.1} parent=11 // pred_fallthru
          _
        // Predicated region
        $region29: #{tpu_custom_call.1} parent=11 // pred_check
          %p985 = pneg %p234
        $region30: #{tpu_custom_call.1} parent=11 // pred_check_branch
          %987 = sbr.rel (%p985) target = $region32
        $region31: #{tpu_custom_call.1} parent=11 // pred_region
          _
        $region32: #{tpu_custom_call.1} parent=11 // pred_fallthru
          _
        // Predicated region
        $region33: #{tpu_custom_call.1} parent=11 // pred_check
          %p988 = pneg %p255
        $region34: #{tpu_custom_call.1} parent=11 // pred_check_branch
          %990 = sbr.rel (%p988) target = $region36
        $region35: #{tpu_custom_call.1} parent=11 // pred_region
          %s992 = ssub.s32 16, 16
          %993 = vsyncadd [#allocation9], %s992
          %s995 = sshll.u32 [#allocation8], 4
          %s996 = int_to_ptr.vmem [resolvable:$true] %s995
          %998 = dma.hbm_to_vmem [thread:$0]  %s13, 16, %s996, [#allocation9]
        $region36: #{tpu_custom_call.1} parent=11 // pred_fallthru
          _
        // Predicated region
        $region37: #{tpu_custom_call.1} parent=11 // pred_check
          %p999 = pneg %p276
        $region38: #{tpu_custom_call.1} parent=11 // pred_check_branch
          %1001 = sbr.rel (%p999) target = $region40
        $region39: #{tpu_custom_call.1} parent=11 // pred_region
          %s1003 = ssub.s32 4096, 4096
          %1004 = vsyncadd [#allocation9], %s1003
          %s1005 = sshll.u32 [#allocation10], 4
          %s1006 = int_to_ptr.vmem [resolvable:$true] %s1005
          %1011 = dma.hbm_to_vmem [thread:$0]  %s15, 4096, %s1006, [#allocation9], 128, 128, 8
        $region40: #{tpu_custom_call.1} parent=11 // pred_fallthru
          _
        // Predicated region
        $region41: #{tpu_custom_call.1} parent=11 // pred_check
          %p1012 = pneg %p297
        $region42: #{tpu_custom_call.1} parent=11 // pred_check_branch
          %1014 = sbr.rel (%p1012) target = $region44
        $region43: #{tpu_custom_call.1} parent=11 // pred_region
          %s1016 = ssub.s32 2048, 2048
          %1017 = vsyncadd [#allocation12], %s1016
          %s1018 = sshll.u32 [#allocation11], 4
          %s1019 = int_to_ptr.vmem [resolvable:$true] %s1018
          %1024 = dma.hbm_to_vmem [thread:$0]  %s17, 2048, %s1019, [#allocation12], 128, 128, 8
        $region44: #{tpu_custom_call.1} parent=11 // pred_fallthru
          _
        // Predicated region
        $region45: #{tpu_custom_call.1} parent=11 // pred_check
          %p1025 = pneg %p318
        $region46: #{tpu_custom_call.1} parent=11 // pred_check_branch
          %1027 = sbr.rel (%p1025) target = $region48
        $region47: #{tpu_custom_call.1} parent=11 // pred_region
          %s1029 = ssub.s32 2048, 2048
          %1030 = vsyncadd [#allocation12], %s1029
          %s1031 = sshll.u32 [#allocation13], 4
          %s1032 = int_to_ptr.vmem [resolvable:$true] %s1031
          %1037 = dma.hbm_to_vmem [thread:$0]  %s19, 2048, %s1032, [#allocation12], 128, 128, 8
        $region48: #{tpu_custom_call.1} parent=11 // pred_fallthru
          _
        // Predicated region
        $region49: #{tpu_custom_call.1} parent=11 // pred_check
          %p1038 = pneg %p339
        $region50: #{tpu_custom_call.1} parent=11 // pred_check_branch
          %1040 = sbr.rel (%p1038) target = $region52
        $region51: #{tpu_custom_call.1} parent=11 // pred_region
          %s1042 = ssub.s32 16, 16
          %1043 = vsyncadd [#allocation15], %s1042
          %s1045 = sshll.u32 [#allocation14], 4
          %s1046 = int_to_ptr.vmem [resolvable:$true] %s1045
          %1048 = dma.hbm_to_vmem [thread:$0]  %s21, 16, %s1046, [#allocation15]
        $region52: #{tpu_custom_call.1} parent=11 // pred_fallthru
          _
        // Predicated region
        $region53: #{tpu_custom_call.1} parent=11 // pred_check
          %p1049 = pneg %p360
        $region54: #{tpu_custom_call.1} parent=11 // pred_check_branch
          %1051 = sbr.rel (%p1049) target = $region56
        $region55: #{tpu_custom_call.1} parent=11 // pred_region
          %s1053 = ssub.s32 2048, 2048
          %1054 = vsyncadd [#allocation15], %s1053
          %s1055 = sshll.u32 [#allocation16], 4
          %s1056 = int_to_ptr.vmem [resolvable:$true] %s1055
          %1061 = dma.hbm_to_vmem [thread:$0]  %s23, 2048, %s1056, [#allocation15], 128, 128, 8
        $region56: #{tpu_custom_call.1} parent=11 // pred_fallthru
          _
        // Predicated region
        $region57: #{tpu_custom_call.1} parent=11 // pred_check
          %p1062 = pneg %p381
        $region58: #{tpu_custom_call.1} parent=11 // pred_check_branch
          %1064 = sbr.rel (%p1062) target = $region60
        $region59: #{tpu_custom_call.1} parent=11 // pred_region
          %s1066 = ssub.s32 16, 16
          %1067 = vsyncadd [#allocation18], %s1066
          %s1069 = sshll.u32 [#allocation17], 4
          %s1070 = int_to_ptr.vmem [resolvable:$true] %s1069
          %1072 = dma.hbm_to_vmem [thread:$0]  %s25, 16, %s1070, [#allocation18]
        $region60: #{tpu_custom_call.1} parent=11 // pred_fallthru
          _
        // Predicated region
        $region61: #{tpu_custom_call.1} parent=11 // pred_check
          %p1073 = pneg %p402
        $region62: #{tpu_custom_call.1} parent=11 // pred_check_branch
          %1075 = sbr.rel (%p1073) target = $region64
        $region63: #{tpu_custom_call.1} parent=11 // pred_region
          %s1077 = ssub.s32 2048, 2048
          %1078 = vsyncadd [#allocation18], %s1077
          %s1079 = sshll.u32 [#allocation19], 4
          %s1080 = int_to_ptr.vmem [resolvable:$true] %s1079
          %1085 = dma.hbm_to_vmem [thread:$0]  %s27, 2048, %s1080, [#allocation18], 128, 128, 8
        $region64: #{tpu_custom_call.1} parent=11 // pred_fallthru
          _
        // Predicated region
        $region65: #{tpu_custom_call.1} parent=11 // pred_check
          %p1086 = pneg %p423
        $region66: #{tpu_custom_call.1} parent=11 // pred_check_branch
          %1088 = sbr.rel (%p1086) target = $region68
        $region67: #{tpu_custom_call.1} parent=11 // pred_region
          %s1090 = ssub.s32 2048, 2048
          %1091 = vsyncadd [#allocation21], %s1090
          %s1092 = sshll.u32 [#allocation20], 4
          %s1093 = int_to_ptr.vmem [resolvable:$true] %s1092
          %1098 = dma.hbm_to_vmem [thread:$0]  %s29, 2048, %s1093, [#allocation21], 128, 128, 8
        $region68: #{tpu_custom_call.1} parent=11 // pred_fallthru
          _
        // Predicated region
        $region69: #{tpu_custom_call.1} parent=11 // pred_check
          %p1099 = pneg %p444
        $region70: #{tpu_custom_call.1} parent=11 // pred_check_branch
          %1101 = sbr.rel (%p1099) target = $region72
        $region71: #{tpu_custom_call.1} parent=11 // pred_region
          %s1103 = ssub.s32 2048, 2048
          %1104 = vsyncadd [#allocation21], %s1103
          %s1105 = sshll.u32 [#allocation22], 4
          %s1106 = int_to_ptr.vmem [resolvable:$true] %s1105
          %1111 = dma.hbm_to_vmem [thread:$0]  %s31, 2048, %s1106, [#allocation21], 128, 128, 8
        $region72: #{tpu_custom_call.1} parent=11 // pred_fallthru
          _
        // Predicated region
        $region73: #{tpu_custom_call.1} parent=11 // pred_check
          %p1112 = pneg %p465
        $region74: #{tpu_custom_call.1} parent=11 // pred_check_branch
          %1114 = sbr.rel (%p1112) target = $region76
        $region75: #{tpu_custom_call.1} parent=11 // pred_region
          %s1116 = ssub.s32 2048, 2048
          %1117 = vsyncadd [#allocation24], %s1116
          %s1118 = sshll.u32 [#allocation23], 4
          %s1119 = int_to_ptr.vmem [resolvable:$true] %s1118
          %1124 = dma.hbm_to_vmem [thread:$0]  %s33, 2048, %s1119, [#allocation24], 128, 128, 8
        $region76: #{tpu_custom_call.1} parent=11 // pred_fallthru
          _
        // Predicated region
        $region77: #{tpu_custom_call.1} parent=11 // pred_check
          %p1125 = pneg %p486
        $region78: #{tpu_custom_call.1} parent=11 // pred_check_branch
          %1127 = sbr.rel (%p1125) target = $region80
        $region79: #{tpu_custom_call.1} parent=11 // pred_region
          %s1129 = ssub.s32 16, 16
          %1130 = vsyncadd [#allocation24], %s1129
          %s1132 = sshll.u32 [#allocation25], 4
          %s1133 = int_to_ptr.vmem [resolvable:$true] %s1132
          %1135 = dma.hbm_to_vmem [thread:$0]  %s35, 16, %s1133, [#allocation24]
        $region80: #{tpu_custom_call.1} parent=11 // pred_fallthru
          _
        // Predicated region
        $region81: #{tpu_custom_call.1} parent=11 // pred_check
          %p1136 = pneg %p507
        $region82: #{tpu_custom_call.1} parent=11 // pred_check_branch
          %1138 = sbr.rel (%p1136) target = $region84
        $region83: #{tpu_custom_call.1} parent=11 // pred_region
          %s1140 = ssub.s32 2048, 2048
          %1141 = vsyncadd [#allocation27], %s1140
          %s1142 = sshll.u32 [#allocation26], 4
          %s1143 = int_to_ptr.vmem [resolvable:$true] %s1142
          %1148 = dma.hbm_to_vmem [thread:$0]  %s37, 2048, %s1143, [#allocation27], 128, 128, 8
        $region84: #{tpu_custom_call.1} parent=11 // pred_fallthru
          _
        // Predicated region
        $region85: #{tpu_custom_call.1} parent=11 // pred_check
          %p1149 = pneg %p528
        $region86: #{tpu_custom_call.1} parent=11 // pred_check_branch
          %1151 = sbr.rel (%p1149) target = $region88
        $region87: #{tpu_custom_call.1} parent=11 // pred_region
          %s1153 = ssub.s32 16, 16
          %1154 = vsyncadd [#allocation27], %s1153
          %s1156 = sshll.u32 [#allocation28], 4
          %s1157 = int_to_ptr.vmem [resolvable:$true] %s1156
          %1159 = dma.hbm_to_vmem [thread:$0]  %s39, 16, %s1157, [#allocation27]
        $region88: #{tpu_custom_call.1} parent=11 // pred_fallthru
          _
        // Predicated region
        $region89: #{tpu_custom_call.1} parent=11 // pred_check
          %p1160 = pneg %p549
        $region90: #{tpu_custom_call.1} parent=11 // pred_check_branch
          %1162 = sbr.rel (%p1160) target = $region92
        $region91: #{tpu_custom_call.1} parent=11 // pred_region
          %s1164 = ssub.s32 2048, 2048
          %1165 = vsyncadd [#allocation30], %s1164
          %s1166 = sshll.u32 [#allocation29], 4
          %s1167 = int_to_ptr.vmem [resolvable:$true] %s1166
          %1172 = dma.hbm_to_vmem [thread:$0]  %s41, 2048, %s1167, [#allocation30], 128, 128, 8
        $region92: #{tpu_custom_call.1} parent=11 // pred_fallthru
          _
        // Predicated region
        $region93: #{tpu_custom_call.1} parent=11 // pred_check
          %p1173 = pneg %p570
        $region94: #{tpu_custom_call.1} parent=11 // pred_check_branch
          %1175 = sbr.rel (%p1173) target = $region96
        $region95: #{tpu_custom_call.1} parent=11 // pred_region
          %s1177 = ssub.s32 2048, 2048
          %1178 = vsyncadd [#allocation30], %s1177
          %s1179 = sshll.u32 [#allocation31], 4
          %s1180 = int_to_ptr.vmem [resolvable:$true] %s1179
          %1185 = dma.hbm_to_vmem [thread:$0]  %s43, 2048, %s1180, [#allocation30], 128, 128, 8
        $region96: #{tpu_custom_call.1} parent=11 // pred_fallthru
          _
        // Predicated region
        $region97: #{tpu_custom_call.1} parent=11 // pred_check
          %p1186 = pneg %p591
        $region98: #{tpu_custom_call.1} parent=11 // pred_check_branch
          %1188 = sbr.rel (%p1186) target = $region100
        $region99: #{tpu_custom_call.1} parent=11 // pred_region
          %s1190 = ssub.s32 2048, 2048
          %1191 = vsyncadd [#allocation33], %s1190
          %s1192 = sshll.u32 [#allocation32], 4
          %s1193 = int_to_ptr.vmem [resolvable:$true] %s1192
          %1198 = dma.hbm_to_vmem [thread:$0]  %s45, 2048, %s1193, [#allocation33], 128, 128, 8
        $region100: #{tpu_custom_call.1} parent=11 // pred_fallthru
          _
        // Predicated region
        $region101: #{tpu_custom_call.1} parent=11 // pred_check
          %p1199 = pneg %p612
        $region102: #{tpu_custom_call.1} parent=11 // pred_check_branch
          %1201 = sbr.rel (%p1199) target = $region104
        $region103: #{tpu_custom_call.1} parent=11 // pred_region
          %s1203 = ssub.s32 2048, 2048
          %1204 = vsyncadd [#allocation33], %s1203
          %s1205 = sshll.u32 [#allocation34], 4
          %s1206 = int_to_ptr.vmem [resolvable:$true] %s1205
          %1211 = dma.hbm_to_vmem [thread:$0]  %s47, 2048, %s1206, [#allocation33], 128, 128, 8
        $region104: #{tpu_custom_call.1} parent=11 // pred_fallthru
          _
        // Predicated region
        $region105: #{tpu_custom_call.1} parent=11 // pred_check
          %p1212 = pneg %p633
        $region106: #{tpu_custom_call.1} parent=11 // pred_check_branch
          %1214 = sbr.rel (%p1212) target = $region108
        $region107: #{tpu_custom_call.1} parent=11 // pred_region
          %s1216 = ssub.s32 16, 16
          %1217 = vsyncadd [#allocation36], %s1216
          %s1219 = sshll.u32 [#allocation35], 4
          %s1220 = int_to_ptr.vmem [resolvable:$true] %s1219
          %1222 = dma.hbm_to_vmem [thread:$0]  %s49, 16, %s1220, [#allocation36]
        $region108: #{tpu_custom_call.1} parent=11 // pred_fallthru
          _
        // Predicated region
        $region109: #{tpu_custom_call.1} parent=11 // pred_check
          %p1223 = pneg %p654
        $region110: #{tpu_custom_call.1} parent=11 // pred_check_branch
          %1225 = sbr.rel (%p1223) target = $region112
        $region111: #{tpu_custom_call.1} parent=11 // pred_region
          %s1227 = ssub.s32 2048, 2048
          %1228 = vsyncadd [#allocation36], %s1227
          %s1229 = sshll.u32 [#allocation37], 4
          %s1230 = int_to_ptr.vmem [resolvable:$true] %s1229
          %1235 = dma.hbm_to_vmem [thread:$0]  %s51, 2048, %s1230, [#allocation36], 128, 128, 8
        $region112: #{tpu_custom_call.1} parent=11 // pred_fallthru
          _
        // Predicated region
        $region113: #{tpu_custom_call.1} parent=11 // pred_check
          %p1236 = pneg %p675
        $region114: #{tpu_custom_call.1} parent=11 // pred_check_branch
          %1238 = sbr.rel (%p1236) target = $region116
        $region115: #{tpu_custom_call.1} parent=11 // pred_region
          %s1240 = ssub.s32 16, 16
          %1241 = vsyncadd [#allocation39], %s1240
          %s1243 = sshll.u32 [#allocation38], 4
          %s1244 = int_to_ptr.vmem [resolvable:$true] %s1243
          %1246 = dma.hbm_to_vmem [thread:$0]  %s53, 16, %s1244, [#allocation39]
        $region116: #{tpu_custom_call.1} parent=11 // pred_fallthru
          _
        // Predicated region
        $region117: #{tpu_custom_call.1} parent=11 // pred_check
          %p1247 = pneg %p696
        $region118: #{tpu_custom_call.1} parent=11 // pred_check_branch
          %1249 = sbr.rel (%p1247) target = $region120
        $region119: #{tpu_custom_call.1} parent=11 // pred_region
          %s1251 = ssub.s32 2048, 2048
          %1252 = vsyncadd [#allocation39], %s1251
          %s1253 = sshll.u32 [#allocation40], 4
          %s1254 = int_to_ptr.vmem [resolvable:$true] %s1253
          %1259 = dma.hbm_to_vmem [thread:$0]  %s55, 2048, %s1254, [#allocation39], 128, 128, 8
        $region120: #{tpu_custom_call.1} parent=11 // pred_fallthru
          _
        // Predicated region
        $region121: #{tpu_custom_call.1} parent=11 // pred_check
          %p1260 = pneg %p717
        $region122: #{tpu_custom_call.1} parent=11 // pred_check_branch
          %1262 = sbr.rel (%p1260) target = $region124
        $region123: #{tpu_custom_call.1} parent=11 // pred_region
          %s1264 = ssub.s32 2048, 2048
          %1265 = vsyncadd [#allocation42], %s1264
          %s1266 = sshll.u32 [#allocation41], 4
          %s1267 = int_to_ptr.vmem [resolvable:$true] %s1266
          %1272 = dma.hbm_to_vmem [thread:$0]  %s57, 2048, %s1267, [#allocation42], 128, 128, 8
        $region124: #{tpu_custom_call.1} parent=11 // pred_fallthru
          _
        // Predicated region
        $region125: #{tpu_custom_call.1} parent=11 // pred_check
          %p1273 = pneg %p738
        $region126: #{tpu_custom_call.1} parent=11 // pred_check_branch
          %1275 = sbr.rel (%p1273) target = $region128
        $region127: #{tpu_custom_call.1} parent=11 // pred_region
          %s1277 = ssub.s32 2048, 2048
          %1278 = vsyncadd [#allocation42], %s1277
          %s1279 = sshll.u32 [#allocation43], 4
          %s1280 = int_to_ptr.vmem [resolvable:$true] %s1279
          %1285 = dma.hbm_to_vmem [thread:$0]  %s59, 2048, %s1280, [#allocation42], 128, 128, 8
        $region128: #{tpu_custom_call.1} parent=11 // pred_fallthru
          _
        // Predicated region
        $region129: #{tpu_custom_call.1} parent=11 // pred_check
          %p1286 = pneg %p759
        $region130: #{tpu_custom_call.1} parent=11 // pred_check_branch
          %1288 = sbr.rel (%p1286) target = $region132
        $region131: #{tpu_custom_call.1} parent=11 // pred_region
          %s1290 = ssub.s32 2048, 2048
          %1291 = vsyncadd [#allocation45], %s1290
          %s1292 = sshll.u32 [#allocation44], 4
          %s1293 = int_to_ptr.vmem [resolvable:$true] %s1292
          %1298 = dma.hbm_to_vmem [thread:$0]  %s61, 2048, %s1293, [#allocation45], 128, 128, 8
        $region132: #{tpu_custom_call.1} parent=11 // pred_fallthru
          _
        // Predicated region
        $region133: #{tpu_custom_call.1} parent=11 // pred_check
          %p1299 = pneg %p780
        $region134: #{tpu_custom_call.1} parent=11 // pred_check_branch
          %1301 = sbr.rel (%p1299) target = $region136
        $region135: #{tpu_custom_call.1} parent=11 // pred_region
          %s1303 = ssub.s32 16, 16
          %1304 = vsyncadd [#allocation45], %s1303
          %s1306 = sshll.u32 [#allocation46], 4
          %s1307 = int_to_ptr.vmem [resolvable:$true] %s1306
          %1309 = dma.hbm_to_vmem [thread:$0]  %s63, 16, %s1307, [#allocation45]
        $region136: #{tpu_custom_call.1} parent=11 // pred_fallthru
          _
        // Predicated region
        $region137: #{tpu_custom_call.1} parent=11 // pred_check
          %p1310 = pneg %p801
        $region138: #{tpu_custom_call.1} parent=11 // pred_check_branch
          %1312 = sbr.rel (%p1310) target = $region140
        $region139: #{tpu_custom_call.1} parent=11 // pred_region
          _
        $region140: #{tpu_custom_call.1} parent=11 // pred_fallthru
          _
        // Predicated region
        $region141: #{tpu_custom_call.1} parent=11 // pred_check
          %p1313 = pneg %p822
        $region142: #{tpu_custom_call.1} parent=11 // pred_check_branch
          %1315 = sbr.rel (%p1313) target = $region144
        $region143: #{tpu_custom_call.1} parent=11 // pred_region
          _
        $region144: #{tpu_custom_call.1} parent=11 // pred_fallthru
          _
        // Predicated region
        $region145: #{tpu_custom_call.1} parent=11 // pred_check
          %p1316 = pneg %p843
        $region146: #{tpu_custom_call.1} parent=11 // pred_check_branch
          %1318 = sbr.rel (%p1316) target = $region148
        $region147: #{tpu_custom_call.1} parent=11 // pred_region
          %s1320 = ssub.s32 2048, 2048
          %1321 = vsyncadd [#allocation48], %s1320
          %s1322 = sshll.u32 [#allocation47], 4
          %s1323 = int_to_ptr.vmem [resolvable:$true] %s1322
          %1328 = dma.hbm_to_vmem [thread:$0]  %s69, 2048, %s1323, [#allocation48], 128, 128, 8
        $region148: #{tpu_custom_call.1} parent=11 // pred_fallthru
          _
        // Predicated region
        $region149: #{tpu_custom_call.1} parent=11 // pred_check
          %p1329 = pneg %p864
        $region150: #{tpu_custom_call.1} parent=11 // pred_check_branch
          %1331 = sbr.rel (%p1329) target = $region152
        $region151: #{tpu_custom_call.1} parent=11 // pred_region
          %s1333 = ssub.s32 2048, 2048
          %1334 = vsyncadd [#allocation48], %s1333
          %s1335 = sshll.u32 [#allocation49], 4
          %s1336 = int_to_ptr.vmem [resolvable:$true] %s1335
          %1341 = dma.hbm_to_vmem [thread:$0]  %s71, 2048, %s1336, [#allocation48], 128, 128, 8
        $region152: #{tpu_custom_call.1} parent=11 // pred_fallthru
          _
        // Predicated region
        $region153: #{tpu_custom_call.1} parent=11 // pred_check
          %p1342 = pneg %p885
        $region154: #{tpu_custom_call.1} parent=11 // pred_check_branch
          %1344 = sbr.rel (%p1342) target = $region156
        $region155: #{tpu_custom_call.1} parent=11 // pred_region
          %s1346 = ssub.s32 2048, 2048
          %1347 = vsyncadd [#allocation51], %s1346
          %s1348 = sshll.u32 [#allocation50], 4
          %s1349 = int_to_ptr.vmem [resolvable:$true] %s1348
          %1354 = dma.hbm_to_vmem [thread:$0]  %s73, 2048, %s1349, [#allocation51], 128, 128, 8
        $region156: #{tpu_custom_call.1} parent=11 // pred_fallthru
          _
        // Predicated region
        $region157: #{tpu_custom_call.1} parent=11 // pred_check
          %p1355 = pneg %p906
        $region158: #{tpu_custom_call.1} parent=11 // pred_check_branch
          %1357 = sbr.rel (%p1355) target = $region160
        $region159: #{tpu_custom_call.1} parent=11 // pred_region
          _
        $region160: #{tpu_custom_call.1} parent=11 // pred_fallthru
          _
      $region12: #{tpu_custom_call.1} parent=5 // pred_fallthru
        _
      %p1358 = scmp.lt.s32.totalorder %s103, 2
      // Predicated region
      $region161: #{tpu_custom_call.1} parent=5 // pred_check
        %p1359 = pneg %p1358
      $region162: #{tpu_custom_call.1} parent=5 // pred_check_branch
        %1361 = sbr.rel (%p1359) target = $region164
      $region163: #{tpu_custom_call.1} parent=5 // pred_region
        // Predicated region
        $region165: #{tpu_custom_call.1} parent=163 // pred_check
          %p1362 = pneg %p123
        $region166: #{tpu_custom_call.1} parent=163 // pred_check_branch
          %1364 = sbr.rel (%p1362) target = $region168
        $region167: #{tpu_custom_call.1} parent=163 // pred_region
          %s1365 = smul.u32 8, %s103
          %p1366 = scmp.lt.s32.totalorder %s1365, 15
          %s1367 = scalar_select %p1366, %s1365, 15
          %s1368 = smul.addr %s1367, 8
          %s1369 = scalar_lea.vmem %s1, %s1368
          %s1370 = smul.u32 8, %s103
        $region168: #{tpu_custom_call.1} parent=163 // pred_fallthru
          _
      $region164: #{tpu_custom_call.1} parent=5 // pred_fallthru
        _
      %p1371 = scmp.le.s32.totalorder 1, %s103
      %p1372 = scmp.lt.s32.totalorder %s103, 3
      %p1373 = pnand %p1371, %p1372
      %p1374 = pneg %p1373
      // Predicated region
      $region169: #{tpu_custom_call.1} parent=5 // pred_check
        _
      $region170: #{tpu_custom_call.1} parent=5 // pred_check_branch
        %1376 = sbr.rel (%p1373) target = $region172
      $region171: #{tpu_custom_call.1} parent=5 // pred_region
        %s1377 = ssub.s32 %s103, 1
        // Predicated region
        $region173: #{tpu_custom_call.1} parent=171 // pred_check
          %p1378 = pneg %p150
        $region174: #{tpu_custom_call.1} parent=171 // pred_check_branch
          %1380 = sbr.rel (%p1378) target = $region176
        $region175: #{tpu_custom_call.1} parent=171 // pred_region
          %1381 = dma.done [#allocation3], 256
        $region176: #{tpu_custom_call.1} parent=171 // pred_fallthru
          _
        // Predicated region
        $region177: #{tpu_custom_call.1} parent=171 // pred_check
          %p1382 = pneg %p171
        $region178: #{tpu_custom_call.1} parent=171 // pred_check_branch
          %1384 = sbr.rel (%p1382) target = $region180
        $region179: #{tpu_custom_call.1} parent=171 // pred_region
          %1385 = dma.done [#allocation6], 32
        $region180: #{tpu_custom_call.1} parent=171 // pred_fallthru
          _
        // Predicated region
        $region181: #{tpu_custom_call.1} parent=171 // pred_check
          %p1386 = pneg %p192
        $region182: #{tpu_custom_call.1} parent=171 // pred_check_branch
          %1388 = sbr.rel (%p1386) target = $region184
        $region183: #{tpu_custom_call.1} parent=171 // pred_region
          %1389 = dma.done [#allocation6], 4096
        $region184: #{tpu_custom_call.1} parent=171 // pred_fallthru
          _
        // Predicated region
        $region185: #{tpu_custom_call.1} parent=171 // pred_check
          %p1390 = pneg %p255
        $region186: #{tpu_custom_call.1} parent=171 // pred_check_branch
          %1392 = sbr.rel (%p1390) target = $region188
        $region187: #{tpu_custom_call.1} parent=171 // pred_region
          %1393 = dma.done [#allocation9], 16
        $region188: #{tpu_custom_call.1} parent=171 // pred_fallthru
          _
        // Predicated region
        $region189: #{tpu_custom_call.1} parent=171 // pred_check
          %p1394 = pneg %p276
        $region190: #{tpu_custom_call.1} parent=171 // pred_check_branch
          %1396 = sbr.rel (%p1394) target = $region192
        $region191: #{tpu_custom_call.1} parent=171 // pred_region
          %1397 = dma.done [#allocation9], 4096
        $region192: #{tpu_custom_call.1} parent=171 // pred_fallthru
          _
        // Predicated region
        $region193: #{tpu_custom_call.1} parent=171 // pred_check
          %p1398 = pneg %p297
        $region194: #{tpu_custom_call.1} parent=171 // pred_check_branch
          %1400 = sbr.rel (%p1398) target = $region196
        $region195: #{tpu_custom_call.1} parent=171 // pred_region
          %1401 = dma.done [#allocation12], 2048
        $region196: #{tpu_custom_call.1} parent=171 // pred_fallthru
          _
        // Predicated region
        $region197: #{tpu_custom_call.1} parent=171 // pred_check
          %p1402 = pneg %p318
        $region198: #{tpu_custom_call.1} parent=171 // pred_check_branch
          %1404 = sbr.rel (%p1402) target = $region200
        $region199: #{tpu_custom_call.1} parent=171 // pred_region
          %1405 = dma.done [#allocation12], 2048
        $region200: #{tpu_custom_call.1} parent=171 // pred_fallthru
          _
        // Predicated region
        $region201: #{tpu_custom_call.1} parent=171 // pred_check
          %p1406 = pneg %p339
        $region202: #{tpu_custom_call.1} parent=171 // pred_check_branch
          %1408 = sbr.rel (%p1406) target = $region204
        $region203: #{tpu_custom_call.1} parent=171 // pred_region
          %1409 = dma.done [#allocation15], 16
        $region204: #{tpu_custom_call.1} parent=171 // pred_fallthru
          _
        // Predicated region
        $region205: #{tpu_custom_call.1} parent=171 // pred_check
          %p1410 = pneg %p360
        $region206: #{tpu_custom_call.1} parent=171 // pred_check_branch
          %1412 = sbr.rel (%p1410) target = $region208
        $region207: #{tpu_custom_call.1} parent=171 // pred_region
          %1413 = dma.done [#allocation15], 2048
        $region208: #{tpu_custom_call.1} parent=171 // pred_fallthru
          _
        // Predicated region
        $region209: #{tpu_custom_call.1} parent=171 // pred_check
          %p1414 = pneg %p381
        $region210: #{tpu_custom_call.1} parent=171 // pred_check_branch
          %1416 = sbr.rel (%p1414) target = $region212
        $region211: #{tpu_custom_call.1} parent=171 // pred_region
          %1417 = dma.done [#allocation18], 16
        $region212: #{tpu_custom_call.1} parent=171 // pred_fallthru
          _
        // Predicated region
        $region213: #{tpu_custom_call.1} parent=171 // pred_check
          %p1418 = pneg %p402
        $region214: #{tpu_custom_call.1} parent=171 // pred_check_branch
          %1420 = sbr.rel (%p1418) target = $region216
        $region215: #{tpu_custom_call.1} parent=171 // pred_region
          %1421 = dma.done [#allocation18], 2048
        $region216: #{tpu_custom_call.1} parent=171 // pred_fallthru
          _
        // Predicated region
        $region217: #{tpu_custom_call.1} parent=171 // pred_check
          %p1422 = pneg %p423
        $region218: #{tpu_custom_call.1} parent=171 // pred_check_branch
          %1424 = sbr.rel (%p1422) target = $region220
        $region219: #{tpu_custom_call.1} parent=171 // pred_region
          %1425 = dma.done [#allocation21], 2048
        $region220: #{tpu_custom_call.1} parent=171 // pred_fallthru
          _
        // Predicated region
        $region221: #{tpu_custom_call.1} parent=171 // pred_check
          %p1426 = pneg %p444
        $region222: #{tpu_custom_call.1} parent=171 // pred_check_branch
          %1428 = sbr.rel (%p1426) target = $region224
        $region223: #{tpu_custom_call.1} parent=171 // pred_region
          %1429 = dma.done [#allocation21], 2048
        $region224: #{tpu_custom_call.1} parent=171 // pred_fallthru
          _
        // Predicated region
        $region225: #{tpu_custom_call.1} parent=171 // pred_check
          %p1430 = pneg %p465
        $region226: #{tpu_custom_call.1} parent=171 // pred_check_branch
          %1432 = sbr.rel (%p1430) target = $region228
        $region227: #{tpu_custom_call.1} parent=171 // pred_region
          %1433 = dma.done [#allocation24], 2048
        $region228: #{tpu_custom_call.1} parent=171 // pred_fallthru
          _
        // Predicated region
        $region229: #{tpu_custom_call.1} parent=171 // pred_check
          %p1434 = pneg %p486
        $region230: #{tpu_custom_call.1} parent=171 // pred_check_branch
          %1436 = sbr.rel (%p1434) target = $region232
        $region231: #{tpu_custom_call.1} parent=171 // pred_region
          %1437 = dma.done [#allocation24], 16
        $region232: #{tpu_custom_call.1} parent=171 // pred_fallthru
          _
        // Predicated region
        $region233: #{tpu_custom_call.1} parent=171 // pred_check
          %p1438 = pneg %p507
        $region234: #{tpu_custom_call.1} parent=171 // pred_check_branch
          %1440 = sbr.rel (%p1438) target = $region236
        $region235: #{tpu_custom_call.1} parent=171 // pred_region
          %1441 = dma.done [#allocation27], 2048
        $region236: #{tpu_custom_call.1} parent=171 // pred_fallthru
          _
        // Predicated region
        $region237: #{tpu_custom_call.1} parent=171 // pred_check
          %p1442 = pneg %p528
        $region238: #{tpu_custom_call.1} parent=171 // pred_check_branch
          %1444 = sbr.rel (%p1442) target = $region240
        $region239: #{tpu_custom_call.1} parent=171 // pred_region
          %1445 = dma.done [#allocation27], 16
        $region240: #{tpu_custom_call.1} parent=171 // pred_fallthru
          _
        // Predicated region
        $region241: #{tpu_custom_call.1} parent=171 // pred_check
          %p1446 = pneg %p549
        $region242: #{tpu_custom_call.1} parent=171 // pred_check_branch
          %1448 = sbr.rel (%p1446) target = $region244
        $region243: #{tpu_custom_call.1} parent=171 // pred_region
          %1449 = dma.done [#allocation30], 2048
        $region244: #{tpu_custom_call.1} parent=171 // pred_fallthru
          _
        // Predicated region
        $region245: #{tpu_custom_call.1} parent=171 // pred_check
          %p1450 = pneg %p570
        $region246: #{tpu_custom_call.1} parent=171 // pred_check_branch
          %1452 = sbr.rel (%p1450) target = $region248
        $region247: #{tpu_custom_call.1} parent=171 // pred_region
          %1453 = dma.done [#allocation30], 2048
        $region248: #{tpu_custom_call.1} parent=171 // pred_fallthru
          _
        // Predicated region
        $region249: #{tpu_custom_call.1} parent=171 // pred_check
          %p1454 = pneg %p591
        $region250: #{tpu_custom_call.1} parent=171 // pred_check_branch
          %1456 = sbr.rel (%p1454) target = $region252
        $region251: #{tpu_custom_call.1} parent=171 // pred_region
          %1457 = dma.done [#allocation33], 2048
        $region252: #{tpu_custom_call.1} parent=171 // pred_fallthru
          _
        // Predicated region
        $region253: #{tpu_custom_call.1} parent=171 // pred_check
          %p1458 = pneg %p612
        $region254: #{tpu_custom_call.1} parent=171 // pred_check_branch
          %1460 = sbr.rel (%p1458) target = $region256
        $region255: #{tpu_custom_call.1} parent=171 // pred_region
          %1461 = dma.done [#allocation33], 2048
        $region256: #{tpu_custom_call.1} parent=171 // pred_fallthru
          _
        // Predicated region
        $region257: #{tpu_custom_call.1} parent=171 // pred_check
          %p1462 = pneg %p633
        $region258: #{tpu_custom_call.1} parent=171 // pred_check_branch
          %1464 = sbr.rel (%p1462) target = $region260
        $region259: #{tpu_custom_call.1} parent=171 // pred_region
          %1465 = dma.done [#allocation36], 16
        $region260: #{tpu_custom_call.1} parent=171 // pred_fallthru
          _
        // Predicated region
        $region261: #{tpu_custom_call.1} parent=171 // pred_check
          %p1466 = pneg %p654
        $region262: #{tpu_custom_call.1} parent=171 // pred_check_branch
          %1468 = sbr.rel (%p1466) target = $region264
        $region263: #{tpu_custom_call.1} parent=171 // pred_region
          %1469 = dma.done [#allocation36], 2048
        $region264: #{tpu_custom_call.1} parent=171 // pred_fallthru
          _
        // Predicated region
        $region265: #{tpu_custom_call.1} parent=171 // pred_check
          %p1470 = pneg %p675
        $region266: #{tpu_custom_call.1} parent=171 // pred_check_branch
          %1472 = sbr.rel (%p1470) target = $region268
        $region267: #{tpu_custom_call.1} parent=171 // pred_region
          %1473 = dma.done [#allocation39], 16
        $region268: #{tpu_custom_call.1} parent=171 // pred_fallthru
          _
        // Predicated region
        $region269: #{tpu_custom_call.1} parent=171 // pred_check
          %p1474 = pneg %p696
        $region270: #{tpu_custom_call.1} parent=171 // pred_check_branch
          %1476 = sbr.rel (%p1474) target = $region272
        $region271: #{tpu_custom_call.1} parent=171 // pred_region
          %1477 = dma.done [#allocation39], 2048
        $region272: #{tpu_custom_call.1} parent=171 // pred_fallthru
          _
        // Predicated region
        $region273: #{tpu_custom_call.1} parent=171 // pred_check
          %p1478 = pneg %p717
        $region274: #{tpu_custom_call.1} parent=171 // pred_check_branch
          %1480 = sbr.rel (%p1478) target = $region276
        $region275: #{tpu_custom_call.1} parent=171 // pred_region
          %1481 = dma.done [#allocation42], 2048
        $region276: #{tpu_custom_call.1} parent=171 // pred_fallthru
          _
        // Predicated region
        $region277: #{tpu_custom_call.1} parent=171 // pred_check
          %p1482 = pneg %p738
        $region278: #{tpu_custom_call.1} parent=171 // pred_check_branch
          %1484 = sbr.rel (%p1482) target = $region280
        $region279: #{tpu_custom_call.1} parent=171 // pred_region
          %1485 = dma.done [#allocation42], 2048
        $region280: #{tpu_custom_call.1} parent=171 // pred_fallthru
          _
        // Predicated region
        $region281: #{tpu_custom_call.1} parent=171 // pred_check
          %p1486 = pneg %p759
        $region282: #{tpu_custom_call.1} parent=171 // pred_check_branch
          %1488 = sbr.rel (%p1486) target = $region284
        $region283: #{tpu_custom_call.1} parent=171 // pred_region
          %1489 = dma.done [#allocation45], 2048
        $region284: #{tpu_custom_call.1} parent=171 // pred_fallthru
          _
        // Predicated region
        $region285: #{tpu_custom_call.1} parent=171 // pred_check
          %p1490 = pneg %p780
        $region286: #{tpu_custom_call.1} parent=171 // pred_check_branch
          %1492 = sbr.rel (%p1490) target = $region288
        $region287: #{tpu_custom_call.1} parent=171 // pred_region
          %1493 = dma.done [#allocation45], 16
        $region288: #{tpu_custom_call.1} parent=171 // pred_fallthru
          _
        // Predicated region
        $region289: #{tpu_custom_call.1} parent=171 // pred_check
          %p1494 = pneg %p843
        $region290: #{tpu_custom_call.1} parent=171 // pred_check_branch
          %1496 = sbr.rel (%p1494) target = $region292
        $region291: #{tpu_custom_call.1} parent=171 // pred_region
          %1497 = dma.done [#allocation48], 2048
        $region292: #{tpu_custom_call.1} parent=171 // pred_fallthru
          _
        // Predicated region
        $region293: #{tpu_custom_call.1} parent=171 // pred_check
          %p1498 = pneg %p864
        $region294: #{tpu_custom_call.1} parent=171 // pred_check_branch
          %1500 = sbr.rel (%p1498) target = $region296
        $region295: #{tpu_custom_call.1} parent=171 // pred_region
          %1501 = dma.done [#allocation48], 2048
        $region296: #{tpu_custom_call.1} parent=171 // pred_fallthru
          _
        // Predicated region
        $region297: #{tpu_custom_call.1} parent=171 // pred_check
          %p1502 = pneg %p885
        $region298: #{tpu_custom_call.1} parent=171 // pred_check_branch
          %1504 = sbr.rel (%p1502) target = $region300
        $region299: #{tpu_custom_call.1} parent=171 // pred_region
          %1505 = dma.done [#allocation51], 2048
        $region300: #{tpu_custom_call.1} parent=171 // pred_fallthru
          _
        %s1506 = smul.u32 8, %s108
        %p1507 = scmp.lt.s32.totalorder %s1506, 15
        %s1508 = scalar_select %p1507, %s1506, 15
        %s1509 = smul.addr %s1508, 8
        %s1510 = scalar_lea.vmem %s1, %s1509
        %p1511 = pneg %p129
        %p1512 = pneg %p126
        %p1513 = pneg %p150
        %p1514 = pneg %p147
        %p1515 = pneg %p171
        %p1516 = pneg %p168
        %p1517 = pneg %p192
        %p1518 = pneg %p189
        %p1519 = pneg %p213
        %p1520 = pneg %p210
        %p1521 = pneg %p234
        %p1522 = pneg %p231
        %p1523 = pneg %p255
        %p1524 = pneg %p252
        %p1525 = pneg %p276
        %p1526 = pneg %p273
        %p1527 = pneg %p297
        %p1528 = pneg %p294
        %p1529 = pneg %p318
        %p1530 = pneg %p315
        %p1531 = pneg %p339
        %p1532 = pneg %p336
        %p1533 = pneg %p360
        %p1534 = pneg %p357
        %p1535 = pneg %p381
        %p1536 = pneg %p378
        %p1537 = pneg %p402
        %p1538 = pneg %p399
        %p1539 = pneg %p423
        %p1540 = pneg %p420
        %p1541 = pneg %p444
        %p1542 = pneg %p441
        %p1543 = pneg %p465
        %p1544 = pneg %p462
        %p1545 = pneg %p486
        %p1546 = pneg %p483
        %p1547 = pneg %p507
        %p1548 = pneg %p504
        %p1549 = pneg %p528
        %p1550 = pneg %p525
        %p1551 = pneg %p549
        %p1552 = pneg %p546
        %p1553 = pneg %p570
        %p1554 = pneg %p567
        %p1555 = pneg %p591
        %p1556 = pneg %p588
        %p1557 = pneg %p612
        %p1558 = pneg %p609
        %p1559 = pneg %p633
        %p1560 = pneg %p630
        %p1561 = pneg %p654
        %p1562 = pneg %p651
        %p1563 = pneg %p675
        %p1564 = pneg %p672
        %p1565 = pneg %p696
        %p1566 = pneg %p693
        %p1567 = pneg %p717
        %p1568 = pneg %p714
        %p1569 = pneg %p738
        %p1570 = pneg %p735
        %p1571 = pneg %p759
        %p1572 = pneg %p756
        %p1573 = pneg %p780
        %p1574 = pneg %p777
        %p1575 = pneg %p801
        %p1576 = pneg %p798
        %p1577 = pneg %p822
        %p1578 = pneg %p819
        %p1579 = pneg %p843
        %p1580 = pneg %p840
        %p1581 = pneg %p864
        %p1582 = pneg %p861
        %p1583 = pneg %p885
        %p1584 = pneg %p882
        %p1585 = pneg %p906
        %p1586 = pneg %p903
        %p1587 = pneg %p932
        %p1588 = pneg %p929
        %s1589 = sand.u32 %s919, 1
        %s1590 = scalar_lea.sflag [#allocation4], %s1589
        %s1591 = sand.u32 %s919, 1
        %s1592 = smul.addr %s1591, 2
        %s1593 = scalar_lea.vmem [#allocation52], %s1592
        %s1594 = smul.u32 8, %s108
        %p1595 = scmp.lt.s32.totalorder %s1594, 15
        %s1596 = scalar_select %p1595, %s1594, 15
        %s1597 = smul.addr %s1596, 8
        %s1598 = scalar_lea.vmem %s1, %s1597
        %s1599 = smul.u32 8, %s108
        %v1600 = vld [vmem:[%s1598] sm:$0xff]
        %v1601 = vld [vmem:[%s1598 + $0x8] sm:$0xff]
        %v1602 = vld [vmem:[%s1598 + $0x10] sm:$0xff]
        %v1603 = vld [vmem:[%s1598 + $0x18] sm:$0xff]
        %v1604 = vld [vmem:[%s1598 + $0x20] sm:$0xff]
        %v1605 = vld [vmem:[%s1598 + $0x28] sm:$0xff]
        %v1606 = vld [vmem:[%s1598 + $0x30] sm:$0xff]
        %v1607 = vld [vmem:[%s1598 + $0x38] sm:$0xff]
        %v1608 = vld [vmem:[#allocation2] sm:$0xff]
        %v1609 = vld [vmem:[#allocation2 + $0x8] sm:$0xff]
        %v1610 = vld [vmem:[#allocation5] sm:$0x3]
        %v1612 = vlaneseq
        %v1613 = vshrl.u32 %v1612, 7
        %v1614 = vsub.s32 0, %v1613
        %v1615 = vrot.slane %v1610, %v1614
        %v1616 = vlaneseq
        %v1617 = vshrl.u32 %v1616, 7
        %v1618 = vsub.s32 1, %v1617
        %v1619 = vrot.slane %v1610, %v1618
        %vm1622 = vcmask 64512
        %v1624 = vsel %vm1622, %v1600, 0
        %v1627 = vsel %vm1622, %v1601, 0
        %v1630 = vsel %vm1622, %v1602, 0
        %v1633 = vsel %vm1622, %v1603, 0
        %v1636 = vsel %vm1622, %v1604, 0
        %v1639 = vsel %vm1622, %v1605, 0
        %v1642 = vsel %vm1622, %v1606, 0
        %v1645 = vsel %vm1622, %v1607, 0
        %1647 = vmatprep.subr.mxu0 %v1609
        %1648 = vmatpush1.msra.mxu0 %v1608
        %1649 = vmatprep.subr.mxu0 0.0
        %1650 = vmatpush1.msra.mxu0 0.0
        %1651 = vmatprep.subr.mxu0 0.0
        %1652 = vmatpush1.msra.mxu0 0.0
        %1653 = vmatprep.subr.mxu0 0.0
        %1654 = vmatpush1.msra.mxu0 0.0
        %1655 = vmatprep.subr.mxu0 0.0
        %1656 = vmatpush1.msra.mxu0 0.0
        %1657 = vmatprep.subr.mxu0 0.0
        %1658 = vmatpush1.msra.mxu0 0.0
        %1659 = vmatprep.subr.mxu0 0.0
        %1660 = vmatpush1.msra.mxu0 0.0
        %1661 = vmatprep.subr.mxu0 0.0
        %1662 = vmatpush1.msra.mxu0 0.0
        %1663 = vmatprep.subr.mxu0 0.0
        %1664 = vmatpush1.msra.mxu0 0.0
        %1665 = vmatprep.subr.mxu0 0.0
        %1666 = vmatpush1.msra.mxu0 0.0
        %1667 = vmatprep.subr.mxu0 0.0
        %1668 = vmatpush1.msra.mxu0 0.0
        %1669 = vmatprep.subr.mxu0 0.0
        %1670 = vmatpush1.msra.mxu0 0.0
        %1671 = vmatprep.subr.mxu0 0.0
        %1672 = vmatpush1.msra.mxu0 0.0
        %1673 = vmatprep.subr.mxu0 0.0
        %1674 = vmatpush1.msra.mxu0 0.0
        %1675 = vmatprep.subr.mxu0 0.0
        %1676 = vmatpush1.msra.mxu0 0.0
        %1677 = vmatprep.subr.mxu0 0.0
        %1678 = vmatpush1.msra.mxu0 0.0
        %1679 = vmatprep.subr.mxu0 0.0
        %1680 = vmatpush1.msra.mxu0 0.0
        %1681 = vmatprep.subr.mxu0 0.0
        %1682 = vmatpush1.msra.mxu0 0.0
        %1683 = vmatprep.subr.mxu0 0.0
        %1684 = vmatpush1.msra.mxu0 0.0
        %1685 = vmatprep.subr.mxu0 0.0
        %1686 = vmatpush1.msra.mxu0 0.0
        %1687 = vmatprep.subr.mxu0 0.0
        %1688 = vmatpush1.msra.mxu0 0.0
        %1689 = vmatprep.subr.mxu0 0.0
        %1690 = vmatpush1.msra.mxu0 0.0
        %1691 = vmatprep.subr.mxu0 0.0
        %1692 = vmatpush1.msra.mxu0 0.0
        %1693 = vmatprep.subr.mxu0 0.0
        %1694 = vmatpush1.msra.mxu0 0.0
        %1695 = vmatprep.subr.mxu0 0.0
        %1696 = vmatpush1.msra.mxu0 0.0
        %1697 = vmatprep.subr.mxu0 0.0
        %1698 = vmatpush1.msra.mxu0 0.0
        %1699 = vmatprep.subr.mxu0 0.0
        %1700 = vmatpush1.msra.mxu0 0.0
        %1701 = vmatprep.subr.mxu0 0.0
        %1702 = vmatpush1.msra.mxu0 0.0
        %1703 = vmatprep.subr.mxu0 0.0
        %1704 = vmatpush1.msra.mxu0 0.0
        %1705 = vmatprep.subr.mxu0 0.0
        %1706 = vmatpush1.msra.mxu0 0.0
        %1707 = vmatprep.subr.mxu0 0.0
        %1708 = vmatpush1.msra.mxu0 0.0
        %1709 = vmatprep.subr.mxu0 0.0
        %1710 = vmatpush1.msra.mxu0 0.0
        %1711 = vmatprep.mubr.f32.mxu0 0.0
        %1712 = vmatmul.mubr.f32.gmra.mrb[0].mxu0 %v1624
        %v1713 = vpop.f32.mrb[0].mxu0
        %v1714 = vadd.f32 %v1615, %v1713
        %v1715 = vpop.f32.mrb[0].mxu0
        %v1716 = vadd.f32 %v1619, %v1715
        %1717 = vmatprep.mubr.f32.mxu0 0.0
        %1718 = vmatmul.mubr.f32.gmra.mrb[0].mxu0 %v1627
        %v1719 = vpop.f32.mrb[0].mxu0
        %v1720 = vadd.f32 %v1615, %v1719
        %v1721 = vpop.f32.mrb[0].mxu0
        %v1722 = vadd.f32 %v1619, %v1721
        %1723 = vmatprep.mubr.f32.mxu0 0.0
        %1724 = vmatmul.mubr.f32.gmra.mrb[0].mxu0 %v1630
        %v1725 = vpop.f32.mrb[0].mxu0
        %v1726 = vadd.f32 %v1615, %v1725
        %v1727 = vpop.f32.mrb[0].mxu0
        %v1728 = vadd.f32 %v1619, %v1727
        %1729 = vmatprep.mubr.f32.mxu0 0.0
        %1730 = vmatmul.mubr.f32.gmra.mrb[0].mxu0 %v1633
        %v1731 = vpop.f32.mrb[0].mxu0
        %v1732 = vadd.f32 %v1615, %v1731
        %v1733 = vpop.f32.mrb[0].mxu0
        %v1734 = vadd.f32 %v1619, %v1733
        %1735 = vmatprep.mubr.f32.mxu0 0.0
        %1736 = vmatmul.mubr.f32.gmra.mrb[0].mxu0 %v1636
        %v1737 = vpop.f32.mrb[0].mxu0
        %v1738 = vadd.f32 %v1615, %v1737
        %v1739 = vpop.f32.mrb[0].mxu0
        %v1740 = vadd.f32 %v1619, %v1739
        %1741 = vmatprep.mubr.f32.mxu0 0.0
        %1742 = vmatmul.mubr.f32.gmra.mrb[0].mxu0 %v1639
        %v1743 = vpop.f32.mrb[0].mxu0
        %v1744 = vadd.f32 %v1615, %v1743
        %v1745 = vpop.f32.mrb[0].mxu0
        %v1746 = vadd.f32 %v1619, %v1745
        %1747 = vmatprep.mubr.f32.mxu0 0.0
        %1748 = vmatmul.mubr.f32.gmra.mrb[0].mxu0 %v1642
        %v1749 = vpop.f32.mrb[0].mxu0
        %v1750 = vadd.f32 %v1615, %v1749
        %v1751 = vpop.f32.mrb[0].mxu0
        %v1752 = vadd.f32 %v1619, %v1751
        %1753 = vmatprep.mubr.f32.mxu0 0.0
        %1754 = vmatmul.mubr.f32.gmra.mrb[0].mxu0 %v1645
        %v1755 = vpop.f32.mrb[0].mxu0
        %v1756 = vadd.f32 %v1615, %v1755
        %v1757 = vpop.f32.mrb[0].mxu0
        %v1758 = vadd.f32 %v1619, %v1757
        %1759 = vdwg.mxu0
        %v1760 = vmax.f32 %v1714, 0.0
        %v1761 = vmax.f32 %v1716, 0.0
        %v1762 = vmax.f32 %v1720, 0.0
        %v1763 = vmax.f32 %v1722, 0.0
        %v1764 = vmax.f32 %v1726, 0.0
        %v1765 = vmax.f32 %v1728, 0.0
        %v1766 = vmax.f32 %v1732, 0.0
        %v1767 = vmax.f32 %v1734, 0.0
        %v1768 = vmax.f32 %v1738, 0.0
        %v1769 = vmax.f32 %v1740, 0.0
        %v1770 = vmax.f32 %v1744, 0.0
        %v1771 = vmax.f32 %v1746, 0.0
        %v1772 = vmax.f32 %v1750, 0.0
        %v1773 = vmax.f32 %v1752, 0.0
        %v1774 = vmax.f32 %v1756, 0.0
        %v1775 = vmax.f32 %v1758, 0.0
        %v1776 = vld [vmem:[#allocation7] sm:$0xff]
        %v1777 = vld [vmem:[#allocation7 + $0x8] sm:$0xff]
        %v1778 = vld [vmem:[#allocation7 + $0x10] sm:$0xff]
        %v1779 = vld [vmem:[#allocation7 + $0x18] sm:$0xff]
        %v1780 = vld [vmem:[#allocation7 + $0x20] sm:$0xff]
        %v1781 = vld [vmem:[#allocation7 + $0x28] sm:$0xff]
        %v1782 = vld [vmem:[#allocation7 + $0x30] sm:$0xff]
        %v1783 = vld [vmem:[#allocation7 + $0x38] sm:$0xff]
        %v1784 = vld [vmem:[#allocation7 + $0x40] sm:$0xff]
        %v1785 = vld [vmem:[#allocation7 + $0x48] sm:$0xff]
        %v1786 = vld [vmem:[#allocation7 + $0x50] sm:$0xff]
        %v1787 = vld [vmem:[#allocation7 + $0x58] sm:$0xff]
        %v1788 = vld [vmem:[#allocation7 + $0x60] sm:$0xff]
        %v1789 = vld [vmem:[#allocation7 + $0x68] sm:$0xff]
        %v1790 = vld [vmem:[#allocation7 + $0x70] sm:$0xff]
        %v1791 = vld [vmem:[#allocation7 + $0x78] sm:$0xff]
        %v1792 = vld [vmem:[#allocation7 + $0x80] sm:$0xff]
        %v1793 = vld [vmem:[#allocation7 + $0x88] sm:$0xff]
        %v1794 = vld [vmem:[#allocation7 + $0x90] sm:$0xff]
        %v1795 = vld [vmem:[#allocation7 + $0x98] sm:$0xff]
        %v1796 = vld [vmem:[#allocation7 + $0xa0] sm:$0xff]
        %v1797 = vld [vmem:[#allocation7 + $0xa8] sm:$0xff]
        %v1798 = vld [vmem:[#allocation7 + $0xb0] sm:$0xff]
        %v1799 = vld [vmem:[#allocation7 + $0xb8] sm:$0xff]
        %v1800 = vld [vmem:[#allocation7 + $0xc0] sm:$0xff]
        %v1801 = vld [vmem:[#allocation7 + $0xc8] sm:$0xff]
        %v1802 = vld [vmem:[#allocation7 + $0xd0] sm:$0xff]
        %v1803 = vld [vmem:[#allocation7 + $0xd8] sm:$0xff]
        %v1804 = vld [vmem:[#allocation7 + $0xe0] sm:$0xff]
        %v1805 = vld [vmem:[#allocation7 + $0xe8] sm:$0xff]
        %v1806 = vld [vmem:[#allocation7 + $0xf0] sm:$0xff]
        %v1807 = vld [vmem:[#allocation7 + $0xf8] sm:$0xff]
        %v1808 = vld [vmem:[%s9] sm:$0x1]
        %v1810 = vlaneseq
        %v1811 = vshrl.u32 %v1810, 7
        %v1812 = vsub.s32 0, %v1811
        %v1813 = vrot.slane %v1808, %v1812
        %1815 = vmatprep.subr.mxu0 0.0
        %1816 = vmatpush1.msra.mxu0 %v1776
        %1817 = vmatprep.subr.mxu0 0.0
        %1818 = vmatpush1.msra.mxu0 %v1777
        %1819 = vmatprep.subr.mxu0 0.0
        %1820 = vmatpush1.msra.mxu0 %v1778
        %1821 = vmatprep.subr.mxu0 0.0
        %1822 = vmatpush1.msra.mxu0 %v1779
        %1823 = vmatprep.subr.mxu0 0.0
        %1824 = vmatpush1.msra.mxu0 %v1780
        %1825 = vmatprep.subr.mxu0 0.0
        %1826 = vmatpush1.msra.mxu0 %v1781
        %1827 = vmatprep.subr.mxu0 0.0
        %1828 = vmatpush1.msra.mxu0 %v1782
        %1829 = vmatprep.subr.mxu0 0.0
        %1830 = vmatpush1.msra.mxu0 %v1783
        %1831 = vmatprep.subr.mxu0 0.0
        %1832 = vmatpush1.msra.mxu0 %v1784
        %1833 = vmatprep.subr.mxu0 0.0
        %1834 = vmatpush1.msra.mxu0 %v1785
        %1835 = vmatprep.subr.mxu0 0.0
        %1836 = vmatpush1.msra.mxu0 %v1786
        %1837 = vmatprep.subr.mxu0 0.0
        %1838 = vmatpush1.msra.mxu0 %v1787
        %1839 = vmatprep.subr.mxu0 0.0
        %1840 = vmatpush1.msra.mxu0 %v1788
        %1841 = vmatprep.subr.mxu0 0.0
        %1842 = vmatpush1.msra.mxu0 %v1789
        %1843 = vmatprep.subr.mxu0 0.0
        %1844 = vmatpush1.msra.mxu0 %v1790
        %1845 = vmatprep.subr.mxu0 0.0
        %1846 = vmatpush1.msra.mxu0 %v1791
        %1847 = vmatprep.subr.mxu0 0.0
        %1848 = vmatpush1.msra.mxu0 %v1792
        %1849 = vmatprep.subr.mxu0 0.0
        %1850 = vmatpush1.msra.mxu0 %v1793
        %1851 = vmatprep.subr.mxu0 0.0
        %1852 = vmatpush1.msra.mxu0 %v1794
        %1853 = vmatprep.subr.mxu0 0.0
        %1854 = vmatpush1.msra.mxu0 %v1795
        %1855 = vmatprep.subr.mxu0 0.0
        %1856 = vmatpush1.msra.mxu0 %v1796
        %1857 = vmatprep.subr.mxu0 0.0
        %1858 = vmatpush1.msra.mxu0 %v1797
        %1859 = vmatprep.subr.mxu0 0.0
        %1860 = vmatpush1.msra.mxu0 %v1798
        %1861 = vmatprep.subr.mxu0 0.0
        %1862 = vmatpush1.msra.mxu0 %v1799
        %1863 = vmatprep.subr.mxu0 0.0
        %1864 = vmatpush1.msra.mxu0 %v1800
        %1865 = vmatprep.subr.mxu0 0.0
        %1866 = vmatpush1.msra.mxu0 %v1801
        %1867 = vmatprep.subr.mxu0 0.0
        %1868 = vmatpush1.msra.mxu0 %v1802
        %1869 = vmatprep.subr.mxu0 0.0
        %1870 = vmatpush1.msra.mxu0 %v1803
        %1871 = vmatprep.subr.mxu0 0.0
        %1872 = vmatpush1.msra.mxu0 %v1804
        %1873 = vmatprep.subr.mxu0 0.0
        %1874 = vmatpush1.msra.mxu0 %v1805
        %1875 = vmatprep.subr.mxu0 0.0
        %1876 = vmatpush1.msra.mxu0 %v1806
        %1877 = vmatprep.subr.mxu0 0.0
        %1878 = vmatpush1.msra.mxu0 %v1807
        %1879 = vmatprep.mubr.f32.mxu0 %v1761
        %1880 = vmatmul.mubr.f32.gmra.mrb[0].mxu0 %v1760
        %v1881 = vpop.f32.mrb[0].mxu0
        %v1882 = vadd.f32 %v1813, %v1881
        %v1883 = vpop.f32.mrb[0].mxu0
        %1884 = vmatprep.mubr.f32.mxu0 %v1763
        %1885 = vmatmul.mubr.f32.gmra.mrb[0].mxu0 %v1762
        %v1886 = vpop.f32.mrb[0].mxu0
        %v1887 = vadd.f32 %v1813, %v1886
        %v1888 = vpop.f32.mrb[0].mxu0
        %1889 = vmatprep.mubr.f32.mxu0 %v1765
        %1890 = vmatmul.mubr.f32.gmra.mrb[0].mxu0 %v1764
        %v1891 = vpop.f32.mrb[0].mxu0
        %v1892 = vadd.f32 %v1813, %v1891
        %v1893 = vpop.f32.mrb[0].mxu0
        %1894 = vmatprep.mubr.f32.mxu0 %v1767
        %1895 = vmatmul.mubr.f32.gmra.mrb[0].mxu0 %v1766
        %v1896 = vpop.f32.mrb[0].mxu0
        %v1897 = vadd.f32 %v1813, %v1896
        %v1898 = vpop.f32.mrb[0].mxu0
        %1899 = vmatprep.mubr.f32.mxu0 %v1769
        %1900 = vmatmul.mubr.f32.gmra.mrb[0].mxu0 %v1768
        %v1901 = vpop.f32.mrb[0].mxu0
        %v1902 = vadd.f32 %v1813, %v1901
        %v1903 = vpop.f32.mrb[0].mxu0
        %1904 = vmatprep.mubr.f32.mxu0 %v1771
        %1905 = vmatmul.mubr.f32.gmra.mrb[0].mxu0 %v1770
        %v1906 = vpop.f32.mrb[0].mxu0
        %v1907 = vadd.f32 %v1813, %v1906
        %v1908 = vpop.f32.mrb[0].mxu0
        %1909 = vmatprep.mubr.f32.mxu0 %v1773
        %1910 = vmatmul.mubr.f32.gmra.mrb[0].mxu0 %v1772
        %v1911 = vpop.f32.mrb[0].mxu0
        %v1912 = vadd.f32 %v1813, %v1911
        %v1913 = vpop.f32.mrb[0].mxu0
        %1914 = vmatprep.mubr.f32.mxu0 %v1775
        %1915 = vmatmul.mubr.f32.gmra.mrb[0].mxu0 %v1774
        %v1916 = vpop.f32.mrb[0].mxu0
        %v1917 = vadd.f32 %v1813, %v1916
        %v1918 = vpop.f32.mrb[0].mxu0
        %1919 = vdwg.mxu0
        %v1920 = vmax.f32 %v1882, 0.0
        %v1921 = vmax.f32 %v1887, 0.0
        %v1922 = vmax.f32 %v1892, 0.0
        %v1923 = vmax.f32 %v1897, 0.0
        %v1924 = vmax.f32 %v1902, 0.0
        %v1925 = vmax.f32 %v1907, 0.0
        %v1926 = vmax.f32 %v1912, 0.0
        %v1927 = vmax.f32 %v1917, 0.0
        %v1928 = vld [vmem:[%s11] sm:$0xff]
        %v1929 = vld [vmem:[%s11 + $0x8] sm:$0xff]
        %v1930 = vld [vmem:[%s11 + $0x10] sm:$0xff]
        %v1931 = vld [vmem:[%s11 + $0x18] sm:$0xff]
        %v1932 = vld [vmem:[%s11 + $0x20] sm:$0xff]
        %v1933 = vld [vmem:[%s11 + $0x28] sm:$0xff]
        %v1934 = vld [vmem:[%s11 + $0x30] sm:$0xff]
        %v1935 = vld [vmem:[%s11 + $0x38] sm:$0xff]
        %v1936 = vld [vmem:[%s11 + $0x40] sm:$0xff]
        %v1937 = vld [vmem:[%s11 + $0x48] sm:$0xff]
        %v1938 = vld [vmem:[%s11 + $0x50] sm:$0xff]
        %v1939 = vld [vmem:[%s11 + $0x58] sm:$0xff]
        %v1940 = vld [vmem:[%s11 + $0x60] sm:$0xff]
        %v1941 = vld [vmem:[%s11 + $0x68] sm:$0xff]
        %v1942 = vld [vmem:[%s11 + $0x70] sm:$0xff]
        %v1943 = vld [vmem:[%s11 + $0x78] sm:$0xff]
        %v1944 = vld [vmem:[#allocation8] sm:$0x1]
        %v1946 = vlaneseq
        %v1947 = vshrl.u32 %v1946, 7
        %v1948 = vsub.s32 0, %v1947
        %v1949 = vrot.slane %v1944, %v1948
        %1951 = vmatprep.subr.mxu0 0.0
        %1952 = vmatpush1.msra.mxu0 %v1928
        %1953 = vmatprep.subr.mxu0 0.0
        %1954 = vmatpush1.msra.mxu0 %v1929
        %1955 = vmatprep.subr.mxu0 0.0
        %1956 = vmatpush1.msra.mxu0 %v1930
        %1957 = vmatprep.subr.mxu0 0.0
        %1958 = vmatpush1.msra.mxu0 %v1931
        %1959 = vmatprep.subr.mxu0 0.0
        %1960 = vmatpush1.msra.mxu0 %v1932
        %1961 = vmatprep.subr.mxu0 0.0
        %1962 = vmatpush1.msra.mxu0 %v1933
        %1963 = vmatprep.subr.mxu0 0.0
        %1964 = vmatpush1.msra.mxu0 %v1934
        %1965 = vmatprep.subr.mxu0 0.0
        %1966 = vmatpush1.msra.mxu0 %v1935
        %1967 = vmatprep.subr.mxu0 0.0
        %1968 = vmatpush1.msra.mxu0 %v1936
        %1969 = vmatprep.subr.mxu0 0.0
        %1970 = vmatpush1.msra.mxu0 %v1937
        %1971 = vmatprep.subr.mxu0 0.0
        %1972 = vmatpush1.msra.mxu0 %v1938
        %1973 = vmatprep.subr.mxu0 0.0
        %1974 = vmatpush1.msra.mxu0 %v1939
        %1975 = vmatprep.subr.mxu0 0.0
        %1976 = vmatpush1.msra.mxu0 %v1940
        %1977 = vmatprep.subr.mxu0 0.0
        %1978 = vmatpush1.msra.mxu0 %v1941
        %1979 = vmatprep.subr.mxu0 0.0
        %1980 = vmatpush1.msra.mxu0 %v1942
        %1981 = vmatprep.subr.mxu0 0.0
        %1982 = vmatpush1.msra.mxu0 %v1943
        %1983 = vmatprep.subr.mxu0 0.0
        %1984 = vmatpush1.msra.mxu0 0.0
        %1985 = vmatprep.subr.mxu0 0.0
        %1986 = vmatpush1.msra.mxu0 0.0
        %1987 = vmatprep.subr.mxu0 0.0
        %1988 = vmatpush1.msra.mxu0 0.0
        %1989 = vmatprep.subr.mxu0 0.0
        %1990 = vmatpush1.msra.mxu0 0.0
        %1991 = vmatprep.subr.mxu0 0.0
        %1992 = vmatpush1.msra.mxu0 0.0
        %1993 = vmatprep.subr.mxu0 0.0
        %1994 = vmatpush1.msra.mxu0 0.0
        %1995 = vmatprep.subr.mxu0 0.0
        %1996 = vmatpush1.msra.mxu0 0.0
        %1997 = vmatprep.subr.mxu0 0.0
        %1998 = vmatpush1.msra.mxu0 0.0
        %1999 = vmatprep.subr.mxu0 0.0
        %2000 = vmatpush1.msra.mxu0 0.0
        %2001 = vmatprep.subr.mxu0 0.0
        %2002 = vmatpush1.msra.mxu0 0.0
        %2003 = vmatprep.subr.mxu0 0.0
        %2004 = vmatpush1.msra.mxu0 0.0
        %2005 = vmatprep.subr.mxu0 0.0
        %2006 = vmatpush1.msra.mxu0 0.0
        %2007 = vmatprep.subr.mxu0 0.0
        %2008 = vmatpush1.msra.mxu0 0.0
        %2009 = vmatprep.subr.mxu0 0.0
        %2010 = vmatpush1.msra.mxu0 0.0
        %2011 = vmatprep.subr.mxu0 0.0
        %2012 = vmatpush1.msra.mxu0 0.0
        %2013 = vmatprep.subr.mxu0 0.0
        %2014 = vmatpush1.msra.mxu0 0.0
        %2015 = vmatprep.mubr.f32.mxu0 0.0
        %2016 = vmatmul.mubr.f32.gmra.mrb[0].mxu0 %v1920
        %v2017 = vpop.f32.mrb[0].mxu0
        %v2018 = vadd.f32 %v1949, %v2017
        %v2019 = vpop.f32.mrb[0].mxu0
        %2020 = vmatprep.mubr.f32.mxu0 0.0
        %2021 = vmatmul.mubr.f32.gmra.mrb[0].mxu0 %v1921
        %v2022 = vpop.f32.mrb[0].mxu0
        %v2023 = vadd.f32 %v1949, %v2022
        %v2024 = vpop.f32.mrb[0].mxu0
        %2025 = vmatprep.mubr.f32.mxu0 0.0
        %2026 = vmatmul.mubr.f32.gmra.mrb[0].mxu0 %v1922
        %v2027 = vpop.f32.mrb[0].mxu0
        %v2028 = vadd.f32 %v1949, %v2027
        %v2029 = vpop.f32.mrb[0].mxu0
        %2030 = vmatprep.mubr.f32.mxu0 0.0
        %2031 = vmatmul.mubr.f32.gmra.mrb[0].mxu0 %v1923
        %v2032 = vpop.f32.mrb[0].mxu0
        %v2033 = vadd.f32 %v1949, %v2032
        %v2034 = vpop.f32.mrb[0].mxu0
        %2035 = vmatprep.mubr.f32.mxu0 0.0
        %2036 = vmatmul.mubr.f32.gmra.mrb[0].mxu0 %v1924
        %v2037 = vpop.f32.mrb[0].mxu0
        %v2038 = vadd.f32 %v1949, %v2037
        %v2039 = vpop.f32.mrb[0].mxu0
        %2040 = vmatprep.mubr.f32.mxu0 0.0
        %2041 = vmatmul.mubr.f32.gmra.mrb[0].mxu0 %v1925
        %v2042 = vpop.f32.mrb[0].mxu0
        %v2043 = vadd.f32 %v1949, %v2042
        %v2044 = vpop.f32.mrb[0].mxu0
        %2045 = vmatprep.mubr.f32.mxu0 0.0
        %2046 = vmatmul.mubr.f32.gmra.mrb[0].mxu0 %v1926
        %v2047 = vpop.f32.mrb[0].mxu0
        %v2048 = vadd.f32 %v1949, %v2047
        %v2049 = vpop.f32.mrb[0].mxu0
        %2050 = vmatprep.mubr.f32.mxu0 0.0
        %2051 = vmatmul.mubr.f32.gmra.mrb[0].mxu0 %v1927
        %v2052 = vpop.f32.mrb[0].mxu0
        %v2053 = vadd.f32 %v1949, %v2052
        %v2054 = vpop.f32.mrb[0].mxu0
        %2055 = vdwg.mxu0
        %v2056 = vld [vmem:[#allocation10] sm:$0xff]
        %v2057 = vld [vmem:[#allocation10 + $0x8] sm:$0xff]
        %v2058 = vld [vmem:[#allocation10 + $0x10] sm:$0xff]
        %v2059 = vld [vmem:[#allocation10 + $0x18] sm:$0xff]
        %v2060 = vld [vmem:[#allocation10 + $0x20] sm:$0xff]
        %v2061 = vld [vmem:[#allocation10 + $0x28] sm:$0xff]
        %v2062 = vld [vmem:[#allocation10 + $0x30] sm:$0xff]
        %v2063 = vld [vmem:[#allocation10 + $0x38] sm:$0xff]
        %v2064 = vld [vmem:[#allocation10 + $0x40] sm:$0xff]
        %v2065 = vld [vmem:[#allocation10 + $0x48] sm:$0xff]
        %v2066 = vld [vmem:[#allocation10 + $0x50] sm:$0xff]
        %v2067 = vld [vmem:[#allocation10 + $0x58] sm:$0xff]
        %v2068 = vld [vmem:[#allocation10 + $0x60] sm:$0xff]
        %v2069 = vld [vmem:[#allocation10 + $0x68] sm:$0xff]
        %v2070 = vld [vmem:[#allocation10 + $0x70] sm:$0xff]
        %v2071 = vld [vmem:[#allocation10 + $0x78] sm:$0xff]
        %v2072 = vld [vmem:[#allocation10 + $0x80] sm:$0xff]
        %v2073 = vld [vmem:[#allocation10 + $0x88] sm:$0xff]
        %v2074 = vld [vmem:[#allocation10 + $0x90] sm:$0xff]
        %v2075 = vld [vmem:[#allocation10 + $0x98] sm:$0xff]
        %v2076 = vld [vmem:[#allocation10 + $0xa0] sm:$0xff]
        %v2077 = vld [vmem:[#allocation10 + $0xa8] sm:$0xff]
        %v2078 = vld [vmem:[#allocation10 + $0xb0] sm:$0xff]
        %v2079 = vld [vmem:[#allocation10 + $0xb8] sm:$0xff]
        %v2080 = vld [vmem:[#allocation10 + $0xc0] sm:$0xff]
        %v2081 = vld [vmem:[#allocation10 + $0xc8] sm:$0xff]
        %v2082 = vld [vmem:[#allocation10 + $0xd0] sm:$0xff]
        %v2083 = vld [vmem:[#allocation10 + $0xd8] sm:$0xff]
        %v2084 = vld [vmem:[#allocation10 + $0xe0] sm:$0xff]
        %v2085 = vld [vmem:[#allocation10 + $0xe8] sm:$0xff]
        %v2086 = vld [vmem:[#allocation10 + $0xf0] sm:$0xff]
        %v2087 = vld [vmem:[#allocation10 + $0xf8] sm:$0xff]
        %2088 = vmatprep.subr.mxu0 0.0
        %2089 = vmatpush1.msra.mxu0 %v2056
        %2090 = vmatprep.subr.mxu0 0.0
        %2091 = vmatpush1.msra.mxu0 %v2057
        %2092 = vmatprep.subr.mxu0 0.0
        %2093 = vmatpush1.msra.mxu0 %v2058
        %2094 = vmatprep.subr.mxu0 0.0
        %2095 = vmatpush1.msra.mxu0 %v2059
        %2096 = vmatprep.subr.mxu0 0.0
        %2097 = vmatpush1.msra.mxu0 %v2060
        %2098 = vmatprep.subr.mxu0 0.0
        %2099 = vmatpush1.msra.mxu0 %v2061
        %2100 = vmatprep.subr.mxu0 0.0
        %2101 = vmatpush1.msra.mxu0 %v2062
        %2102 = vmatprep.subr.mxu0 0.0
        %2103 = vmatpush1.msra.mxu0 %v2063
        %2104 = vmatprep.subr.mxu0 0.0
        %2105 = vmatpush1.msra.mxu0 %v2064
        %2106 = vmatprep.subr.mxu0 0.0
        %2107 = vmatpush1.msra.mxu0 %v2065
        %2108 = vmatprep.subr.mxu0 0.0
        %2109 = vmatpush1.msra.mxu0 %v2066
        %2110 = vmatprep.subr.mxu0 0.0
        %2111 = vmatpush1.msra.mxu0 %v2067
        %2112 = vmatprep.subr.mxu0 0.0
        %2113 = vmatpush1.msra.mxu0 %v2068
        %2114 = vmatprep.subr.mxu0 0.0
        %2115 = vmatpush1.msra.mxu0 %v2069
        %2116 = vmatprep.subr.mxu0 0.0
        %2117 = vmatpush1.msra.mxu0 %v2070
        %2118 = vmatprep.subr.mxu0 0.0
        %2119 = vmatpush1.msra.mxu0 %v2071
        %2120 = vmatprep.subr.mxu0 0.0
        %2121 = vmatpush1.msra.mxu0 %v2072
        %2122 = vmatprep.subr.mxu0 0.0
        %2123 = vmatpush1.msra.mxu0 %v2073
        %2124 = vmatprep.subr.mxu0 0.0
        %2125 = vmatpush1.msra.mxu0 %v2074
        %2126 = vmatprep.subr.mxu0 0.0
        %2127 = vmatpush1.msra.mxu0 %v2075
        %2128 = vmatprep.subr.mxu0 0.0
        %2129 = vmatpush1.msra.mxu0 %v2076
        %2130 = vmatprep.subr.mxu0 0.0
        %2131 = vmatpush1.msra.mxu0 %v2077
        %2132 = vmatprep.subr.mxu0 0.0
        %2133 = vmatpush1.msra.mxu0 %v2078
        %2134 = vmatprep.subr.mxu0 0.0
        %2135 = vmatpush1.msra.mxu0 %v2079
        %2136 = vmatprep.subr.mxu0 0.0
        %2137 = vmatpush1.msra.mxu0 %v2080
        %2138 = vmatprep.subr.mxu0 0.0
        %2139 = vmatpush1.msra.mxu0 %v2081
        %2140 = vmatprep.subr.mxu0 0.0
        %2141 = vmatpush1.msra.mxu0 %v2082
        %2142 = vmatprep.subr.mxu0 0.0
        %2143 = vmatpush1.msra.mxu0 %v2083
        %2144 = vmatprep.subr.mxu0 0.0
        %2145 = vmatpush1.msra.mxu0 %v2084
        %2146 = vmatprep.subr.mxu0 0.0
        %2147 = vmatpush1.msra.mxu0 %v2085
        %2148 = vmatprep.subr.mxu0 0.0
        %2149 = vmatpush1.msra.mxu0 %v2086
        %2150 = vmatprep.subr.mxu0 0.0
        %2151 = vmatpush1.msra.mxu0 %v2087
        %2152 = vmatprep.mubr.f32.mxu0 %v1716
        %2153 = vmatmul.mubr.f32.gmra.mrb[0].mxu0 %v1714
        %v2154 = vpop.f32.mrb[0].mxu0
        %v2155 = vadd.f32 %v2018, %v2154
        %v2156 = vpop.f32.mrb[0].mxu0
        %2157 = vmatprep.mubr.f32.mxu0 %v1722
        %2158 = vmatmul.mubr.f32.gmra.mrb[0].mxu0 %v1720
        %v2159 = vpop.f32.mrb[0].mxu0
        %v2160 = vadd.f32 %v2023, %v2159
        %v2161 = vpop.f32.mrb[0].mxu0
        %2162 = vmatprep.mubr.f32.mxu0 %v1728
        %2163 = vmatmul.mubr.f32.gmra.mrb[0].mxu0 %v1726
        %v2164 = vpop.f32.mrb[0].mxu0
        %v2165 = vadd.f32 %v2028, %v2164
        %v2166 = vpop.f32.mrb[0].mxu0
        %2167 = vmatprep.mubr.f32.mxu0 %v1734
        %2168 = vmatmul.mubr.f32.gmra.mrb[0].mxu0 %v1732
        %v2169 = vpop.f32.mrb[0].mxu0
        %v2170 = vadd.f32 %v2033, %v2169
        %v2171 = vpop.f32.mrb[0].mxu0
        %2172 = vmatprep.mubr.f32.mxu0 %v1740
        %2173 = vmatmul.mubr.f32.gmra.mrb[0].mxu0 %v1738
        %v2174 = vpop.f32.mrb[0].mxu0
        %v2175 = vadd.f32 %v2038, %v2174
        %v2176 = vpop.f32.mrb[0].mxu0
        %2177 = vmatprep.mubr.f32.mxu0 %v1746
        %2178 = vmatmul.mubr.f32.gmra.mrb[0].mxu0 %v1744
        %v2179 = vpop.f32.mrb[0].mxu0
        %v2180 = vadd.f32 %v2043, %v2179
        %v2181 = vpop.f32.mrb[0].mxu0
        %2182 = vmatprep.mubr.f32.mxu0 %v1752
        %2183 = vmatmul.mubr.f32.gmra.mrb[0].mxu0 %v1750
        %v2184 = vpop.f32.mrb[0].mxu0
        %v2185 = vadd.f32 %v2048, %v2184
        %v2186 = vpop.f32.mrb[0].mxu0
        %2187 = vmatprep.mubr.f32.mxu0 %v1758
        %2188 = vmatmul.mubr.f32.gmra.mrb[0].mxu0 %v1756
        %v2189 = vpop.f32.mrb[0].mxu0
        %v2190 = vadd.f32 %v2053, %v2189
        %v2191 = vpop.f32.mrb[0].mxu0
        %2192 = vdwg.mxu0
        %v2193 = vmax.f32 %v2155, %v2165
        %v2194 = vmax.f32 %v2160, %v2170
        %v2195 = vmax.f32 %v2193, %v2194
        %v2196 = vrot.slane %v2195, 4
        %v2197 = vmax.f32 %v2195, %v2196
        %v2198 = vrot.slane %v2197, 2
        %v2199 = vmax.f32 %v2197, %v2198
        %v2200 = vrot.slane %v2199, 1
        %v2201 = vmax.f32 %v2199, %v2200
        %v2202 = vmax.f32 %v2175, %v2185
        %v2203 = vmax.f32 %v2180, %v2190
        %v2204 = vmax.f32 %v2202, %v2203
        %v2205 = vrot.slane %v2204, 4
        %v2206 = vmax.f32 %v2204, %v2205
        %v2207 = vrot.slane %v2206, 2
        %v2208 = vmax.f32 %v2206, %v2207
        %v2209 = vrot.slane %v2208, 1
        %v2210 = vmax.f32 %v2208, %v2209
        %v2211 = vmax.f32 %v2201, 0.0
        %v2212 = vmax.f32 %v2210, 0.0
        %v2213 = vld [vmem:[#allocation13] sm:$0xff]
        %v2214 = vld [vmem:[#allocation13 + $0x8] sm:$0xff]
        %v2215 = vld [vmem:[#allocation13 + $0x10] sm:$0xff]
        %v2216 = vld [vmem:[#allocation13 + $0x18] sm:$0xff]
        %v2217 = vld [vmem:[#allocation13 + $0x20] sm:$0xff]
        %v2218 = vld [vmem:[#allocation13 + $0x28] sm:$0xff]
        %v2219 = vld [vmem:[#allocation13 + $0x30] sm:$0xff]
        %v2220 = vld [vmem:[#allocation13 + $0x38] sm:$0xff]
        %v2221 = vld [vmem:[#allocation13 + $0x40] sm:$0xff]
        %v2222 = vld [vmem:[#allocation13 + $0x48] sm:$0xff]
        %v2223 = vld [vmem:[#allocation13 + $0x50] sm:$0xff]
        %v2224 = vld [vmem:[#allocation13 + $0x58] sm:$0xff]
        %v2225 = vld [vmem:[#allocation13 + $0x60] sm:$0xff]
        %v2226 = vld [vmem:[#allocation13 + $0x68] sm:$0xff]
        %v2227 = vld [vmem:[#allocation13 + $0x70] sm:$0xff]
        %v2228 = vld [vmem:[#allocation13 + $0x78] sm:$0xff]
        %v2229 = vld [vmem:[#allocation14] sm:$0x1]
        %v2231 = vlaneseq
        %v2232 = vshrl.u32 %v2231, 7
        %v2233 = vsub.s32 0, %v2232
        %v2234 = vrot.slane %v2229, %v2233
        %vm2238 = vcmask 1041409
        %v2239 = vsel %vm2238, %v2212, %v2211
        %2241 = vmatprep.subr.mxu0 0.0
        %2242 = vmatpush1.msra.mxu0 %v2213
        %2243 = vmatprep.subr.mxu0 0.0
        %2244 = vmatpush1.msra.mxu0 %v2214
        %2245 = vmatprep.subr.mxu0 0.0
        %2246 = vmatpush1.msra.mxu0 %v2215
        %2247 = vmatprep.subr.mxu0 0.0
        %2248 = vmatpush1.msra.mxu0 %v2216
        %2249 = vmatprep.subr.mxu0 0.0
        %2250 = vmatpush1.msra.mxu0 %v2217
        %2251 = vmatprep.subr.mxu0 0.0
        %2252 = vmatpush1.msra.mxu0 %v2218
        %2253 = vmatprep.subr.mxu0 0.0
        %2254 = vmatpush1.msra.mxu0 %v2219
        %2255 = vmatprep.subr.mxu0 0.0
        %2256 = vmatpush1.msra.mxu0 %v2220
        %2257 = vmatprep.subr.mxu0 0.0
        %2258 = vmatpush1.msra.mxu0 %v2221
        %2259 = vmatprep.subr.mxu0 0.0
        %2260 = vmatpush1.msra.mxu0 %v2222
        %2261 = vmatprep.subr.mxu0 0.0
        %2262 = vmatpush1.msra.mxu0 %v2223
        %2263 = vmatprep.subr.mxu0 0.0
        %2264 = vmatpush1.msra.mxu0 %v2224
        %2265 = vmatprep.subr.mxu0 0.0
        %2266 = vmatpush1.msra.mxu0 %v2225
        %2267 = vmatprep.subr.mxu0 0.0
        %2268 = vmatpush1.msra.mxu0 %v2226
        %2269 = vmatprep.subr.mxu0 0.0
        %2270 = vmatpush1.msra.mxu0 %v2227
        %2271 = vmatprep.subr.mxu0 0.0
        %2272 = vmatpush1.msra.mxu0 %v2228
        %2273 = vmatprep.subr.mxu0 0.0
        %2274 = vmatpush1.msra.mxu0 0.0
        %2275 = vmatprep.subr.mxu0 0.0
        %2276 = vmatpush1.msra.mxu0 0.0
        %2277 = vmatprep.subr.mxu0 0.0
        %2278 = vmatpush1.msra.mxu0 0.0
        %2279 = vmatprep.subr.mxu0 0.0
        %2280 = vmatpush1.msra.mxu0 0.0
        %2281 = vmatprep.subr.mxu0 0.0
        %2282 = vmatpush1.msra.mxu0 0.0
        %2283 = vmatprep.subr.mxu0 0.0
        %2284 = vmatpush1.msra.mxu0 0.0
        %2285 = vmatprep.subr.mxu0 0.0
        %2286 = vmatpush1.msra.mxu0 0.0
        %2287 = vmatprep.subr.mxu0 0.0
        %2288 = vmatpush1.msra.mxu0 0.0
        %2289 = vmatprep.subr.mxu0 0.0
        %2290 = vmatpush1.msra.mxu0 0.0
        %2291 = vmatprep.subr.mxu0 0.0
        %2292 = vmatpush1.msra.mxu0 0.0
        %2293 = vmatprep.subr.mxu0 0.0
        %2294 = vmatpush1.msra.mxu0 0.0
        %2295 = vmatprep.subr.mxu0 0.0
        %2296 = vmatpush1.msra.mxu0 0.0
        %2297 = vmatprep.subr.mxu0 0.0
        %2298 = vmatpush1.msra.mxu0 0.0
        %2299 = vmatprep.subr.mxu0 0.0
        %2300 = vmatpush1.msra.mxu0 0.0
        %2301 = vmatprep.subr.mxu0 0.0
        %2302 = vmatpush1.msra.mxu0 0.0
        %2303 = vmatprep.subr.mxu0 0.0
        %2304 = vmatpush1.msra.mxu0 0.0
        %2305 = vmatprep.mubr.f32.mxu0 0.0
        %2306 = vmatmul.mubr.f32.gmra.mrb[0].mxu0 %v2239
        %v2307 = vpop.f32.mrb[0].mxu0
        %v2308 = vadd.f32 %v2234, %v2307
        %v2309 = vpop.f32.mrb[0].mxu0
        %2310 = vdwg.mxu0
        %v2311 = vld [vmem:[#allocation20] sm:$0xff]
        %v2312 = vld [vmem:[#allocation20 + $0x8] sm:$0xff]
        %v2313 = vld [vmem:[#allocation20 + $0x10] sm:$0xff]
        %v2314 = vld [vmem:[#allocation20 + $0x18] sm:$0xff]
        %v2315 = vld [vmem:[#allocation20 + $0x20] sm:$0xff]
        %v2316 = vld [vmem:[#allocation20 + $0x28] sm:$0xff]
        %v2317 = vld [vmem:[#allocation20 + $0x30] sm:$0xff]
        %v2318 = vld [vmem:[#allocation20 + $0x38] sm:$0xff]
        %v2319 = vld [vmem:[#allocation20 + $0x40] sm:$0xff]
        %v2320 = vld [vmem:[#allocation20 + $0x48] sm:$0xff]
        %v2321 = vld [vmem:[#allocation20 + $0x50] sm:$0xff]
        %v2322 = vld [vmem:[#allocation20 + $0x58] sm:$0xff]
        %v2323 = vld [vmem:[#allocation20 + $0x60] sm:$0xff]
        %v2324 = vld [vmem:[#allocation20 + $0x68] sm:$0xff]
        %v2325 = vld [vmem:[#allocation20 + $0x70] sm:$0xff]
        %v2326 = vld [vmem:[#allocation20 + $0x78] sm:$0xff]
        %v2329 = vsel %vm2238, %v2210, %v2201
        %2331 = vmatprep.subr.mxu0 0.0
        %2332 = vmatpush1.msra.mxu0 %v2311
        %2333 = vmatprep.subr.mxu0 0.0
        %2334 = vmatpush1.msra.mxu0 %v2312
        %2335 = vmatprep.subr.mxu0 0.0
        %2336 = vmatpush1.msra.mxu0 %v2313
        %2337 = vmatprep.subr.mxu0 0.0
        %2338 = vmatpush1.msra.mxu0 %v2314
        %2339 = vmatprep.subr.mxu0 0.0
        %2340 = vmatpush1.msra.mxu0 %v2315
        %2341 = vmatprep.subr.mxu0 0.0
        %2342 = vmatpush1.msra.mxu0 %v2316
        %2343 = vmatprep.subr.mxu0 0.0
        %2344 = vmatpush1.msra.mxu0 %v2317
        %2345 = vmatprep.subr.mxu0 0.0
        %2346 = vmatpush1.msra.mxu0 %v2318
        %2347 = vmatprep.subr.mxu0 0.0
        %2348 = vmatpush1.msra.mxu0 %v2319
        %2349 = vmatprep.subr.mxu0 0.0
        %2350 = vmatpush1.msra.mxu0 %v2320
        %2351 = vmatprep.subr.mxu0 0.0
        %2352 = vmatpush1.msra.mxu0 %v2321
        %2353 = vmatprep.subr.mxu0 0.0
        %2354 = vmatpush1.msra.mxu0 %v2322
        %2355 = vmatprep.subr.mxu0 0.0
        %2356 = vmatpush1.msra.mxu0 %v2323
        %2357 = vmatprep.subr.mxu0 0.0
        %2358 = vmatpush1.msra.mxu0 %v2324
        %2359 = vmatprep.subr.mxu0 0.0
        %2360 = vmatpush1.msra.mxu0 %v2325
        %2361 = vmatprep.subr.mxu0 0.0
        %2362 = vmatpush1.msra.mxu0 %v2326
        %2363 = vmatprep.subr.mxu0 0.0
        %2364 = vmatpush1.msra.mxu0 0.0
        %2365 = vmatprep.subr.mxu0 0.0
        %2366 = vmatpush1.msra.mxu0 0.0
        %2367 = vmatprep.subr.mxu0 0.0
        %2368 = vmatpush1.msra.mxu0 0.0
        %2369 = vmatprep.subr.mxu0 0.0
        %2370 = vmatpush1.msra.mxu0 0.0
        %2371 = vmatprep.subr.mxu0 0.0
        %2372 = vmatpush1.msra.mxu0 0.0
        %2373 = vmatprep.subr.mxu0 0.0
        %2374 = vmatpush1.msra.mxu0 0.0
        %2375 = vmatprep.subr.mxu0 0.0
        %2376 = vmatpush1.msra.mxu0 0.0
        %2377 = vmatprep.subr.mxu0 0.0
        %2378 = vmatpush1.msra.mxu0 0.0
        %2379 = vmatprep.subr.mxu0 0.0
        %2380 = vmatpush1.msra.mxu0 0.0
        %2381 = vmatprep.subr.mxu0 0.0
        %2382 = vmatpush1.msra.mxu0 0.0
        %2383 = vmatprep.subr.mxu0 0.0
        %2384 = vmatpush1.msra.mxu0 0.0
        %2385 = vmatprep.subr.mxu0 0.0
        %2386 = vmatpush1.msra.mxu0 0.0
        %2387 = vmatprep.subr.mxu0 0.0
        %2388 = vmatpush1.msra.mxu0 0.0
        %2389 = vmatprep.subr.mxu0 0.0
        %2390 = vmatpush1.msra.mxu0 0.0
        %2391 = vmatprep.subr.mxu0 0.0
        %2392 = vmatpush1.msra.mxu0 0.0
        %2393 = vmatprep.subr.mxu0 0.0
        %2394 = vmatpush1.msra.mxu0 0.0
        %2395 = vmatprep.mubr.f32.mxu0 0.0
        %2396 = vmatmul.mubr.f32.gmra.mrb[0].mxu0 %v2329
        %v2397 = vpop.f32.mrb[0].mxu0
        %v2398 = vadd.f32 0.0, %v2397
        %v2399 = vpop.f32.mrb[0].mxu0
        %2400 = vdwg.mxu0
        %v2401 = vmax.f32 %v2155, 0.0
        %v2402 = vmax.f32 %v2160, 0.0
        %v2403 = vmax.f32 %v2165, 0.0
        %v2404 = vmax.f32 %v2170, 0.0
        %v2405 = vmax.f32 %v2175, 0.0
        %v2406 = vmax.f32 %v2180, 0.0
        %v2407 = vmax.f32 %v2185, 0.0
        %v2408 = vmax.f32 %v2190, 0.0
        %v2409 = vld [vmem:[#allocation11] sm:$0xff]
        %v2410 = vld [vmem:[#allocation11 + $0x8] sm:$0xff]
        %v2411 = vld [vmem:[#allocation11 + $0x10] sm:$0xff]
        %v2412 = vld [vmem:[#allocation11 + $0x18] sm:$0xff]
        %v2413 = vld [vmem:[#allocation11 + $0x20] sm:$0xff]
        %v2414 = vld [vmem:[#allocation11 + $0x28] sm:$0xff]
        %v2415 = vld [vmem:[#allocation11 + $0x30] sm:$0xff]
        %v2416 = vld [vmem:[#allocation11 + $0x38] sm:$0xff]
        %v2417 = vld [vmem:[#allocation11 + $0x40] sm:$0xff]
        %v2418 = vld [vmem:[#allocation11 + $0x48] sm:$0xff]
        %v2419 = vld [vmem:[#allocation11 + $0x50] sm:$0xff]
        %v2420 = vld [vmem:[#allocation11 + $0x58] sm:$0xff]
        %v2421 = vld [vmem:[#allocation11 + $0x60] sm:$0xff]
        %v2422 = vld [vmem:[#allocation11 + $0x68] sm:$0xff]
        %v2423 = vld [vmem:[#allocation11 + $0x70] sm:$0xff]
        %v2424 = vld [vmem:[#allocation11 + $0x78] sm:$0xff]
        %2425 = vmatprep.subr.mxu0 0.0
        %2426 = vmatpush1.msra.mxu0 %v2409
        %2427 = vmatprep.subr.mxu0 0.0
        %2428 = vmatpush1.msra.mxu0 %v2410
        %2429 = vmatprep.subr.mxu0 0.0
        %2430 = vmatpush1.msra.mxu0 %v2411
        %2431 = vmatprep.subr.mxu0 0.0
        %2432 = vmatpush1.msra.mxu0 %v2412
        %2433 = vmatprep.subr.mxu0 0.0
        %2434 = vmatpush1.msra.mxu0 %v2413
        %2435 = vmatprep.subr.mxu0 0.0
        %2436 = vmatpush1.msra.mxu0 %v2414
        %2437 = vmatprep.subr.mxu0 0.0
        %2438 = vmatpush1.msra.mxu0 %v2415
        %2439 = vmatprep.subr.mxu0 0.0
        %2440 = vmatpush1.msra.mxu0 %v2416
        %2441 = vmatprep.subr.mxu0 0.0
        %2442 = vmatpush1.msra.mxu0 %v2417
        %2443 = vmatprep.subr.mxu0 0.0
        %2444 = vmatpush1.msra.mxu0 %v2418
        %2445 = vmatprep.subr.mxu0 0.0
        %2446 = vmatpush1.msra.mxu0 %v2419
        %2447 = vmatprep.subr.mxu0 0.0
        %2448 = vmatpush1.msra.mxu0 %v2420
        %2449 = vmatprep.subr.mxu0 0.0
        %2450 = vmatpush1.msra.mxu0 %v2421
        %2451 = vmatprep.subr.mxu0 0.0
        %2452 = vmatpush1.msra.mxu0 %v2422
        %2453 = vmatprep.subr.mxu0 0.0
        %2454 = vmatpush1.msra.mxu0 %v2423
        %2455 = vmatprep.subr.mxu0 0.0
        %2456 = vmatpush1.msra.mxu0 %v2424
        %2457 = vmatprep.subr.mxu0 0.0
        %2458 = vmatpush1.msra.mxu0 0.0
        %2459 = vmatprep.subr.mxu0 0.0
        %2460 = vmatpush1.msra.mxu0 0.0
        %2461 = vmatprep.subr.mxu0 0.0
        %2462 = vmatpush1.msra.mxu0 0.0
        %2463 = vmatprep.subr.mxu0 0.0
        %2464 = vmatpush1.msra.mxu0 0.0
        %2465 = vmatprep.subr.mxu0 0.0
        %2466 = vmatpush1.msra.mxu0 0.0
        %2467 = vmatprep.subr.mxu0 0.0
        %2468 = vmatpush1.msra.mxu0 0.0
        %2469 = vmatprep.subr.mxu0 0.0
        %2470 = vmatpush1.msra.mxu0 0.0
        %2471 = vmatprep.subr.mxu0 0.0
        %2472 = vmatpush1.msra.mxu0 0.0
        %2473 = vmatprep.subr.mxu0 0.0
        %2474 = vmatpush1.msra.mxu0 0.0
        %2475 = vmatprep.subr.mxu0 0.0
        %2476 = vmatpush1.msra.mxu0 0.0
        %2477 = vmatprep.subr.mxu0 0.0
        %2478 = vmatpush1.msra.mxu0 0.0
        %2479 = vmatprep.subr.mxu0 0.0
        %2480 = vmatpush1.msra.mxu0 0.0
        %2481 = vmatprep.subr.mxu0 0.0
        %2482 = vmatpush1.msra.mxu0 0.0
        %2483 = vmatprep.subr.mxu0 0.0
        %2484 = vmatpush1.msra.mxu0 0.0
        %2485 = vmatprep.subr.mxu0 0.0
        %2486 = vmatpush1.msra.mxu0 0.0
        %2487 = vmatprep.subr.mxu0 0.0
        %2488 = vmatpush1.msra.mxu0 0.0
        %2489 = vmatprep.mubr.f32.mxu0 0.0
        %2490 = vmatmul.mubr.f32.gmra.mrb[0].mxu0 %v2401
        %v2491 = vpop.f32.mrb[0].mxu0
        %v2492 = vadd.f32 0.0, %v2491
        %v2493 = vpop.f32.mrb[0].mxu0
        %2494 = vmatprep.mubr.f32.mxu0 0.0
        %2495 = vmatmul.mubr.f32.gmra.mrb[0].mxu0 %v2402
        %v2496 = vpop.f32.mrb[0].mxu0
        %v2497 = vadd.f32 0.0, %v2496
        %v2498 = vpop.f32.mrb[0].mxu0
        %2499 = vmatprep.mubr.f32.mxu0 0.0
        %2500 = vmatmul.mubr.f32.gmra.mrb[0].mxu0 %v2403
        %v2501 = vpop.f32.mrb[0].mxu0
        %v2502 = vadd.f32 0.0, %v2501
        %v2503 = vpop.f32.mrb[0].mxu0
        %2504 = vmatprep.mubr.f32.mxu0 0.0
        %2505 = vmatmul.mubr.f32.gmra.mrb[0].mxu0 %v2404
        %v2506 = vpop.f32.mrb[0].mxu0
        %v2507 = vadd.f32 0.0, %v2506
        %v2508 = vpop.f32.mrb[0].mxu0
        %2509 = vmatprep.mubr.f32.mxu0 0.0
        %2510 = vmatmul.mubr.f32.gmra.mrb[0].mxu0 %v2405
        %v2511 = vpop.f32.mrb[0].mxu0
        %v2512 = vadd.f32 0.0, %v2511
        %v2513 = vpop.f32.mrb[0].mxu0
        %2514 = vmatprep.mubr.f32.mxu0 0.0
        %2515 = vmatmul.mubr.f32.gmra.mrb[0].mxu0 %v2406
        %v2516 = vpop.f32.mrb[0].mxu0
        %v2517 = vadd.f32 0.0, %v2516
        %v2518 = vpop.f32.mrb[0].mxu0
        %2519 = vmatprep.mubr.f32.mxu0 0.0
        %2520 = vmatmul.mubr.f32.gmra.mrb[0].mxu0 %v2407
        %v2521 = vpop.f32.mrb[0].mxu0
        %v2522 = vadd.f32 0.0, %v2521
        %v2523 = vpop.f32.mrb[0].mxu0
        %2524 = vmatprep.mubr.f32.mxu0 0.0
        %2525 = vmatmul.mubr.f32.gmra.mrb[0].mxu0 %v2408
        %v2526 = vpop.f32.mrb[0].mxu0
        %v2527 = vadd.f32 0.0, %v2526
        %v2528 = vpop.f32.mrb[0].mxu0
        %2529 = vdwg.mxu0
        %v2532 = vunpack.c.l.s4 1966171168
        %v2533 = vunpack.c.0.s8 %v2532
        %v2534 = vlaneseq
        %v2535 = vshrl.u32 %v2534, 7
        %v2536 = vsub.s32 %v2533, %v2535
        %v2537 = vrot.slane %v2308, %v2536
        %v2538 = vcombine.high %v2537, %v2537
        %v2540 = vunpack.c.l.s4 1966171168
        %v2541 = vunpack.c.0.s8 %v2540
        %v2542 = vlaneseq
        %v2543 = vshrl.u32 %v2542, 7
        %v2544 = vsub.s32 %v2541, %v2543
        %v2545 = vrot.slane %v2537, %v2544
        %v2547 = vunpack.c.l.s4 1966171168
        %v2548 = vunpack.c.0.s8 %v2547
        %v2549 = vlaneseq
        %v2550 = vshrl.u32 %v2549, 7
        %v2551 = vsub.s32 %v2548, %v2550
        %v2552 = vrot.slane %v2538, %v2551
        %v2553 = vlaneseq
        %v2554 = vshrl.u32 %v2553, 7
        %v2555 = vsub.s32 0, %v2554
        %v2556 = vrot.slane %v2545, %v2555
        %v2557 = vlaneseq
        %v2558 = vshrl.u32 %v2557, 7
        %v2559 = vsub.s32 0, %v2558
        %v2560 = vrot.slane %v2552, %v2559
        %v2563 = vadd.f32 %v2492, %v2556
        %v2564 = vadd.f32 %v2497, %v2556
        %v2565 = vadd.f32 %v2502, %v2556
        %v2566 = vadd.f32 %v2507, %v2556
        %v2567 = vadd.f32 %v2512, %v2560
        %v2568 = vadd.f32 %v2517, %v2560
        %v2569 = vadd.f32 %v2522, %v2560
        %v2570 = vadd.f32 %v2527, %v2560
        %v2571 = vmax.f32 %v2563, 0.0
        %v2572 = vmax.f32 %v2564, 0.0
        %v2573 = vmax.f32 %v2565, 0.0
        %v2574 = vmax.f32 %v2566, 0.0
        %v2575 = vmax.f32 %v2567, 0.0
        %v2576 = vmax.f32 %v2568, 0.0
        %v2577 = vmax.f32 %v2569, 0.0
        %v2578 = vmax.f32 %v2570, 0.0
        %v2579 = vld [vmem:[#allocation16] sm:$0xff]
        %v2580 = vld [vmem:[#allocation16 + $0x8] sm:$0xff]
        %v2581 = vld [vmem:[#allocation16 + $0x10] sm:$0xff]
        %v2582 = vld [vmem:[#allocation16 + $0x18] sm:$0xff]
        %v2583 = vld [vmem:[#allocation16 + $0x20] sm:$0xff]
        %v2584 = vld [vmem:[#allocation16 + $0x28] sm:$0xff]
        %v2585 = vld [vmem:[#allocation16 + $0x30] sm:$0xff]
        %v2586 = vld [vmem:[#allocation16 + $0x38] sm:$0xff]
        %v2587 = vld [vmem:[#allocation16 + $0x40] sm:$0xff]
        %v2588 = vld [vmem:[#allocation16 + $0x48] sm:$0xff]
        %v2589 = vld [vmem:[#allocation16 + $0x50] sm:$0xff]
        %v2590 = vld [vmem:[#allocation16 + $0x58] sm:$0xff]
        %v2591 = vld [vmem:[#allocation16 + $0x60] sm:$0xff]
        %v2592 = vld [vmem:[#allocation16 + $0x68] sm:$0xff]
        %v2593 = vld [vmem:[#allocation16 + $0x70] sm:$0xff]
        %v2594 = vld [vmem:[#allocation16 + $0x78] sm:$0xff]
        %v2595 = vld [vmem:[#allocation17] sm:$0x1]
        %v2597 = vlaneseq
        %v2598 = vshrl.u32 %v2597, 7
        %v2599 = vsub.s32 0, %v2598
        %v2600 = vrot.slane %v2595, %v2599
        %2602 = vmatprep.subr.mxu0 0.0
        %2603 = vmatpush1.msra.mxu0 %v2579
        %2604 = vmatprep.subr.mxu0 0.0
        %2605 = vmatpush1.msra.mxu0 %v2580
        %2606 = vmatprep.subr.mxu0 0.0
        %2607 = vmatpush1.msra.mxu0 %v2581
        %2608 = vmatprep.subr.mxu0 0.0
        %2609 = vmatpush1.msra.mxu0 %v2582
        %2610 = vmatprep.subr.mxu0 0.0
        %2611 = vmatpush1.msra.mxu0 %v2583
        %2612 = vmatprep.subr.mxu0 0.0
        %2613 = vmatpush1.msra.mxu0 %v2584
        %2614 = vmatprep.subr.mxu0 0.0
        %2615 = vmatpush1.msra.mxu0 %v2585
        %2616 = vmatprep.subr.mxu0 0.0
        %2617 = vmatpush1.msra.mxu0 %v2586
        %2618 = vmatprep.subr.mxu0 0.0
        %2619 = vmatpush1.msra.mxu0 %v2587
        %2620 = vmatprep.subr.mxu0 0.0
        %2621 = vmatpush1.msra.mxu0 %v2588
        %2622 = vmatprep.subr.mxu0 0.0
        %2623 = vmatpush1.msra.mxu0 %v2589
        %2624 = vmatprep.subr.mxu0 0.0
        %2625 = vmatpush1.msra.mxu0 %v2590
        %2626 = vmatprep.subr.mxu0 0.0
        %2627 = vmatpush1.msra.mxu0 %v2591
        %2628 = vmatprep.subr.mxu0 0.0
        %2629 = vmatpush1.msra.mxu0 %v2592
        %2630 = vmatprep.subr.mxu0 0.0
        %2631 = vmatpush1.msra.mxu0 %v2593
        %2632 = vmatprep.subr.mxu0 0.0
        %2633 = vmatpush1.msra.mxu0 %v2594
        %2634 = vmatprep.subr.mxu0 0.0
        %2635 = vmatpush1.msra.mxu0 0.0
        %2636 = vmatprep.subr.mxu0 0.0
        %2637 = vmatpush1.msra.mxu0 0.0
        %2638 = vmatprep.subr.mxu0 0.0
        %2639 = vmatpush1.msra.mxu0 0.0
        %2640 = vmatprep.subr.mxu0 0.0
        %2641 = vmatpush1.msra.mxu0 0.0
        %2642 = vmatprep.subr.mxu0 0.0
        %2643 = vmatpush1.msra.mxu0 0.0
        %2644 = vmatprep.subr.mxu0 0.0
        %2645 = vmatpush1.msra.mxu0 0.0
        %2646 = vmatprep.subr.mxu0 0.0
        %2647 = vmatpush1.msra.mxu0 0.0
        %2648 = vmatprep.subr.mxu0 0.0
        %2649 = vmatpush1.msra.mxu0 0.0
        %2650 = vmatprep.subr.mxu0 0.0
        %2651 = vmatpush1.msra.mxu0 0.0
        %2652 = vmatprep.subr.mxu0 0.0
        %2653 = vmatpush1.msra.mxu0 0.0
        %2654 = vmatprep.subr.mxu0 0.0
        %2655 = vmatpush1.msra.mxu0 0.0
        %2656 = vmatprep.subr.mxu0 0.0
        %2657 = vmatpush1.msra.mxu0 0.0
        %2658 = vmatprep.subr.mxu0 0.0
        %2659 = vmatpush1.msra.mxu0 0.0
        %2660 = vmatprep.subr.mxu0 0.0
        %2661 = vmatpush1.msra.mxu0 0.0
        %2662 = vmatprep.subr.mxu0 0.0
        %2663 = vmatpush1.msra.mxu0 0.0
        %2664 = vmatprep.subr.mxu0 0.0
        %2665 = vmatpush1.msra.mxu0 0.0
        %2666 = vmatprep.mubr.f32.mxu0 0.0
        %2667 = vmatmul.mubr.f32.gmra.mrb[0].mxu0 %v2571
        %v2668 = vpop.f32.mrb[0].mxu0
        %v2669 = vadd.f32 %v2600, %v2668
        %v2670 = vpop.f32.mrb[0].mxu0
        %2671 = vmatprep.mubr.f32.mxu0 0.0
        %2672 = vmatmul.mubr.f32.gmra.mrb[0].mxu0 %v2572
        %v2673 = vpop.f32.mrb[0].mxu0
        %v2674 = vadd.f32 %v2600, %v2673
        %v2675 = vpop.f32.mrb[0].mxu0
        %2676 = vmatprep.mubr.f32.mxu0 0.0
        %2677 = vmatmul.mubr.f32.gmra.mrb[0].mxu0 %v2573
        %v2678 = vpop.f32.mrb[0].mxu0
        %v2679 = vadd.f32 %v2600, %v2678
        %v2680 = vpop.f32.mrb[0].mxu0
        %2681 = vmatprep.mubr.f32.mxu0 0.0
        %2682 = vmatmul.mubr.f32.gmra.mrb[0].mxu0 %v2574
        %v2683 = vpop.f32.mrb[0].mxu0
        %v2684 = vadd.f32 %v2600, %v2683
        %v2685 = vpop.f32.mrb[0].mxu0
        %2686 = vmatprep.mubr.f32.mxu0 0.0
        %2687 = vmatmul.mubr.f32.gmra.mrb[0].mxu0 %v2575
        %v2688 = vpop.f32.mrb[0].mxu0
        %v2689 = vadd.f32 %v2600, %v2688
        %v2690 = vpop.f32.mrb[0].mxu0
        %2691 = vmatprep.mubr.f32.mxu0 0.0
        %2692 = vmatmul.mubr.f32.gmra.mrb[0].mxu0 %v2576
        %v2693 = vpop.f32.mrb[0].mxu0
        %v2694 = vadd.f32 %v2600, %v2693
        %v2695 = vpop.f32.mrb[0].mxu0
        %2696 = vmatprep.mubr.f32.mxu0 0.0
        %2697 = vmatmul.mubr.f32.gmra.mrb[0].mxu0 %v2577
        %v2698 = vpop.f32.mrb[0].mxu0
        %v2699 = vadd.f32 %v2600, %v2698
        %v2700 = vpop.f32.mrb[0].mxu0
        %2701 = vmatprep.mubr.f32.mxu0 0.0
        %2702 = vmatmul.mubr.f32.gmra.mrb[0].mxu0 %v2578
        %v2703 = vpop.f32.mrb[0].mxu0
        %v2704 = vadd.f32 %v2600, %v2703
        %v2705 = vpop.f32.mrb[0].mxu0
        %2706 = vdwg.mxu0
        %v2707 = vld [vmem:[#allocation19] sm:$0xff]
        %v2708 = vld [vmem:[#allocation19 + $0x8] sm:$0xff]
        %v2709 = vld [vmem:[#allocation19 + $0x10] sm:$0xff]
        %v2710 = vld [vmem:[#allocation19 + $0x18] sm:$0xff]
        %v2711 = vld [vmem:[#allocation19 + $0x20] sm:$0xff]
        %v2712 = vld [vmem:[#allocation19 + $0x28] sm:$0xff]
        %v2713 = vld [vmem:[#allocation19 + $0x30] sm:$0xff]
        %v2714 = vld [vmem:[#allocation19 + $0x38] sm:$0xff]
        %v2715 = vld [vmem:[#allocation19 + $0x40] sm:$0xff]
        %v2716 = vld [vmem:[#allocation19 + $0x48] sm:$0xff]
        %v2717 = vld [vmem:[#allocation19 + $0x50] sm:$0xff]
        %v2718 = vld [vmem:[#allocation19 + $0x58] sm:$0xff]
        %v2719 = vld [vmem:[#allocation19 + $0x60] sm:$0xff]
        %v2720 = vld [vmem:[#allocation19 + $0x68] sm:$0xff]
        %v2721 = vld [vmem:[#allocation19 + $0x70] sm:$0xff]
        %v2722 = vld [vmem:[#allocation19 + $0x78] sm:$0xff]
        %2723 = vmatprep.subr.mxu0 0.0
        %2724 = vmatpush1.msra.mxu0 %v2707
        %2725 = vmatprep.subr.mxu0 0.0
        %2726 = vmatpush1.msra.mxu0 %v2708
        %2727 = vmatprep.subr.mxu0 0.0
        %2728 = vmatpush1.msra.mxu0 %v2709
        %2729 = vmatprep.subr.mxu0 0.0
        %2730 = vmatpush1.msra.mxu0 %v2710
        %2731 = vmatprep.subr.mxu0 0.0
        %2732 = vmatpush1.msra.mxu0 %v2711
        %2733 = vmatprep.subr.mxu0 0.0
        %2734 = vmatpush1.msra.mxu0 %v2712
        %2735 = vmatprep.subr.mxu0 0.0
        %2736 = vmatpush1.msra.mxu0 %v2713
        %2737 = vmatprep.subr.mxu0 0.0
        %2738 = vmatpush1.msra.mxu0 %v2714
        %2739 = vmatprep.subr.mxu0 0.0
        %2740 = vmatpush1.msra.mxu0 %v2715
        %2741 = vmatprep.subr.mxu0 0.0
        %2742 = vmatpush1.msra.mxu0 %v2716
        %2743 = vmatprep.subr.mxu0 0.0
        %2744 = vmatpush1.msra.mxu0 %v2717
        %2745 = vmatprep.subr.mxu0 0.0
        %2746 = vmatpush1.msra.mxu0 %v2718
        %2747 = vmatprep.subr.mxu0 0.0
        %2748 = vmatpush1.msra.mxu0 %v2719
        %2749 = vmatprep.subr.mxu0 0.0
        %2750 = vmatpush1.msra.mxu0 %v2720
        %2751 = vmatprep.subr.mxu0 0.0
        %2752 = vmatpush1.msra.mxu0 %v2721
        %2753 = vmatprep.subr.mxu0 0.0
        %2754 = vmatpush1.msra.mxu0 %v2722
        %2755 = vmatprep.subr.mxu0 0.0
        %2756 = vmatpush1.msra.mxu0 0.0
        %2757 = vmatprep.subr.mxu0 0.0
        %2758 = vmatpush1.msra.mxu0 0.0
        %2759 = vmatprep.subr.mxu0 0.0
        %2760 = vmatpush1.msra.mxu0 0.0
        %2761 = vmatprep.subr.mxu0 0.0
        %2762 = vmatpush1.msra.mxu0 0.0
        %2763 = vmatprep.subr.mxu0 0.0
        %2764 = vmatpush1.msra.mxu0 0.0
        %2765 = vmatprep.subr.mxu0 0.0
        %2766 = vmatpush1.msra.mxu0 0.0
        %2767 = vmatprep.subr.mxu0 0.0
        %2768 = vmatpush1.msra.mxu0 0.0
        %2769 = vmatprep.subr.mxu0 0.0
        %2770 = vmatpush1.msra.mxu0 0.0
        %2771 = vmatprep.subr.mxu0 0.0
        %2772 = vmatpush1.msra.mxu0 0.0
        %2773 = vmatprep.subr.mxu0 0.0
        %2774 = vmatpush1.msra.mxu0 0.0
        %2775 = vmatprep.subr.mxu0 0.0
        %2776 = vmatpush1.msra.mxu0 0.0
        %2777 = vmatprep.subr.mxu0 0.0
        %2778 = vmatpush1.msra.mxu0 0.0
        %2779 = vmatprep.subr.mxu0 0.0
        %2780 = vmatpush1.msra.mxu0 0.0
        %2781 = vmatprep.subr.mxu0 0.0
        %2782 = vmatpush1.msra.mxu0 0.0
        %2783 = vmatprep.subr.mxu0 0.0
        %2784 = vmatpush1.msra.mxu0 0.0
        %2785 = vmatprep.subr.mxu0 0.0
        %2786 = vmatpush1.msra.mxu0 0.0
        %2787 = vmatprep.mubr.f32.mxu0 0.0
        %2788 = vmatmul.mubr.f32.gmra.mrb[0].mxu0 %v2155
        %v2789 = vpop.f32.mrb[0].mxu0
        %v2790 = vadd.f32 0.0, %v2789
        %v2791 = vpop.f32.mrb[0].mxu0
        %2792 = vmatprep.mubr.f32.mxu0 0.0
        %2793 = vmatmul.mubr.f32.gmra.mrb[0].mxu0 %v2160
        %v2794 = vpop.f32.mrb[0].mxu0
        %v2795 = vadd.f32 0.0, %v2794
        %v2796 = vpop.f32.mrb[0].mxu0
        %2797 = vmatprep.mubr.f32.mxu0 0.0
        %2798 = vmatmul.mubr.f32.gmra.mrb[0].mxu0 %v2165
        %v2799 = vpop.f32.mrb[0].mxu0
        %v2800 = vadd.f32 0.0, %v2799
        %v2801 = vpop.f32.mrb[0].mxu0
        %2802 = vmatprep.mubr.f32.mxu0 0.0
        %2803 = vmatmul.mubr.f32.gmra.mrb[0].mxu0 %v2170
        %v2804 = vpop.f32.mrb[0].mxu0
        %v2805 = vadd.f32 0.0, %v2804
        %v2806 = vpop.f32.mrb[0].mxu0
        %2807 = vmatprep.mubr.f32.mxu0 0.0
        %2808 = vmatmul.mubr.f32.gmra.mrb[0].mxu0 %v2175
        %v2809 = vpop.f32.mrb[0].mxu0
        %v2810 = vadd.f32 0.0, %v2809
        %v2811 = vpop.f32.mrb[0].mxu0
        %2812 = vmatprep.mubr.f32.mxu0 0.0
        %2813 = vmatmul.mubr.f32.gmra.mrb[0].mxu0 %v2180
        %v2814 = vpop.f32.mrb[0].mxu0
        %v2815 = vadd.f32 0.0, %v2814
        %v2816 = vpop.f32.mrb[0].mxu0
        %2817 = vmatprep.mubr.f32.mxu0 0.0
        %2818 = vmatmul.mubr.f32.gmra.mrb[0].mxu0 %v2185
        %v2819 = vpop.f32.mrb[0].mxu0
        %v2820 = vadd.f32 0.0, %v2819
        %v2821 = vpop.f32.mrb[0].mxu0
        %2822 = vmatprep.mubr.f32.mxu0 0.0
        %2823 = vmatmul.mubr.f32.gmra.mrb[0].mxu0 %v2190
        %v2824 = vpop.f32.mrb[0].mxu0
        %v2825 = vadd.f32 0.0, %v2824
        %v2826 = vpop.f32.mrb[0].mxu0
        %2827 = vdwg.mxu0
        %v2830 = vunpack.c.l.s4 1966171168
        %v2831 = vunpack.c.0.s8 %v2830
        %v2832 = vlaneseq
        %v2833 = vshrl.u32 %v2832, 7
        %v2834 = vsub.s32 %v2831, %v2833
        %v2835 = vrot.slane %v2398, %v2834
        %v2836 = vcombine.high %v2835, %v2835
        %v2838 = vunpack.c.l.s4 1966171168
        %v2839 = vunpack.c.0.s8 %v2838
        %v2840 = vlaneseq
        %v2841 = vshrl.u32 %v2840, 7
        %v2842 = vsub.s32 %v2839, %v2841
        %v2843 = vrot.slane %v2835, %v2842
        %v2845 = vunpack.c.l.s4 1966171168
        %v2846 = vunpack.c.0.s8 %v2845
        %v2847 = vlaneseq
        %v2848 = vshrl.u32 %v2847, 7
        %v2849 = vsub.s32 %v2846, %v2848
        %v2850 = vrot.slane %v2836, %v2849
        %v2851 = vlaneseq
        %v2852 = vshrl.u32 %v2851, 7
        %v2853 = vsub.s32 0, %v2852
        %v2854 = vrot.slane %v2843, %v2853
        %v2855 = vlaneseq
        %v2856 = vshrl.u32 %v2855, 7
        %v2857 = vsub.s32 0, %v2856
        %v2858 = vrot.slane %v2850, %v2857
        %v2861 = vadd.f32 %v2790, %v2854
        %v2862 = vadd.f32 %v2795, %v2854
        %v2863 = vadd.f32 %v2800, %v2854
        %v2864 = vadd.f32 %v2805, %v2854
        %v2865 = vadd.f32 %v2810, %v2858
        %v2866 = vadd.f32 %v2815, %v2858
        %v2867 = vadd.f32 %v2820, %v2858
        %v2868 = vadd.f32 %v2825, %v2858
        %v2869 = vadd.f32 %v2861, %v2669
        %v2870 = vadd.f32 %v2862, %v2674
        %v2871 = vadd.f32 %v2863, %v2679
        %v2872 = vadd.f32 %v2864, %v2684
        %v2873 = vadd.f32 %v2865, %v2689
        %v2874 = vadd.f32 %v2866, %v2694
        %v2875 = vadd.f32 %v2867, %v2699
        %v2876 = vadd.f32 %v2868, %v2704
        %v2877 = vmax.f32 %v2869, %v2871
        %v2878 = vmax.f32 %v2870, %v2872
        %v2879 = vmax.f32 %v2877, %v2878
        %v2880 = vrot.slane %v2879, 4
        %v2881 = vmax.f32 %v2879, %v2880
        %v2882 = vrot.slane %v2881, 2
        %v2883 = vmax.f32 %v2881, %v2882
        %v2884 = vrot.slane %v2883, 1
        %v2885 = vmax.f32 %v2883, %v2884
        %v2886 = vmax.f32 %v2873, %v2875
        %v2887 = vmax.f32 %v2874, %v2876
        %v2888 = vmax.f32 %v2886, %v2887
        %v2889 = vrot.slane %v2888, 4
        %v2890 = vmax.f32 %v2888, %v2889
        %v2891 = vrot.slane %v2890, 2
        %v2892 = vmax.f32 %v2890, %v2891
        %v2893 = vrot.slane %v2892, 1
        %v2894 = vmax.f32 %v2892, %v2893
        %v2895 = vmax.f32 %v2885, 0.0
        %v2896 = vmax.f32 %v2894, 0.0
        %v2897 = vld [vmem:[#allocation23] sm:$0xff]
        %v2898 = vld [vmem:[#allocation23 + $0x8] sm:$0xff]
        %v2899 = vld [vmem:[#allocation23 + $0x10] sm:$0xff]
        %v2900 = vld [vmem:[#allocation23 + $0x18] sm:$0xff]
        %v2901 = vld [vmem:[#allocation23 + $0x20] sm:$0xff]
        %v2902 = vld [vmem:[#allocation23 + $0x28] sm:$0xff]
        %v2903 = vld [vmem:[#allocation23 + $0x30] sm:$0xff]
        %v2904 = vld [vmem:[#allocation23 + $0x38] sm:$0xff]
        %v2905 = vld [vmem:[#allocation23 + $0x40] sm:$0xff]
        %v2906 = vld [vmem:[#allocation23 + $0x48] sm:$0xff]
        %v2907 = vld [vmem:[#allocation23 + $0x50] sm:$0xff]
        %v2908 = vld [vmem:[#allocation23 + $0x58] sm:$0xff]
        %v2909 = vld [vmem:[#allocation23 + $0x60] sm:$0xff]
        %v2910 = vld [vmem:[#allocation23 + $0x68] sm:$0xff]
        %v2911 = vld [vmem:[#allocation23 + $0x70] sm:$0xff]
        %v2912 = vld [vmem:[#allocation23 + $0x78] sm:$0xff]
        %v2913 = vld [vmem:[#allocation25] sm:$0x1]
        %v2915 = vlaneseq
        %v2916 = vshrl.u32 %v2915, 7
        %v2917 = vsub.s32 0, %v2916
        %v2918 = vrot.slane %v2913, %v2917
        %v2922 = vsel %vm2238, %v2896, %v2895
        %2924 = vmatprep.subr.mxu0 0.0
        %2925 = vmatpush1.msra.mxu0 %v2897
        %2926 = vmatprep.subr.mxu0 0.0
        %2927 = vmatpush1.msra.mxu0 %v2898
        %2928 = vmatprep.subr.mxu0 0.0
        %2929 = vmatpush1.msra.mxu0 %v2899
        %2930 = vmatprep.subr.mxu0 0.0
        %2931 = vmatpush1.msra.mxu0 %v2900
        %2932 = vmatprep.subr.mxu0 0.0
        %2933 = vmatpush1.msra.mxu0 %v2901
        %2934 = vmatprep.subr.mxu0 0.0
        %2935 = vmatpush1.msra.mxu0 %v2902
        %2936 = vmatprep.subr.mxu0 0.0
        %2937 = vmatpush1.msra.mxu0 %v2903
        %2938 = vmatprep.subr.mxu0 0.0
        %2939 = vmatpush1.msra.mxu0 %v2904
        %2940 = vmatprep.subr.mxu0 0.0
        %2941 = vmatpush1.msra.mxu0 %v2905
        %2942 = vmatprep.subr.mxu0 0.0
        %2943 = vmatpush1.msra.mxu0 %v2906
        %2944 = vmatprep.subr.mxu0 0.0
        %2945 = vmatpush1.msra.mxu0 %v2907
        %2946 = vmatprep.subr.mxu0 0.0
        %2947 = vmatpush1.msra.mxu0 %v2908
        %2948 = vmatprep.subr.mxu0 0.0
        %2949 = vmatpush1.msra.mxu0 %v2909
        %2950 = vmatprep.subr.mxu0 0.0
        %2951 = vmatpush1.msra.mxu0 %v2910
        %2952 = vmatprep.subr.mxu0 0.0
        %2953 = vmatpush1.msra.mxu0 %v2911
        %2954 = vmatprep.subr.mxu0 0.0
        %2955 = vmatpush1.msra.mxu0 %v2912
        %2956 = vmatprep.subr.mxu0 0.0
        %2957 = vmatpush1.msra.mxu0 0.0
        %2958 = vmatprep.subr.mxu0 0.0
        %2959 = vmatpush1.msra.mxu0 0.0
        %2960 = vmatprep.subr.mxu0 0.0
        %2961 = vmatpush1.msra.mxu0 0.0
        %2962 = vmatprep.subr.mxu0 0.0
        %2963 = vmatpush1.msra.mxu0 0.0
        %2964 = vmatprep.subr.mxu0 0.0
        %2965 = vmatpush1.msra.mxu0 0.0
        %2966 = vmatprep.subr.mxu0 0.0
        %2967 = vmatpush1.msra.mxu0 0.0
        %2968 = vmatprep.subr.mxu0 0.0
        %2969 = vmatpush1.msra.mxu0 0.0
        %2970 = vmatprep.subr.mxu0 0.0
        %2971 = vmatpush1.msra.mxu0 0.0
        %2972 = vmatprep.subr.mxu0 0.0
        %2973 = vmatpush1.msra.mxu0 0.0
        %2974 = vmatprep.subr.mxu0 0.0
        %2975 = vmatpush1.msra.mxu0 0.0
        %2976 = vmatprep.subr.mxu0 0.0
        %2977 = vmatpush1.msra.mxu0 0.0
        %2978 = vmatprep.subr.mxu0 0.0
        %2979 = vmatpush1.msra.mxu0 0.0
        %2980 = vmatprep.subr.mxu0 0.0
        %2981 = vmatpush1.msra.mxu0 0.0
        %2982 = vmatprep.subr.mxu0 0.0
        %2983 = vmatpush1.msra.mxu0 0.0
        %2984 = vmatprep.subr.mxu0 0.0
        %2985 = vmatpush1.msra.mxu0 0.0
        %2986 = vmatprep.subr.mxu0 0.0
        %2987 = vmatpush1.msra.mxu0 0.0
        %2988 = vmatprep.mubr.f32.mxu0 0.0
        %2989 = vmatmul.mubr.f32.gmra.mrb[0].mxu0 %v2922
        %v2990 = vpop.f32.mrb[0].mxu0
        %v2991 = vadd.f32 %v2918, %v2990
        %v2992 = vpop.f32.mrb[0].mxu0
        %2993 = vdwg.mxu0
        %v2994 = vld [vmem:[#allocation31] sm:$0xff]
        %v2995 = vld [vmem:[#allocation31 + $0x8] sm:$0xff]
        %v2996 = vld [vmem:[#allocation31 + $0x10] sm:$0xff]
        %v2997 = vld [vmem:[#allocation31 + $0x18] sm:$0xff]
        %v2998 = vld [vmem:[#allocation31 + $0x20] sm:$0xff]
        %v2999 = vld [vmem:[#allocation31 + $0x28] sm:$0xff]
        %v3000 = vld [vmem:[#allocation31 + $0x30] sm:$0xff]
        %v3001 = vld [vmem:[#allocation31 + $0x38] sm:$0xff]
        %v3002 = vld [vmem:[#allocation31 + $0x40] sm:$0xff]
        %v3003 = vld [vmem:[#allocation31 + $0x48] sm:$0xff]
        %v3004 = vld [vmem:[#allocation31 + $0x50] sm:$0xff]
        %v3005 = vld [vmem:[#allocation31 + $0x58] sm:$0xff]
        %v3006 = vld [vmem:[#allocation31 + $0x60] sm:$0xff]
        %v3007 = vld [vmem:[#allocation31 + $0x68] sm:$0xff]
        %v3008 = vld [vmem:[#allocation31 + $0x70] sm:$0xff]
        %v3009 = vld [vmem:[#allocation31 + $0x78] sm:$0xff]
        %v3012 = vsel %vm2238, %v2894, %v2885
        %3014 = vmatprep.subr.mxu0 0.0
        %3015 = vmatpush1.msra.mxu0 %v2994
        %3016 = vmatprep.subr.mxu0 0.0
        %3017 = vmatpush1.msra.mxu0 %v2995
        %3018 = vmatprep.subr.mxu0 0.0
        %3019 = vmatpush1.msra.mxu0 %v2996
        %3020 = vmatprep.subr.mxu0 0.0
        %3021 = vmatpush1.msra.mxu0 %v2997
        %3022 = vmatprep.subr.mxu0 0.0
        %3023 = vmatpush1.msra.mxu0 %v2998
        %3024 = vmatprep.subr.mxu0 0.0
        %3025 = vmatpush1.msra.mxu0 %v2999
        %3026 = vmatprep.subr.mxu0 0.0
        %3027 = vmatpush1.msra.mxu0 %v3000
        %3028 = vmatprep.subr.mxu0 0.0
        %3029 = vmatpush1.msra.mxu0 %v3001
        %3030 = vmatprep.subr.mxu0 0.0
        %3031 = vmatpush1.msra.mxu0 %v3002
        %3032 = vmatprep.subr.mxu0 0.0
        %3033 = vmatpush1.msra.mxu0 %v3003
        %3034 = vmatprep.subr.mxu0 0.0
        %3035 = vmatpush1.msra.mxu0 %v3004
        %3036 = vmatprep.subr.mxu0 0.0
        %3037 = vmatpush1.msra.mxu0 %v3005
        %3038 = vmatprep.subr.mxu0 0.0
        %3039 = vmatpush1.msra.mxu0 %v3006
        %3040 = vmatprep.subr.mxu0 0.0
        %3041 = vmatpush1.msra.mxu0 %v3007
        %3042 = vmatprep.subr.mxu0 0.0
        %3043 = vmatpush1.msra.mxu0 %v3008
        %3044 = vmatprep.subr.mxu0 0.0
        %3045 = vmatpush1.msra.mxu0 %v3009
        %3046 = vmatprep.subr.mxu0 0.0
        %3047 = vmatpush1.msra.mxu0 0.0
        %3048 = vmatprep.subr.mxu0 0.0
        %3049 = vmatpush1.msra.mxu0 0.0
        %3050 = vmatprep.subr.mxu0 0.0
        %3051 = vmatpush1.msra.mxu0 0.0
        %3052 = vmatprep.subr.mxu0 0.0
        %3053 = vmatpush1.msra.mxu0 0.0
        %3054 = vmatprep.subr.mxu0 0.0
        %3055 = vmatpush1.msra.mxu0 0.0
        %3056 = vmatprep.subr.mxu0 0.0
        %3057 = vmatpush1.msra.mxu0 0.0
        %3058 = vmatprep.subr.mxu0 0.0
        %3059 = vmatpush1.msra.mxu0 0.0
        %3060 = vmatprep.subr.mxu0 0.0
        %3061 = vmatpush1.msra.mxu0 0.0
        %3062 = vmatprep.subr.mxu0 0.0
        %3063 = vmatpush1.msra.mxu0 0.0
        %3064 = vmatprep.subr.mxu0 0.0
        %3065 = vmatpush1.msra.mxu0 0.0
        %3066 = vmatprep.subr.mxu0 0.0
        %3067 = vmatpush1.msra.mxu0 0.0
        %3068 = vmatprep.subr.mxu0 0.0
        %3069 = vmatpush1.msra.mxu0 0.0
        %3070 = vmatprep.subr.mxu0 0.0
        %3071 = vmatpush1.msra.mxu0 0.0
        %3072 = vmatprep.subr.mxu0 0.0
        %3073 = vmatpush1.msra.mxu0 0.0
        %3074 = vmatprep.subr.mxu0 0.0
        %3075 = vmatpush1.msra.mxu0 0.0
        %3076 = vmatprep.subr.mxu0 0.0
        %3077 = vmatpush1.msra.mxu0 0.0
        %3078 = vmatprep.mubr.f32.mxu0 0.0
        %3079 = vmatmul.mubr.f32.gmra.mrb[0].mxu0 %v3012
        %v3080 = vpop.f32.mrb[0].mxu0
        %v3081 = vadd.f32 0.0, %v3080
        %v3082 = vpop.f32.mrb[0].mxu0
        %3083 = vdwg.mxu0
        %v3084 = vmax.f32 %v2869, 0.0
        %v3085 = vmax.f32 %v2870, 0.0
        %v3086 = vmax.f32 %v2871, 0.0
        %v3087 = vmax.f32 %v2872, 0.0
        %v3088 = vmax.f32 %v2873, 0.0
        %v3089 = vmax.f32 %v2874, 0.0
        %v3090 = vmax.f32 %v2875, 0.0
        %v3091 = vmax.f32 %v2876, 0.0
        %v3092 = vld [vmem:[#allocation22] sm:$0xff]
        %v3093 = vld [vmem:[#allocation22 + $0x8] sm:$0xff]
        %v3094 = vld [vmem:[#allocation22 + $0x10] sm:$0xff]
        %v3095 = vld [vmem:[#allocation22 + $0x18] sm:$0xff]
        %v3096 = vld [vmem:[#allocation22 + $0x20] sm:$0xff]
        %v3097 = vld [vmem:[#allocation22 + $0x28] sm:$0xff]
        %v3098 = vld [vmem:[#allocation22 + $0x30] sm:$0xff]
        %v3099 = vld [vmem:[#allocation22 + $0x38] sm:$0xff]
        %v3100 = vld [vmem:[#allocation22 + $0x40] sm:$0xff]
        %v3101 = vld [vmem:[#allocation22 + $0x48] sm:$0xff]
        %v3102 = vld [vmem:[#allocation22 + $0x50] sm:$0xff]
        %v3103 = vld [vmem:[#allocation22 + $0x58] sm:$0xff]
        %v3104 = vld [vmem:[#allocation22 + $0x60] sm:$0xff]
        %v3105 = vld [vmem:[#allocation22 + $0x68] sm:$0xff]
        %v3106 = vld [vmem:[#allocation22 + $0x70] sm:$0xff]
        %v3107 = vld [vmem:[#allocation22 + $0x78] sm:$0xff]
        %3108 = vmatprep.subr.mxu0 0.0
        %3109 = vmatpush1.msra.mxu0 %v3092
        %3110 = vmatprep.subr.mxu0 0.0
        %3111 = vmatpush1.msra.mxu0 %v3093
        %3112 = vmatprep.subr.mxu0 0.0
        %3113 = vmatpush1.msra.mxu0 %v3094
        %3114 = vmatprep.subr.mxu0 0.0
        %3115 = vmatpush1.msra.mxu0 %v3095
        %3116 = vmatprep.subr.mxu0 0.0
        %3117 = vmatpush1.msra.mxu0 %v3096
        %3118 = vmatprep.subr.mxu0 0.0
        %3119 = vmatpush1.msra.mxu0 %v3097
        %3120 = vmatprep.subr.mxu0 0.0
        %3121 = vmatpush1.msra.mxu0 %v3098
        %3122 = vmatprep.subr.mxu0 0.0
        %3123 = vmatpush1.msra.mxu0 %v3099
        %3124 = vmatprep.subr.mxu0 0.0
        %3125 = vmatpush1.msra.mxu0 %v3100
        %3126 = vmatprep.subr.mxu0 0.0
        %3127 = vmatpush1.msra.mxu0 %v3101
        %3128 = vmatprep.subr.mxu0 0.0
        %3129 = vmatpush1.msra.mxu0 %v3102
        %3130 = vmatprep.subr.mxu0 0.0
        %3131 = vmatpush1.msra.mxu0 %v3103
        %3132 = vmatprep.subr.mxu0 0.0
        %3133 = vmatpush1.msra.mxu0 %v3104
        %3134 = vmatprep.subr.mxu0 0.0
        %3135 = vmatpush1.msra.mxu0 %v3105
        %3136 = vmatprep.subr.mxu0 0.0
        %3137 = vmatpush1.msra.mxu0 %v3106
        %3138 = vmatprep.subr.mxu0 0.0
        %3139 = vmatpush1.msra.mxu0 %v3107
        %3140 = vmatprep.subr.mxu0 0.0
        %3141 = vmatpush1.msra.mxu0 0.0
        %3142 = vmatprep.subr.mxu0 0.0
        %3143 = vmatpush1.msra.mxu0 0.0
        %3144 = vmatprep.subr.mxu0 0.0
        %3145 = vmatpush1.msra.mxu0 0.0
        %3146 = vmatprep.subr.mxu0 0.0
        %3147 = vmatpush1.msra.mxu0 0.0
        %3148 = vmatprep.subr.mxu0 0.0
        %3149 = vmatpush1.msra.mxu0 0.0
        %3150 = vmatprep.subr.mxu0 0.0
        %3151 = vmatpush1.msra.mxu0 0.0
        %3152 = vmatprep.subr.mxu0 0.0
        %3153 = vmatpush1.msra.mxu0 0.0
        %3154 = vmatprep.subr.mxu0 0.0
        %3155 = vmatpush1.msra.mxu0 0.0
        %3156 = vmatprep.subr.mxu0 0.0
        %3157 = vmatpush1.msra.mxu0 0.0
        %3158 = vmatprep.subr.mxu0 0.0
        %3159 = vmatpush1.msra.mxu0 0.0
        %3160 = vmatprep.subr.mxu0 0.0
        %3161 = vmatpush1.msra.mxu0 0.0
        %3162 = vmatprep.subr.mxu0 0.0
        %3163 = vmatpush1.msra.mxu0 0.0
        %3164 = vmatprep.subr.mxu0 0.0
        %3165 = vmatpush1.msra.mxu0 0.0
        %3166 = vmatprep.subr.mxu0 0.0
        %3167 = vmatpush1.msra.mxu0 0.0
        %3168 = vmatprep.subr.mxu0 0.0
        %3169 = vmatpush1.msra.mxu0 0.0
        %3170 = vmatprep.subr.mxu0 0.0
        %3171 = vmatpush1.msra.mxu0 0.0
        %3172 = vmatprep.mubr.f32.mxu0 0.0
        %3173 = vmatmul.mubr.f32.gmra.mrb[0].mxu0 %v3084
        %v3174 = vpop.f32.mrb[0].mxu0
        %v3175 = vadd.f32 0.0, %v3174
        %v3176 = vpop.f32.mrb[0].mxu0
        %3177 = vmatprep.mubr.f32.mxu0 0.0
        %3178 = vmatmul.mubr.f32.gmra.mrb[0].mxu0 %v3085
        %v3179 = vpop.f32.mrb[0].mxu0
        %v3180 = vadd.f32 0.0, %v3179
        %v3181 = vpop.f32.mrb[0].mxu0
        %3182 = vmatprep.mubr.f32.mxu0 0.0
        %3183 = vmatmul.mubr.f32.gmra.mrb[0].mxu0 %v3086
        %v3184 = vpop.f32.mrb[0].mxu0
        %v3185 = vadd.f32 0.0, %v3184
        %v3186 = vpop.f32.mrb[0].mxu0
        %3187 = vmatprep.mubr.f32.mxu0 0.0
        %3188 = vmatmul.mubr.f32.gmra.mrb[0].mxu0 %v3087
        %v3189 = vpop.f32.mrb[0].mxu0
        %v3190 = vadd.f32 0.0, %v3189
        %v3191 = vpop.f32.mrb[0].mxu0
        %3192 = vmatprep.mubr.f32.mxu0 0.0
        %3193 = vmatmul.mubr.f32.gmra.mrb[0].mxu0 %v3088
        %v3194 = vpop.f32.mrb[0].mxu0
        %v3195 = vadd.f32 0.0, %v3194
        %v3196 = vpop.f32.mrb[0].mxu0
        %3197 = vmatprep.mubr.f32.mxu0 0.0
        %3198 = vmatmul.mubr.f32.gmra.mrb[0].mxu0 %v3089
        %v3199 = vpop.f32.mrb[0].mxu0
        %v3200 = vadd.f32 0.0, %v3199
        %v3201 = vpop.f32.mrb[0].mxu0
        %3202 = vmatprep.mubr.f32.mxu0 0.0
        %3203 = vmatmul.mubr.f32.gmra.mrb[0].mxu0 %v3090
        %v3204 = vpop.f32.mrb[0].mxu0
        %v3205 = vadd.f32 0.0, %v3204
        %v3206 = vpop.f32.mrb[0].mxu0
        %3207 = vmatprep.mubr.f32.mxu0 0.0
        %3208 = vmatmul.mubr.f32.gmra.mrb[0].mxu0 %v3091
        %v3209 = vpop.f32.mrb[0].mxu0
        %v3210 = vadd.f32 0.0, %v3209
        %v3211 = vpop.f32.mrb[0].mxu0
        %3212 = vdwg.mxu0
        %v3215 = vunpack.c.l.s4 1966171168
        %v3216 = vunpack.c.0.s8 %v3215
        %v3217 = vlaneseq
        %v3218 = vshrl.u32 %v3217, 7
        %v3219 = vsub.s32 %v3216, %v3218
        %v3220 = vrot.slane %v2991, %v3219
        %v3221 = vcombine.high %v3220, %v3220
        %v3223 = vunpack.c.l.s4 1966171168
        %v3224 = vunpack.c.0.s8 %v3223
        %v3225 = vlaneseq
        %v3226 = vshrl.u32 %v3225, 7
        %v3227 = vsub.s32 %v3224, %v3226
        %v3228 = vrot.slane %v3220, %v3227
        %v3230 = vunpack.c.l.s4 1966171168
        %v3231 = vunpack.c.0.s8 %v3230
        %v3232 = vlaneseq
        %v3233 = vshrl.u32 %v3232, 7
        %v3234 = vsub.s32 %v3231, %v3233
        %v3235 = vrot.slane %v3221, %v3234
        %v3236 = vlaneseq
        %v3237 = vshrl.u32 %v3236, 7
        %v3238 = vsub.s32 0, %v3237
        %v3239 = vrot.slane %v3228, %v3238
        %v3240 = vlaneseq
        %v3241 = vshrl.u32 %v3240, 7
        %v3242 = vsub.s32 0, %v3241
        %v3243 = vrot.slane %v3235, %v3242
        %v3246 = vadd.f32 %v3175, %v3239
        %v3247 = vadd.f32 %v3180, %v3239
        %v3248 = vadd.f32 %v3185, %v3239
        %v3249 = vadd.f32 %v3190, %v3239
        %v3250 = vadd.f32 %v3195, %v3243
        %v3251 = vadd.f32 %v3200, %v3243
        %v3252 = vadd.f32 %v3205, %v3243
        %v3253 = vadd.f32 %v3210, %v3243
        %v3254 = vmax.f32 %v3246, 0.0
        %v3255 = vmax.f32 %v3247, 0.0
        %v3256 = vmax.f32 %v3248, 0.0
        %v3257 = vmax.f32 %v3249, 0.0
        %v3258 = vmax.f32 %v3250, 0.0
        %v3259 = vmax.f32 %v3251, 0.0
        %v3260 = vmax.f32 %v3252, 0.0
        %v3261 = vmax.f32 %v3253, 0.0
        %v3262 = vld [vmem:[#allocation26] sm:$0xff]
        %v3263 = vld [vmem:[#allocation26 + $0x8] sm:$0xff]
        %v3264 = vld [vmem:[#allocation26 + $0x10] sm:$0xff]
        %v3265 = vld [vmem:[#allocation26 + $0x18] sm:$0xff]
        %v3266 = vld [vmem:[#allocation26 + $0x20] sm:$0xff]
        %v3267 = vld [vmem:[#allocation26 + $0x28] sm:$0xff]
        %v3268 = vld [vmem:[#allocation26 + $0x30] sm:$0xff]
        %v3269 = vld [vmem:[#allocation26 + $0x38] sm:$0xff]
        %v3270 = vld [vmem:[#allocation26 + $0x40] sm:$0xff]
        %v3271 = vld [vmem:[#allocation26 + $0x48] sm:$0xff]
        %v3272 = vld [vmem:[#allocation26 + $0x50] sm:$0xff]
        %v3273 = vld [vmem:[#allocation26 + $0x58] sm:$0xff]
        %v3274 = vld [vmem:[#allocation26 + $0x60] sm:$0xff]
        %v3275 = vld [vmem:[#allocation26 + $0x68] sm:$0xff]
        %v3276 = vld [vmem:[#allocation26 + $0x70] sm:$0xff]
        %v3277 = vld [vmem:[#allocation26 + $0x78] sm:$0xff]
        %v3278 = vld [vmem:[#allocation28] sm:$0x1]
        %v3280 = vlaneseq
        %v3281 = vshrl.u32 %v3280, 7
        %v3282 = vsub.s32 0, %v3281
        %v3283 = vrot.slane %v3278, %v3282
        %3285 = vmatprep.subr.mxu0 0.0
        %3286 = vmatpush1.msra.mxu0 %v3262
        %3287 = vmatprep.subr.mxu0 0.0
        %3288 = vmatpush1.msra.mxu0 %v3263
        %3289 = vmatprep.subr.mxu0 0.0
        %3290 = vmatpush1.msra.mxu0 %v3264
        %3291 = vmatprep.subr.mxu0 0.0
        %3292 = vmatpush1.msra.mxu0 %v3265
        %3293 = vmatprep.subr.mxu0 0.0
        %3294 = vmatpush1.msra.mxu0 %v3266
        %3295 = vmatprep.subr.mxu0 0.0
        %3296 = vmatpush1.msra.mxu0 %v3267
        %3297 = vmatprep.subr.mxu0 0.0
        %3298 = vmatpush1.msra.mxu0 %v3268
        %3299 = vmatprep.subr.mxu0 0.0
        %3300 = vmatpush1.msra.mxu0 %v3269
        %3301 = vmatprep.subr.mxu0 0.0
        %3302 = vmatpush1.msra.mxu0 %v3270
        %3303 = vmatprep.subr.mxu0 0.0
        %3304 = vmatpush1.msra.mxu0 %v3271
        %3305 = vmatprep.subr.mxu0 0.0
        %3306 = vmatpush1.msra.mxu0 %v3272
        %3307 = vmatprep.subr.mxu0 0.0
        %3308 = vmatpush1.msra.mxu0 %v3273
        %3309 = vmatprep.subr.mxu0 0.0
        %3310 = vmatpush1.msra.mxu0 %v3274
        %3311 = vmatprep.subr.mxu0 0.0
        %3312 = vmatpush1.msra.mxu0 %v3275
        %3313 = vmatprep.subr.mxu0 0.0
        %3314 = vmatpush1.msra.mxu0 %v3276
        %3315 = vmatprep.subr.mxu0 0.0
        %3316 = vmatpush1.msra.mxu0 %v3277
        %3317 = vmatprep.subr.mxu0 0.0
        %3318 = vmatpush1.msra.mxu0 0.0
        %3319 = vmatprep.subr.mxu0 0.0
        %3320 = vmatpush1.msra.mxu0 0.0
        %3321 = vmatprep.subr.mxu0 0.0
        %3322 = vmatpush1.msra.mxu0 0.0
        %3323 = vmatprep.subr.mxu0 0.0
        %3324 = vmatpush1.msra.mxu0 0.0
        %3325 = vmatprep.subr.mxu0 0.0
        %3326 = vmatpush1.msra.mxu0 0.0
        %3327 = vmatprep.subr.mxu0 0.0
        %3328 = vmatpush1.msra.mxu0 0.0
        %3329 = vmatprep.subr.mxu0 0.0
        %3330 = vmatpush1.msra.mxu0 0.0
        %3331 = vmatprep.subr.mxu0 0.0
        %3332 = vmatpush1.msra.mxu0 0.0
        %3333 = vmatprep.subr.mxu0 0.0
        %3334 = vmatpush1.msra.mxu0 0.0
        %3335 = vmatprep.subr.mxu0 0.0
        %3336 = vmatpush1.msra.mxu0 0.0
        %3337 = vmatprep.subr.mxu0 0.0
        %3338 = vmatpush1.msra.mxu0 0.0
        %3339 = vmatprep.subr.mxu0 0.0
        %3340 = vmatpush1.msra.mxu0 0.0
        %3341 = vmatprep.subr.mxu0 0.0
        %3342 = vmatpush1.msra.mxu0 0.0
        %3343 = vmatprep.subr.mxu0 0.0
        %3344 = vmatpush1.msra.mxu0 0.0
        %3345 = vmatprep.subr.mxu0 0.0
        %3346 = vmatpush1.msra.mxu0 0.0
        %3347 = vmatprep.subr.mxu0 0.0
        %3348 = vmatpush1.msra.mxu0 0.0
        %3349 = vmatprep.mubr.f32.mxu0 0.0
        %3350 = vmatmul.mubr.f32.gmra.mrb[0].mxu0 %v3254
        %v3351 = vpop.f32.mrb[0].mxu0
        %v3352 = vadd.f32 %v3283, %v3351
        %v3353 = vpop.f32.mrb[0].mxu0
        %3354 = vmatprep.mubr.f32.mxu0 0.0
        %3355 = vmatmul.mubr.f32.gmra.mrb[0].mxu0 %v3255
        %v3356 = vpop.f32.mrb[0].mxu0
        %v3357 = vadd.f32 %v3283, %v3356
        %v3358 = vpop.f32.mrb[0].mxu0
        %3359 = vmatprep.mubr.f32.mxu0 0.0
        %3360 = vmatmul.mubr.f32.gmra.mrb[0].mxu0 %v3256
        %v3361 = vpop.f32.mrb[0].mxu0
        %v3362 = vadd.f32 %v3283, %v3361
        %v3363 = vpop.f32.mrb[0].mxu0
        %3364 = vmatprep.mubr.f32.mxu0 0.0
        %3365 = vmatmul.mubr.f32.gmra.mrb[0].mxu0 %v3257
        %v3366 = vpop.f32.mrb[0].mxu0
        %v3367 = vadd.f32 %v3283, %v3366
        %v3368 = vpop.f32.mrb[0].mxu0
        %3369 = vmatprep.mubr.f32.mxu0 0.0
        %3370 = vmatmul.mubr.f32.gmra.mrb[0].mxu0 %v3258
        %v3371 = vpop.f32.mrb[0].mxu0
        %v3372 = vadd.f32 %v3283, %v3371
        %v3373 = vpop.f32.mrb[0].mxu0
        %3374 = vmatprep.mubr.f32.mxu0 0.0
        %3375 = vmatmul.mubr.f32.gmra.mrb[0].mxu0 %v3259
        %v3376 = vpop.f32.mrb[0].mxu0
        %v3377 = vadd.f32 %v3283, %v3376
        %v3378 = vpop.f32.mrb[0].mxu0
        %3379 = vmatprep.mubr.f32.mxu0 0.0
        %3380 = vmatmul.mubr.f32.gmra.mrb[0].mxu0 %v3260
        %v3381 = vpop.f32.mrb[0].mxu0
        %v3382 = vadd.f32 %v3283, %v3381
        %v3383 = vpop.f32.mrb[0].mxu0
        %3384 = vmatprep.mubr.f32.mxu0 0.0
        %3385 = vmatmul.mubr.f32.gmra.mrb[0].mxu0 %v3261
        %v3386 = vpop.f32.mrb[0].mxu0
        %v3387 = vadd.f32 %v3283, %v3386
        %v3388 = vpop.f32.mrb[0].mxu0
        %3389 = vdwg.mxu0
        %v3390 = vld [vmem:[#allocation29] sm:$0xff]
        %v3391 = vld [vmem:[#allocation29 + $0x8] sm:$0xff]
        %v3392 = vld [vmem:[#allocation29 + $0x10] sm:$0xff]
        %v3393 = vld [vmem:[#allocation29 + $0x18] sm:$0xff]
        %v3394 = vld [vmem:[#allocation29 + $0x20] sm:$0xff]
        %v3395 = vld [vmem:[#allocation29 + $0x28] sm:$0xff]
        %v3396 = vld [vmem:[#allocation29 + $0x30] sm:$0xff]
        %v3397 = vld [vmem:[#allocation29 + $0x38] sm:$0xff]
        %v3398 = vld [vmem:[#allocation29 + $0x40] sm:$0xff]
        %v3399 = vld [vmem:[#allocation29 + $0x48] sm:$0xff]
        %v3400 = vld [vmem:[#allocation29 + $0x50] sm:$0xff]
        %v3401 = vld [vmem:[#allocation29 + $0x58] sm:$0xff]
        %v3402 = vld [vmem:[#allocation29 + $0x60] sm:$0xff]
        %v3403 = vld [vmem:[#allocation29 + $0x68] sm:$0xff]
        %v3404 = vld [vmem:[#allocation29 + $0x70] sm:$0xff]
        %v3405 = vld [vmem:[#allocation29 + $0x78] sm:$0xff]
        %3406 = vmatprep.subr.mxu0 0.0
        %3407 = vmatpush1.msra.mxu0 %v3390
        %3408 = vmatprep.subr.mxu0 0.0
        %3409 = vmatpush1.msra.mxu0 %v3391
        %3410 = vmatprep.subr.mxu0 0.0
        %3411 = vmatpush1.msra.mxu0 %v3392
        %3412 = vmatprep.subr.mxu0 0.0
        %3413 = vmatpush1.msra.mxu0 %v3393
        %3414 = vmatprep.subr.mxu0 0.0
        %3415 = vmatpush1.msra.mxu0 %v3394
        %3416 = vmatprep.subr.mxu0 0.0
        %3417 = vmatpush1.msra.mxu0 %v3395
        %3418 = vmatprep.subr.mxu0 0.0
        %3419 = vmatpush1.msra.mxu0 %v3396
        %3420 = vmatprep.subr.mxu0 0.0
        %3421 = vmatpush1.msra.mxu0 %v3397
        %3422 = vmatprep.subr.mxu0 0.0
        %3423 = vmatpush1.msra.mxu0 %v3398
        %3424 = vmatprep.subr.mxu0 0.0
        %3425 = vmatpush1.msra.mxu0 %v3399
        %3426 = vmatprep.subr.mxu0 0.0
        %3427 = vmatpush1.msra.mxu0 %v3400
        %3428 = vmatprep.subr.mxu0 0.0
        %3429 = vmatpush1.msra.mxu0 %v3401
        %3430 = vmatprep.subr.mxu0 0.0
        %3431 = vmatpush1.msra.mxu0 %v3402
        %3432 = vmatprep.subr.mxu0 0.0
        %3433 = vmatpush1.msra.mxu0 %v3403
        %3434 = vmatprep.subr.mxu0 0.0
        %3435 = vmatpush1.msra.mxu0 %v3404
        %3436 = vmatprep.subr.mxu0 0.0
        %3437 = vmatpush1.msra.mxu0 %v3405
        %3438 = vmatprep.subr.mxu0 0.0
        %3439 = vmatpush1.msra.mxu0 0.0
        %3440 = vmatprep.subr.mxu0 0.0
        %3441 = vmatpush1.msra.mxu0 0.0
        %3442 = vmatprep.subr.mxu0 0.0
        %3443 = vmatpush1.msra.mxu0 0.0
        %3444 = vmatprep.subr.mxu0 0.0
        %3445 = vmatpush1.msra.mxu0 0.0
        %3446 = vmatprep.subr.mxu0 0.0
        %3447 = vmatpush1.msra.mxu0 0.0
        %3448 = vmatprep.subr.mxu0 0.0
        %3449 = vmatpush1.msra.mxu0 0.0
        %3450 = vmatprep.subr.mxu0 0.0
        %3451 = vmatpush1.msra.mxu0 0.0
        %3452 = vmatprep.subr.mxu0 0.0
        %3453 = vmatpush1.msra.mxu0 0.0
        %3454 = vmatprep.subr.mxu0 0.0
        %3455 = vmatpush1.msra.mxu0 0.0
        %3456 = vmatprep.subr.mxu0 0.0
        %3457 = vmatpush1.msra.mxu0 0.0
        %3458 = vmatprep.subr.mxu0 0.0
        %3459 = vmatpush1.msra.mxu0 0.0
        %3460 = vmatprep.subr.mxu0 0.0
        %3461 = vmatpush1.msra.mxu0 0.0
        %3462 = vmatprep.subr.mxu0 0.0
        %3463 = vmatpush1.msra.mxu0 0.0
        %3464 = vmatprep.subr.mxu0 0.0
        %3465 = vmatpush1.msra.mxu0 0.0
        %3466 = vmatprep.subr.mxu0 0.0
        %3467 = vmatpush1.msra.mxu0 0.0
        %3468 = vmatprep.subr.mxu0 0.0
        %3469 = vmatpush1.msra.mxu0 0.0
        %3470 = vmatprep.mubr.f32.mxu0 0.0
        %3471 = vmatmul.mubr.f32.gmra.mrb[0].mxu0 %v2869
        %v3472 = vpop.f32.mrb[0].mxu0
        %v3473 = vadd.f32 0.0, %v3472
        %v3474 = vpop.f32.mrb[0].mxu0
        %3475 = vmatprep.mubr.f32.mxu0 0.0
        %3476 = vmatmul.mubr.f32.gmra.mrb[0].mxu0 %v2870
        %v3477 = vpop.f32.mrb[0].mxu0
        %v3478 = vadd.f32 0.0, %v3477
        %v3479 = vpop.f32.mrb[0].mxu0
        %3480 = vmatprep.mubr.f32.mxu0 0.0
        %3481 = vmatmul.mubr.f32.gmra.mrb[0].mxu0 %v2871
        %v3482 = vpop.f32.mrb[0].mxu0
        %v3483 = vadd.f32 0.0, %v3482
        %v3484 = vpop.f32.mrb[0].mxu0
        %3485 = vmatprep.mubr.f32.mxu0 0.0
        %3486 = vmatmul.mubr.f32.gmra.mrb[0].mxu0 %v2872
        %v3487 = vpop.f32.mrb[0].mxu0
        %v3488 = vadd.f32 0.0, %v3487
        %v3489 = vpop.f32.mrb[0].mxu0
        %3490 = vmatprep.mubr.f32.mxu0 0.0
        %3491 = vmatmul.mubr.f32.gmra.mrb[0].mxu0 %v2873
        %v3492 = vpop.f32.mrb[0].mxu0
        %v3493 = vadd.f32 0.0, %v3492
        %v3494 = vpop.f32.mrb[0].mxu0
        %3495 = vmatprep.mubr.f32.mxu0 0.0
        %3496 = vmatmul.mubr.f32.gmra.mrb[0].mxu0 %v2874
        %v3497 = vpop.f32.mrb[0].mxu0
        %v3498 = vadd.f32 0.0, %v3497
        %v3499 = vpop.f32.mrb[0].mxu0
        %3500 = vmatprep.mubr.f32.mxu0 0.0
        %3501 = vmatmul.mubr.f32.gmra.mrb[0].mxu0 %v2875
        %v3502 = vpop.f32.mrb[0].mxu0
        %v3503 = vadd.f32 0.0, %v3502
        %v3504 = vpop.f32.mrb[0].mxu0
        %3505 = vmatprep.mubr.f32.mxu0 0.0
        %3506 = vmatmul.mubr.f32.gmra.mrb[0].mxu0 %v2876
        %v3507 = vpop.f32.mrb[0].mxu0
        %v3508 = vadd.f32 0.0, %v3507
        %v3509 = vpop.f32.mrb[0].mxu0
        %3510 = vdwg.mxu0
        %v3513 = vunpack.c.l.s4 1966171168
        %v3514 = vunpack.c.0.s8 %v3513
        %v3515 = vlaneseq
        %v3516 = vshrl.u32 %v3515, 7
        %v3517 = vsub.s32 %v3514, %v3516
        %v3518 = vrot.slane %v3081, %v3517
        %v3519 = vcombine.high %v3518, %v3518
        %v3521 = vunpack.c.l.s4 1966171168
        %v3522 = vunpack.c.0.s8 %v3521
        %v3523 = vlaneseq
        %v3524 = vshrl.u32 %v3523, 7
        %v3525 = vsub.s32 %v3522, %v3524
        %v3526 = vrot.slane %v3518, %v3525
        %v3528 = vunpack.c.l.s4 1966171168
        %v3529 = vunpack.c.0.s8 %v3528
        %v3530 = vlaneseq
        %v3531 = vshrl.u32 %v3530, 7
        %v3532 = vsub.s32 %v3529, %v3531
        %v3533 = vrot.slane %v3519, %v3532
        %v3534 = vlaneseq
        %v3535 = vshrl.u32 %v3534, 7
        %v3536 = vsub.s32 0, %v3535
        %v3537 = vrot.slane %v3526, %v3536
        %v3538 = vlaneseq
        %v3539 = vshrl.u32 %v3538, 7
        %v3540 = vsub.s32 0, %v3539
        %v3541 = vrot.slane %v3533, %v3540
        %v3544 = vadd.f32 %v3473, %v3537
        %v3545 = vadd.f32 %v3478, %v3537
        %v3546 = vadd.f32 %v3483, %v3537
        %v3547 = vadd.f32 %v3488, %v3537
        %v3548 = vadd.f32 %v3493, %v3541
        %v3549 = vadd.f32 %v3498, %v3541
        %v3550 = vadd.f32 %v3503, %v3541
        %v3551 = vadd.f32 %v3508, %v3541
        %v3552 = vadd.f32 %v3544, %v3352
        %v3553 = vadd.f32 %v3545, %v3357
        %v3554 = vadd.f32 %v3546, %v3362
        %v3555 = vadd.f32 %v3547, %v3367
        %v3556 = vadd.f32 %v3548, %v3372
        %v3557 = vadd.f32 %v3549, %v3377
        %v3558 = vadd.f32 %v3550, %v3382
        %v3559 = vadd.f32 %v3551, %v3387
        %v3560 = vmax.f32 %v3552, %v3554
        %v3561 = vmax.f32 %v3553, %v3555
        %v3562 = vmax.f32 %v3560, %v3561
        %v3563 = vrot.slane %v3562, 4
        %v3564 = vmax.f32 %v3562, %v3563
        %v3565 = vrot.slane %v3564, 2
        %v3566 = vmax.f32 %v3564, %v3565
        %v3567 = vrot.slane %v3566, 1
        %v3568 = vmax.f32 %v3566, %v3567
        %v3569 = vmax.f32 %v3556, %v3558
        %v3570 = vmax.f32 %v3557, %v3559
        %v3571 = vmax.f32 %v3569, %v3570
        %v3572 = vrot.slane %v3571, 4
        %v3573 = vmax.f32 %v3571, %v3572
        %v3574 = vrot.slane %v3573, 2
        %v3575 = vmax.f32 %v3573, %v3574
        %v3576 = vrot.slane %v3575, 1
        %v3577 = vmax.f32 %v3575, %v3576
        %v3578 = vmax.f32 %v3568, 0.0
        %v3579 = vmax.f32 %v3577, 0.0
        %v3580 = vld [vmem:[#allocation34] sm:$0xff]
        %v3581 = vld [vmem:[#allocation34 + $0x8] sm:$0xff]
        %v3582 = vld [vmem:[#allocation34 + $0x10] sm:$0xff]
        %v3583 = vld [vmem:[#allocation34 + $0x18] sm:$0xff]
        %v3584 = vld [vmem:[#allocation34 + $0x20] sm:$0xff]
        %v3585 = vld [vmem:[#allocation34 + $0x28] sm:$0xff]
        %v3586 = vld [vmem:[#allocation34 + $0x30] sm:$0xff]
        %v3587 = vld [vmem:[#allocation34 + $0x38] sm:$0xff]
        %v3588 = vld [vmem:[#allocation34 + $0x40] sm:$0xff]
        %v3589 = vld [vmem:[#allocation34 + $0x48] sm:$0xff]
        %v3590 = vld [vmem:[#allocation34 + $0x50] sm:$0xff]
        %v3591 = vld [vmem:[#allocation34 + $0x58] sm:$0xff]
        %v3592 = vld [vmem:[#allocation34 + $0x60] sm:$0xff]
        %v3593 = vld [vmem:[#allocation34 + $0x68] sm:$0xff]
        %v3594 = vld [vmem:[#allocation34 + $0x70] sm:$0xff]
        %v3595 = vld [vmem:[#allocation34 + $0x78] sm:$0xff]
        %v3596 = vld [vmem:[#allocation35] sm:$0x1]
        %v3598 = vlaneseq
        %v3599 = vshrl.u32 %v3598, 7
        %v3600 = vsub.s32 0, %v3599
        %v3601 = vrot.slane %v3596, %v3600
        %v3605 = vsel %vm2238, %v3579, %v3578
        %3607 = vmatprep.subr.mxu0 0.0
        %3608 = vmatpush1.msra.mxu0 %v3580
        %3609 = vmatprep.subr.mxu0 0.0
        %3610 = vmatpush1.msra.mxu0 %v3581
        %3611 = vmatprep.subr.mxu0 0.0
        %3612 = vmatpush1.msra.mxu0 %v3582
        %3613 = vmatprep.subr.mxu0 0.0
        %3614 = vmatpush1.msra.mxu0 %v3583
        %3615 = vmatprep.subr.mxu0 0.0
        %3616 = vmatpush1.msra.mxu0 %v3584
        %3617 = vmatprep.subr.mxu0 0.0
        %3618 = vmatpush1.msra.mxu0 %v3585
        %3619 = vmatprep.subr.mxu0 0.0
        %3620 = vmatpush1.msra.mxu0 %v3586
        %3621 = vmatprep.subr.mxu0 0.0
        %3622 = vmatpush1.msra.mxu0 %v3587
        %3623 = vmatprep.subr.mxu0 0.0
        %3624 = vmatpush1.msra.mxu0 %v3588
        %3625 = vmatprep.subr.mxu0 0.0
        %3626 = vmatpush1.msra.mxu0 %v3589
        %3627 = vmatprep.subr.mxu0 0.0
        %3628 = vmatpush1.msra.mxu0 %v3590
        %3629 = vmatprep.subr.mxu0 0.0
        %3630 = vmatpush1.msra.mxu0 %v3591
        %3631 = vmatprep.subr.mxu0 0.0
        %3632 = vmatpush1.msra.mxu0 %v3592
        %3633 = vmatprep.subr.mxu0 0.0
        %3634 = vmatpush1.msra.mxu0 %v3593
        %3635 = vmatprep.subr.mxu0 0.0
        %3636 = vmatpush1.msra.mxu0 %v3594
        %3637 = vmatprep.subr.mxu0 0.0
        %3638 = vmatpush1.msra.mxu0 %v3595
        %3639 = vmatprep.subr.mxu0 0.0
        %3640 = vmatpush1.msra.mxu0 0.0
        %3641 = vmatprep.subr.mxu0 0.0
        %3642 = vmatpush1.msra.mxu0 0.0
        %3643 = vmatprep.subr.mxu0 0.0
        %3644 = vmatpush1.msra.mxu0 0.0
        %3645 = vmatprep.subr.mxu0 0.0
        %3646 = vmatpush1.msra.mxu0 0.0
        %3647 = vmatprep.subr.mxu0 0.0
        %3648 = vmatpush1.msra.mxu0 0.0
        %3649 = vmatprep.subr.mxu0 0.0
        %3650 = vmatpush1.msra.mxu0 0.0
        %3651 = vmatprep.subr.mxu0 0.0
        %3652 = vmatpush1.msra.mxu0 0.0
        %3653 = vmatprep.subr.mxu0 0.0
        %3654 = vmatpush1.msra.mxu0 0.0
        %3655 = vmatprep.subr.mxu0 0.0
        %3656 = vmatpush1.msra.mxu0 0.0
        %3657 = vmatprep.subr.mxu0 0.0
        %3658 = vmatpush1.msra.mxu0 0.0
        %3659 = vmatprep.subr.mxu0 0.0
        %3660 = vmatpush1.msra.mxu0 0.0
        %3661 = vmatprep.subr.mxu0 0.0
        %3662 = vmatpush1.msra.mxu0 0.0
        %3663 = vmatprep.subr.mxu0 0.0
        %3664 = vmatpush1.msra.mxu0 0.0
        %3665 = vmatprep.subr.mxu0 0.0
        %3666 = vmatpush1.msra.mxu0 0.0
        %3667 = vmatprep.subr.mxu0 0.0
        %3668 = vmatpush1.msra.mxu0 0.0
        %3669 = vmatprep.subr.mxu0 0.0
        %3670 = vmatpush1.msra.mxu0 0.0
        %3671 = vmatprep.mubr.f32.mxu0 0.0
        %3672 = vmatmul.mubr.f32.gmra.mrb[0].mxu0 %v3605
        %v3673 = vpop.f32.mrb[0].mxu0
        %v3674 = vadd.f32 %v3601, %v3673
        %v3675 = vpop.f32.mrb[0].mxu0
        %3676 = vdwg.mxu0
        %v3677 = vld [vmem:[#allocation41] sm:$0xff]
        %v3678 = vld [vmem:[#allocation41 + $0x8] sm:$0xff]
        %v3679 = vld [vmem:[#allocation41 + $0x10] sm:$0xff]
        %v3680 = vld [vmem:[#allocation41 + $0x18] sm:$0xff]
        %v3681 = vld [vmem:[#allocation41 + $0x20] sm:$0xff]
        %v3682 = vld [vmem:[#allocation41 + $0x28] sm:$0xff]
        %v3683 = vld [vmem:[#allocation41 + $0x30] sm:$0xff]
        %v3684 = vld [vmem:[#allocation41 + $0x38] sm:$0xff]
        %v3685 = vld [vmem:[#allocation41 + $0x40] sm:$0xff]
        %v3686 = vld [vmem:[#allocation41 + $0x48] sm:$0xff]
        %v3687 = vld [vmem:[#allocation41 + $0x50] sm:$0xff]
        %v3688 = vld [vmem:[#allocation41 + $0x58] sm:$0xff]
        %v3689 = vld [vmem:[#allocation41 + $0x60] sm:$0xff]
        %v3690 = vld [vmem:[#allocation41 + $0x68] sm:$0xff]
        %v3691 = vld [vmem:[#allocation41 + $0x70] sm:$0xff]
        %v3692 = vld [vmem:[#allocation41 + $0x78] sm:$0xff]
        %v3695 = vsel %vm2238, %v3577, %v3568
        %3697 = vmatprep.subr.mxu0 0.0
        %3698 = vmatpush1.msra.mxu0 %v3677
        %3699 = vmatprep.subr.mxu0 0.0
        %3700 = vmatpush1.msra.mxu0 %v3678
        %3701 = vmatprep.subr.mxu0 0.0
        %3702 = vmatpush1.msra.mxu0 %v3679
        %3703 = vmatprep.subr.mxu0 0.0
        %3704 = vmatpush1.msra.mxu0 %v3680
        %3705 = vmatprep.subr.mxu0 0.0
        %3706 = vmatpush1.msra.mxu0 %v3681
        %3707 = vmatprep.subr.mxu0 0.0
        %3708 = vmatpush1.msra.mxu0 %v3682
        %3709 = vmatprep.subr.mxu0 0.0
        %3710 = vmatpush1.msra.mxu0 %v3683
        %3711 = vmatprep.subr.mxu0 0.0
        %3712 = vmatpush1.msra.mxu0 %v3684
        %3713 = vmatprep.subr.mxu0 0.0
        %3714 = vmatpush1.msra.mxu0 %v3685
        %3715 = vmatprep.subr.mxu0 0.0
        %3716 = vmatpush1.msra.mxu0 %v3686
        %3717 = vmatprep.subr.mxu0 0.0
        %3718 = vmatpush1.msra.mxu0 %v3687
        %3719 = vmatprep.subr.mxu0 0.0
        %3720 = vmatpush1.msra.mxu0 %v3688
        %3721 = vmatprep.subr.mxu0 0.0
        %3722 = vmatpush1.msra.mxu0 %v3689
        %3723 = vmatprep.subr.mxu0 0.0
        %3724 = vmatpush1.msra.mxu0 %v3690
        %3725 = vmatprep.subr.mxu0 0.0
        %3726 = vmatpush1.msra.mxu0 %v3691
        %3727 = vmatprep.subr.mxu0 0.0
        %3728 = vmatpush1.msra.mxu0 %v3692
        %3729 = vmatprep.subr.mxu0 0.0
        %3730 = vmatpush1.msra.mxu0 0.0
        %3731 = vmatprep.subr.mxu0 0.0
        %3732 = vmatpush1.msra.mxu0 0.0
        %3733 = vmatprep.subr.mxu0 0.0
        %3734 = vmatpush1.msra.mxu0 0.0
        %3735 = vmatprep.subr.mxu0 0.0
        %3736 = vmatpush1.msra.mxu0 0.0
        %3737 = vmatprep.subr.mxu0 0.0
        %3738 = vmatpush1.msra.mxu0 0.0
        %3739 = vmatprep.subr.mxu0 0.0
        %3740 = vmatpush1.msra.mxu0 0.0
        %3741 = vmatprep.subr.mxu0 0.0
        %3742 = vmatpush1.msra.mxu0 0.0
        %3743 = vmatprep.subr.mxu0 0.0
        %3744 = vmatpush1.msra.mxu0 0.0
        %3745 = vmatprep.subr.mxu0 0.0
        %3746 = vmatpush1.msra.mxu0 0.0
        %3747 = vmatprep.subr.mxu0 0.0
        %3748 = vmatpush1.msra.mxu0 0.0
        %3749 = vmatprep.subr.mxu0 0.0
        %3750 = vmatpush1.msra.mxu0 0.0
        %3751 = vmatprep.subr.mxu0 0.0
        %3752 = vmatpush1.msra.mxu0 0.0
        %3753 = vmatprep.subr.mxu0 0.0
        %3754 = vmatpush1.msra.mxu0 0.0
        %3755 = vmatprep.subr.mxu0 0.0
        %3756 = vmatpush1.msra.mxu0 0.0
        %3757 = vmatprep.subr.mxu0 0.0
        %3758 = vmatpush1.msra.mxu0 0.0
        %3759 = vmatprep.subr.mxu0 0.0
        %3760 = vmatpush1.msra.mxu0 0.0
        %3761 = vmatprep.mubr.f32.mxu0 0.0
        %3762 = vmatmul.mubr.f32.gmra.mrb[0].mxu0 %v3695
        %v3763 = vpop.f32.mrb[0].mxu0
        %v3764 = vadd.f32 0.0, %v3763
        %v3765 = vpop.f32.mrb[0].mxu0
        %3766 = vdwg.mxu0
        %v3767 = vmax.f32 %v3552, 0.0
        %v3768 = vmax.f32 %v3553, 0.0
        %v3769 = vmax.f32 %v3554, 0.0
        %v3770 = vmax.f32 %v3555, 0.0
        %v3771 = vmax.f32 %v3556, 0.0
        %v3772 = vmax.f32 %v3557, 0.0
        %v3773 = vmax.f32 %v3558, 0.0
        %v3774 = vmax.f32 %v3559, 0.0
        %v3775 = vld [vmem:[#allocation32] sm:$0xff]
        %v3776 = vld [vmem:[#allocation32 + $0x8] sm:$0xff]
        %v3777 = vld [vmem:[#allocation32 + $0x10] sm:$0xff]
        %v3778 = vld [vmem:[#allocation32 + $0x18] sm:$0xff]
        %v3779 = vld [vmem:[#allocation32 + $0x20] sm:$0xff]
        %v3780 = vld [vmem:[#allocation32 + $0x28] sm:$0xff]
        %v3781 = vld [vmem:[#allocation32 + $0x30] sm:$0xff]
        %v3782 = vld [vmem:[#allocation32 + $0x38] sm:$0xff]
        %v3783 = vld [vmem:[#allocation32 + $0x40] sm:$0xff]
        %v3784 = vld [vmem:[#allocation32 + $0x48] sm:$0xff]
        %v3785 = vld [vmem:[#allocation32 + $0x50] sm:$0xff]
        %v3786 = vld [vmem:[#allocation32 + $0x58] sm:$0xff]
        %v3787 = vld [vmem:[#allocation32 + $0x60] sm:$0xff]
        %v3788 = vld [vmem:[#allocation32 + $0x68] sm:$0xff]
        %v3789 = vld [vmem:[#allocation32 + $0x70] sm:$0xff]
        %v3790 = vld [vmem:[#allocation32 + $0x78] sm:$0xff]
        %3791 = vmatprep.subr.mxu0 0.0
        %3792 = vmatpush1.msra.mxu0 %v3775
        %3793 = vmatprep.subr.mxu0 0.0
        %3794 = vmatpush1.msra.mxu0 %v3776
        %3795 = vmatprep.subr.mxu0 0.0
        %3796 = vmatpush1.msra.mxu0 %v3777
        %3797 = vmatprep.subr.mxu0 0.0
        %3798 = vmatpush1.msra.mxu0 %v3778
        %3799 = vmatprep.subr.mxu0 0.0
        %3800 = vmatpush1.msra.mxu0 %v3779
        %3801 = vmatprep.subr.mxu0 0.0
        %3802 = vmatpush1.msra.mxu0 %v3780
        %3803 = vmatprep.subr.mxu0 0.0
        %3804 = vmatpush1.msra.mxu0 %v3781
        %3805 = vmatprep.subr.mxu0 0.0
        %3806 = vmatpush1.msra.mxu0 %v3782
        %3807 = vmatprep.subr.mxu0 0.0
        %3808 = vmatpush1.msra.mxu0 %v3783
        %3809 = vmatprep.subr.mxu0 0.0
        %3810 = vmatpush1.msra.mxu0 %v3784
        %3811 = vmatprep.subr.mxu0 0.0
        %3812 = vmatpush1.msra.mxu0 %v3785
        %3813 = vmatprep.subr.mxu0 0.0
        %3814 = vmatpush1.msra.mxu0 %v3786
        %3815 = vmatprep.subr.mxu0 0.0
        %3816 = vmatpush1.msra.mxu0 %v3787
        %3817 = vmatprep.subr.mxu0 0.0
        %3818 = vmatpush1.msra.mxu0 %v3788
        %3819 = vmatprep.subr.mxu0 0.0
        %3820 = vmatpush1.msra.mxu0 %v3789
        %3821 = vmatprep.subr.mxu0 0.0
        %3822 = vmatpush1.msra.mxu0 %v3790
        %3823 = vmatprep.subr.mxu0 0.0
        %3824 = vmatpush1.msra.mxu0 0.0
        %3825 = vmatprep.subr.mxu0 0.0
        %3826 = vmatpush1.msra.mxu0 0.0
        %3827 = vmatprep.subr.mxu0 0.0
        %3828 = vmatpush1.msra.mxu0 0.0
        %3829 = vmatprep.subr.mxu0 0.0
        %3830 = vmatpush1.msra.mxu0 0.0
        %3831 = vmatprep.subr.mxu0 0.0
        %3832 = vmatpush1.msra.mxu0 0.0
        %3833 = vmatprep.subr.mxu0 0.0
        %3834 = vmatpush1.msra.mxu0 0.0
        %3835 = vmatprep.subr.mxu0 0.0
        %3836 = vmatpush1.msra.mxu0 0.0
        %3837 = vmatprep.subr.mxu0 0.0
        %3838 = vmatpush1.msra.mxu0 0.0
        %3839 = vmatprep.subr.mxu0 0.0
        %3840 = vmatpush1.msra.mxu0 0.0
        %3841 = vmatprep.subr.mxu0 0.0
        %3842 = vmatpush1.msra.mxu0 0.0
        %3843 = vmatprep.subr.mxu0 0.0
        %3844 = vmatpush1.msra.mxu0 0.0
        %3845 = vmatprep.subr.mxu0 0.0
        %3846 = vmatpush1.msra.mxu0 0.0
        %3847 = vmatprep.subr.mxu0 0.0
        %3848 = vmatpush1.msra.mxu0 0.0
        %3849 = vmatprep.subr.mxu0 0.0
        %3850 = vmatpush1.msra.mxu0 0.0
        %3851 = vmatprep.subr.mxu0 0.0
        %3852 = vmatpush1.msra.mxu0 0.0
        %3853 = vmatprep.subr.mxu0 0.0
        %3854 = vmatpush1.msra.mxu0 0.0
        %3855 = vmatprep.mubr.f32.mxu0 0.0
        %3856 = vmatmul.mubr.f32.gmra.mrb[0].mxu0 %v3767
        %v3857 = vpop.f32.mrb[0].mxu0
        %v3858 = vadd.f32 0.0, %v3857
        %v3859 = vpop.f32.mrb[0].mxu0
        %3860 = vmatprep.mubr.f32.mxu0 0.0
        %3861 = vmatmul.mubr.f32.gmra.mrb[0].mxu0 %v3768
        %v3862 = vpop.f32.mrb[0].mxu0
        %v3863 = vadd.f32 0.0, %v3862
        %v3864 = vpop.f32.mrb[0].mxu0
        %3865 = vmatprep.mubr.f32.mxu0 0.0
        %3866 = vmatmul.mubr.f32.gmra.mrb[0].mxu0 %v3769
        %v3867 = vpop.f32.mrb[0].mxu0
        %v3868 = vadd.f32 0.0, %v3867
        %v3869 = vpop.f32.mrb[0].mxu0
        %3870 = vmatprep.mubr.f32.mxu0 0.0
        %3871 = vmatmul.mubr.f32.gmra.mrb[0].mxu0 %v3770
        %v3872 = vpop.f32.mrb[0].mxu0
        %v3873 = vadd.f32 0.0, %v3872
        %v3874 = vpop.f32.mrb[0].mxu0
        %3875 = vmatprep.mubr.f32.mxu0 0.0
        %3876 = vmatmul.mubr.f32.gmra.mrb[0].mxu0 %v3771
        %v3877 = vpop.f32.mrb[0].mxu0
        %v3878 = vadd.f32 0.0, %v3877
        %v3879 = vpop.f32.mrb[0].mxu0
        %3880 = vmatprep.mubr.f32.mxu0 0.0
        %3881 = vmatmul.mubr.f32.gmra.mrb[0].mxu0 %v3772
        %v3882 = vpop.f32.mrb[0].mxu0
        %v3883 = vadd.f32 0.0, %v3882
        %v3884 = vpop.f32.mrb[0].mxu0
        %3885 = vmatprep.mubr.f32.mxu0 0.0
        %3886 = vmatmul.mubr.f32.gmra.mrb[0].mxu0 %v3773
        %v3887 = vpop.f32.mrb[0].mxu0
        %v3888 = vadd.f32 0.0, %v3887
        %v3889 = vpop.f32.mrb[0].mxu0
        %3890 = vmatprep.mubr.f32.mxu0 0.0
        %3891 = vmatmul.mubr.f32.gmra.mrb[0].mxu0 %v3774
        %v3892 = vpop.f32.mrb[0].mxu0
        %v3893 = vadd.f32 0.0, %v3892
        %v3894 = vpop.f32.mrb[0].mxu0
        %3895 = vdwg.mxu0
        %v3898 = vunpack.c.l.s4 1966171168
        %v3899 = vunpack.c.0.s8 %v3898
        %v3900 = vlaneseq
        %v3901 = vshrl.u32 %v3900, 7
        %v3902 = vsub.s32 %v3899, %v3901
        %v3903 = vrot.slane %v3674, %v3902
        %v3904 = vcombine.high %v3903, %v3903
        %v3906 = vunpack.c.l.s4 1966171168
        %v3907 = vunpack.c.0.s8 %v3906
        %v3908 = vlaneseq
        %v3909 = vshrl.u32 %v3908, 7
        %v3910 = vsub.s32 %v3907, %v3909
        %v3911 = vrot.slane %v3903, %v3910
        %v3913 = vunpack.c.l.s4 1966171168
        %v3914 = vunpack.c.0.s8 %v3913
        %v3915 = vlaneseq
        %v3916 = vshrl.u32 %v3915, 7
        %v3917 = vsub.s32 %v3914, %v3916
        %v3918 = vrot.slane %v3904, %v3917
        %v3919 = vlaneseq
        %v3920 = vshrl.u32 %v3919, 7
        %v3921 = vsub.s32 0, %v3920
        %v3922 = vrot.slane %v3911, %v3921
        %v3923 = vlaneseq
        %v3924 = vshrl.u32 %v3923, 7
        %v3925 = vsub.s32 0, %v3924
        %v3926 = vrot.slane %v3918, %v3925
        %v3929 = vadd.f32 %v3858, %v3922
        %v3930 = vadd.f32 %v3863, %v3922
        %v3931 = vadd.f32 %v3868, %v3922
        %v3932 = vadd.f32 %v3873, %v3922
        %v3933 = vadd.f32 %v3878, %v3926
        %v3934 = vadd.f32 %v3883, %v3926
        %v3935 = vadd.f32 %v3888, %v3926
        %v3936 = vadd.f32 %v3893, %v3926
        %v3937 = vmax.f32 %v3929, 0.0
        %v3938 = vmax.f32 %v3930, 0.0
        %v3939 = vmax.f32 %v3931, 0.0
        %v3940 = vmax.f32 %v3932, 0.0
        %v3941 = vmax.f32 %v3933, 0.0
        %v3942 = vmax.f32 %v3934, 0.0
        %v3943 = vmax.f32 %v3935, 0.0
        %v3944 = vmax.f32 %v3936, 0.0
        %v3945 = vld [vmem:[#allocation37] sm:$0xff]
        %v3946 = vld [vmem:[#allocation37 + $0x8] sm:$0xff]
        %v3947 = vld [vmem:[#allocation37 + $0x10] sm:$0xff]
        %v3948 = vld [vmem:[#allocation37 + $0x18] sm:$0xff]
        %v3949 = vld [vmem:[#allocation37 + $0x20] sm:$0xff]
        %v3950 = vld [vmem:[#allocation37 + $0x28] sm:$0xff]
        %v3951 = vld [vmem:[#allocation37 + $0x30] sm:$0xff]
        %v3952 = vld [vmem:[#allocation37 + $0x38] sm:$0xff]
        %v3953 = vld [vmem:[#allocation37 + $0x40] sm:$0xff]
        %v3954 = vld [vmem:[#allocation37 + $0x48] sm:$0xff]
        %v3955 = vld [vmem:[#allocation37 + $0x50] sm:$0xff]
        %v3956 = vld [vmem:[#allocation37 + $0x58] sm:$0xff]
        %v3957 = vld [vmem:[#allocation37 + $0x60] sm:$0xff]
        %v3958 = vld [vmem:[#allocation37 + $0x68] sm:$0xff]
        %v3959 = vld [vmem:[#allocation37 + $0x70] sm:$0xff]
        %v3960 = vld [vmem:[#allocation37 + $0x78] sm:$0xff]
        %v3961 = vld [vmem:[#allocation38] sm:$0x1]
        %v3963 = vlaneseq
        %v3964 = vshrl.u32 %v3963, 7
        %v3965 = vsub.s32 0, %v3964
        %v3966 = vrot.slane %v3961, %v3965
        %3968 = vmatprep.subr.mxu0 0.0
        %3969 = vmatpush1.msra.mxu0 %v3945
        %3970 = vmatprep.subr.mxu0 0.0
        %3971 = vmatpush1.msra.mxu0 %v3946
        %3972 = vmatprep.subr.mxu0 0.0
        %3973 = vmatpush1.msra.mxu0 %v3947
        %3974 = vmatprep.subr.mxu0 0.0
        %3975 = vmatpush1.msra.mxu0 %v3948
        %3976 = vmatprep.subr.mxu0 0.0
        %3977 = vmatpush1.msra.mxu0 %v3949
        %3978 = vmatprep.subr.mxu0 0.0
        %3979 = vmatpush1.msra.mxu0 %v3950
        %3980 = vmatprep.subr.mxu0 0.0
        %3981 = vmatpush1.msra.mxu0 %v3951
        %3982 = vmatprep.subr.mxu0 0.0
        %3983 = vmatpush1.msra.mxu0 %v3952
        %3984 = vmatprep.subr.mxu0 0.0
        %3985 = vmatpush1.msra.mxu0 %v3953
        %3986 = vmatprep.subr.mxu0 0.0
        %3987 = vmatpush1.msra.mxu0 %v3954
        %3988 = vmatprep.subr.mxu0 0.0
        %3989 = vmatpush1.msra.mxu0 %v3955
        %3990 = vmatprep.subr.mxu0 0.0
        %3991 = vmatpush1.msra.mxu0 %v3956
        %3992 = vmatprep.subr.mxu0 0.0
        %3993 = vmatpush1.msra.mxu0 %v3957
        %3994 = vmatprep.subr.mxu0 0.0
        %3995 = vmatpush1.msra.mxu0 %v3958
        %3996 = vmatprep.subr.mxu0 0.0
        %3997 = vmatpush1.msra.mxu0 %v3959
        %3998 = vmatprep.subr.mxu0 0.0
        %3999 = vmatpush1.msra.mxu0 %v3960
        %4000 = vmatprep.subr.mxu0 0.0
        %4001 = vmatpush1.msra.mxu0 0.0
        %4002 = vmatprep.subr.mxu0 0.0
        %4003 = vmatpush1.msra.mxu0 0.0
        %4004 = vmatprep.subr.mxu0 0.0
        %4005 = vmatpush1.msra.mxu0 0.0
        %4006 = vmatprep.subr.mxu0 0.0
        %4007 = vmatpush1.msra.mxu0 0.0
        %4008 = vmatprep.subr.mxu0 0.0
        %4009 = vmatpush1.msra.mxu0 0.0
        %4010 = vmatprep.subr.mxu0 0.0
        %4011 = vmatpush1.msra.mxu0 0.0
        %4012 = vmatprep.subr.mxu0 0.0
        %4013 = vmatpush1.msra.mxu0 0.0
        %4014 = vmatprep.subr.mxu0 0.0
        %4015 = vmatpush1.msra.mxu0 0.0
        %4016 = vmatprep.subr.mxu0 0.0
        %4017 = vmatpush1.msra.mxu0 0.0
        %4018 = vmatprep.subr.mxu0 0.0
        %4019 = vmatpush1.msra.mxu0 0.0
        %4020 = vmatprep.subr.mxu0 0.0
        %4021 = vmatpush1.msra.mxu0 0.0
        %4022 = vmatprep.subr.mxu0 0.0
        %4023 = vmatpush1.msra.mxu0 0.0
        %4024 = vmatprep.subr.mxu0 0.0
        %4025 = vmatpush1.msra.mxu0 0.0
        %4026 = vmatprep.subr.mxu0 0.0
        %4027 = vmatpush1.msra.mxu0 0.0
        %4028 = vmatprep.subr.mxu0 0.0
        %4029 = vmatpush1.msra.mxu0 0.0
        %4030 = vmatprep.subr.mxu0 0.0
        %4031 = vmatpush1.msra.mxu0 0.0
        %4032 = vmatprep.mubr.f32.mxu0 0.0
        %4033 = vmatmul.mubr.f32.gmra.mrb[0].mxu0 %v3937
        %v4034 = vpop.f32.mrb[0].mxu0
        %v4035 = vadd.f32 %v3966, %v4034
        %v4036 = vpop.f32.mrb[0].mxu0
        %4037 = vmatprep.mubr.f32.mxu0 0.0
        %4038 = vmatmul.mubr.f32.gmra.mrb[0].mxu0 %v3938
        %v4039 = vpop.f32.mrb[0].mxu0
        %v4040 = vadd.f32 %v3966, %v4039
        %v4041 = vpop.f32.mrb[0].mxu0
        %4042 = vmatprep.mubr.f32.mxu0 0.0
        %4043 = vmatmul.mubr.f32.gmra.mrb[0].mxu0 %v3939
        %v4044 = vpop.f32.mrb[0].mxu0
        %v4045 = vadd.f32 %v3966, %v4044
        %v4046 = vpop.f32.mrb[0].mxu0
        %4047 = vmatprep.mubr.f32.mxu0 0.0
        %4048 = vmatmul.mubr.f32.gmra.mrb[0].mxu0 %v3940
        %v4049 = vpop.f32.mrb[0].mxu0
        %v4050 = vadd.f32 %v3966, %v4049
        %v4051 = vpop.f32.mrb[0].mxu0
        %4052 = vmatprep.mubr.f32.mxu0 0.0
        %4053 = vmatmul.mubr.f32.gmra.mrb[0].mxu0 %v3941
        %v4054 = vpop.f32.mrb[0].mxu0
        %v4055 = vadd.f32 %v3966, %v4054
        %v4056 = vpop.f32.mrb[0].mxu0
        %4057 = vmatprep.mubr.f32.mxu0 0.0
        %4058 = vmatmul.mubr.f32.gmra.mrb[0].mxu0 %v3942
        %v4059 = vpop.f32.mrb[0].mxu0
        %v4060 = vadd.f32 %v3966, %v4059
        %v4061 = vpop.f32.mrb[0].mxu0
        %4062 = vmatprep.mubr.f32.mxu0 0.0
        %4063 = vmatmul.mubr.f32.gmra.mrb[0].mxu0 %v3943
        %v4064 = vpop.f32.mrb[0].mxu0
        %v4065 = vadd.f32 %v3966, %v4064
        %v4066 = vpop.f32.mrb[0].mxu0
        %4067 = vmatprep.mubr.f32.mxu0 0.0
        %4068 = vmatmul.mubr.f32.gmra.mrb[0].mxu0 %v3944
        %v4069 = vpop.f32.mrb[0].mxu0
        %v4070 = vadd.f32 %v3966, %v4069
        %v4071 = vpop.f32.mrb[0].mxu0
        %4072 = vdwg.mxu0
        %v4073 = vld [vmem:[#allocation40] sm:$0xff]
        %v4074 = vld [vmem:[#allocation40 + $0x8] sm:$0xff]
        %v4075 = vld [vmem:[#allocation40 + $0x10] sm:$0xff]
        %v4076 = vld [vmem:[#allocation40 + $0x18] sm:$0xff]
        %v4077 = vld [vmem:[#allocation40 + $0x20] sm:$0xff]
        %v4078 = vld [vmem:[#allocation40 + $0x28] sm:$0xff]
        %v4079 = vld [vmem:[#allocation40 + $0x30] sm:$0xff]
        %v4080 = vld [vmem:[#allocation40 + $0x38] sm:$0xff]
        %v4081 = vld [vmem:[#allocation40 + $0x40] sm:$0xff]
        %v4082 = vld [vmem:[#allocation40 + $0x48] sm:$0xff]
        %v4083 = vld [vmem:[#allocation40 + $0x50] sm:$0xff]
        %v4084 = vld [vmem:[#allocation40 + $0x58] sm:$0xff]
        %v4085 = vld [vmem:[#allocation40 + $0x60] sm:$0xff]
        %v4086 = vld [vmem:[#allocation40 + $0x68] sm:$0xff]
        %v4087 = vld [vmem:[#allocation40 + $0x70] sm:$0xff]
        %v4088 = vld [vmem:[#allocation40 + $0x78] sm:$0xff]
        %4089 = vmatprep.subr.mxu0 0.0
        %4090 = vmatpush1.msra.mxu0 %v4073
        %4091 = vmatprep.subr.mxu0 0.0
        %4092 = vmatpush1.msra.mxu0 %v4074
        %4093 = vmatprep.subr.mxu0 0.0
        %4094 = vmatpush1.msra.mxu0 %v4075
        %4095 = vmatprep.subr.mxu0 0.0
        %4096 = vmatpush1.msra.mxu0 %v4076
        %4097 = vmatprep.subr.mxu0 0.0
        %4098 = vmatpush1.msra.mxu0 %v4077
        %4099 = vmatprep.subr.mxu0 0.0
        %4100 = vmatpush1.msra.mxu0 %v4078
        %4101 = vmatprep.subr.mxu0 0.0
        %4102 = vmatpush1.msra.mxu0 %v4079
        %4103 = vmatprep.subr.mxu0 0.0
        %4104 = vmatpush1.msra.mxu0 %v4080
        %4105 = vmatprep.subr.mxu0 0.0
        %4106 = vmatpush1.msra.mxu0 %v4081
        %4107 = vmatprep.subr.mxu0 0.0
        %4108 = vmatpush1.msra.mxu0 %v4082
        %4109 = vmatprep.subr.mxu0 0.0
        %4110 = vmatpush1.msra.mxu0 %v4083
        %4111 = vmatprep.subr.mxu0 0.0
        %4112 = vmatpush1.msra.mxu0 %v4084
        %4113 = vmatprep.subr.mxu0 0.0
        %4114 = vmatpush1.msra.mxu0 %v4085
        %4115 = vmatprep.subr.mxu0 0.0
        %4116 = vmatpush1.msra.mxu0 %v4086
        %4117 = vmatprep.subr.mxu0 0.0
        %4118 = vmatpush1.msra.mxu0 %v4087
        %4119 = vmatprep.subr.mxu0 0.0
        %4120 = vmatpush1.msra.mxu0 %v4088
        %4121 = vmatprep.subr.mxu0 0.0
        %4122 = vmatpush1.msra.mxu0 0.0
        %4123 = vmatprep.subr.mxu0 0.0
        %4124 = vmatpush1.msra.mxu0 0.0
        %4125 = vmatprep.subr.mxu0 0.0
        %4126 = vmatpush1.msra.mxu0 0.0
        %4127 = vmatprep.subr.mxu0 0.0
        %4128 = vmatpush1.msra.mxu0 0.0
        %4129 = vmatprep.subr.mxu0 0.0
        %4130 = vmatpush1.msra.mxu0 0.0
        %4131 = vmatprep.subr.mxu0 0.0
        %4132 = vmatpush1.msra.mxu0 0.0
        %4133 = vmatprep.subr.mxu0 0.0
        %4134 = vmatpush1.msra.mxu0 0.0
        %4135 = vmatprep.subr.mxu0 0.0
        %4136 = vmatpush1.msra.mxu0 0.0
        %4137 = vmatprep.subr.mxu0 0.0
        %4138 = vmatpush1.msra.mxu0 0.0
        %4139 = vmatprep.subr.mxu0 0.0
        %4140 = vmatpush1.msra.mxu0 0.0
        %4141 = vmatprep.subr.mxu0 0.0
        %4142 = vmatpush1.msra.mxu0 0.0
        %4143 = vmatprep.subr.mxu0 0.0
        %4144 = vmatpush1.msra.mxu0 0.0
        %4145 = vmatprep.subr.mxu0 0.0
        %4146 = vmatpush1.msra.mxu0 0.0
        %4147 = vmatprep.subr.mxu0 0.0
        %4148 = vmatpush1.msra.mxu0 0.0
        %4149 = vmatprep.subr.mxu0 0.0
        %4150 = vmatpush1.msra.mxu0 0.0
        %4151 = vmatprep.subr.mxu0 0.0
        %4152 = vmatpush1.msra.mxu0 0.0
        %4153 = vmatprep.mubr.f32.mxu0 0.0
        %4154 = vmatmul.mubr.f32.gmra.mrb[0].mxu0 %v3552
        %v4155 = vpop.f32.mrb[0].mxu0
        %v4156 = vadd.f32 0.0, %v4155
        %v4157 = vpop.f32.mrb[0].mxu0
        %4158 = vmatprep.mubr.f32.mxu0 0.0
        %4159 = vmatmul.mubr.f32.gmra.mrb[0].mxu0 %v3553
        %v4160 = vpop.f32.mrb[0].mxu0
        %v4161 = vadd.f32 0.0, %v4160
        %v4162 = vpop.f32.mrb[0].mxu0
        %4163 = vmatprep.mubr.f32.mxu0 0.0
        %4164 = vmatmul.mubr.f32.gmra.mrb[0].mxu0 %v3554
        %v4165 = vpop.f32.mrb[0].mxu0
        %v4166 = vadd.f32 0.0, %v4165
        %v4167 = vpop.f32.mrb[0].mxu0
        %4168 = vmatprep.mubr.f32.mxu0 0.0
        %4169 = vmatmul.mubr.f32.gmra.mrb[0].mxu0 %v3555
        %v4170 = vpop.f32.mrb[0].mxu0
        %v4171 = vadd.f32 0.0, %v4170
        %v4172 = vpop.f32.mrb[0].mxu0
        %4173 = vmatprep.mubr.f32.mxu0 0.0
        %4174 = vmatmul.mubr.f32.gmra.mrb[0].mxu0 %v3556
        %v4175 = vpop.f32.mrb[0].mxu0
        %v4176 = vadd.f32 0.0, %v4175
        %v4177 = vpop.f32.mrb[0].mxu0
        %4178 = vmatprep.mubr.f32.mxu0 0.0
        %4179 = vmatmul.mubr.f32.gmra.mrb[0].mxu0 %v3557
        %v4180 = vpop.f32.mrb[0].mxu0
        %v4181 = vadd.f32 0.0, %v4180
        %v4182 = vpop.f32.mrb[0].mxu0
        %4183 = vmatprep.mubr.f32.mxu0 0.0
        %4184 = vmatmul.mubr.f32.gmra.mrb[0].mxu0 %v3558
        %v4185 = vpop.f32.mrb[0].mxu0
        %v4186 = vadd.f32 0.0, %v4185
        %v4187 = vpop.f32.mrb[0].mxu0
        %4188 = vmatprep.mubr.f32.mxu0 0.0
        %4189 = vmatmul.mubr.f32.gmra.mrb[0].mxu0 %v3559
        %v4190 = vpop.f32.mrb[0].mxu0
        %v4191 = vadd.f32 0.0, %v4190
        %v4192 = vpop.f32.mrb[0].mxu0
        %4193 = vdwg.mxu0
        %v4196 = vunpack.c.l.s4 1966171168
        %v4197 = vunpack.c.0.s8 %v4196
        %v4198 = vlaneseq
        %v4199 = vshrl.u32 %v4198, 7
        %v4200 = vsub.s32 %v4197, %v4199
        %v4201 = vrot.slane %v3764, %v4200
        %v4202 = vcombine.high %v4201, %v4201
        %v4204 = vunpack.c.l.s4 1966171168
        %v4205 = vunpack.c.0.s8 %v4204
        %v4206 = vlaneseq
        %v4207 = vshrl.u32 %v4206, 7
        %v4208 = vsub.s32 %v4205, %v4207
        %v4209 = vrot.slane %v4201, %v4208
        %v4211 = vunpack.c.l.s4 1966171168
        %v4212 = vunpack.c.0.s8 %v4211
        %v4213 = vlaneseq
        %v4214 = vshrl.u32 %v4213, 7
        %v4215 = vsub.s32 %v4212, %v4214
        %v4216 = vrot.slane %v4202, %v4215
        %v4217 = vlaneseq
        %v4218 = vshrl.u32 %v4217, 7
        %v4219 = vsub.s32 0, %v4218
        %v4220 = vrot.slane %v4209, %v4219
        %v4221 = vlaneseq
        %v4222 = vshrl.u32 %v4221, 7
        %v4223 = vsub.s32 0, %v4222
        %v4224 = vrot.slane %v4216, %v4223
        %v4227 = vadd.f32 %v4156, %v4220
        %v4228 = vadd.f32 %v4161, %v4220
        %v4229 = vadd.f32 %v4166, %v4220
        %v4230 = vadd.f32 %v4171, %v4220
        %v4231 = vadd.f32 %v4176, %v4224
        %v4232 = vadd.f32 %v4181, %v4224
        %v4233 = vadd.f32 %v4186, %v4224
        %v4234 = vadd.f32 %v4191, %v4224
        %v4235 = vadd.f32 %v4227, %v4035
        %v4236 = vadd.f32 %v4228, %v4040
        %v4237 = vadd.f32 %v4229, %v4045
        %v4238 = vadd.f32 %v4230, %v4050
        %v4239 = vadd.f32 %v4231, %v4055
        %v4240 = vadd.f32 %v4232, %v4060
        %v4241 = vadd.f32 %v4233, %v4065
        %v4242 = vadd.f32 %v4234, %v4070
        %v4243 = vmax.f32 %v4235, %v4237
        %v4244 = vmax.f32 %v4236, %v4238
        %v4245 = vmax.f32 %v4243, %v4244
        %v4246 = vrot.slane %v4245, 4
        %v4247 = vmax.f32 %v4245, %v4246
        %v4248 = vrot.slane %v4247, 2
        %v4249 = vmax.f32 %v4247, %v4248
        %v4250 = vrot.slane %v4249, 1
        %v4251 = vmax.f32 %v4249, %v4250
        %v4252 = vmax.f32 %v4239, %v4241
        %v4253 = vmax.f32 %v4240, %v4242
        %v4254 = vmax.f32 %v4252, %v4253
        %v4255 = vrot.slane %v4254, 4
        %v4256 = vmax.f32 %v4254, %v4255
        %v4257 = vrot.slane %v4256, 2
        %v4258 = vmax.f32 %v4256, %v4257
        %v4259 = vrot.slane %v4258, 1
        %v4260 = vmax.f32 %v4258, %v4259
        %v4261 = vmax.f32 %v4251, 0.0
        %v4262 = vmax.f32 %v4260, 0.0
        %v4263 = vld [vmem:[#allocation44] sm:$0xff]
        %v4264 = vld [vmem:[#allocation44 + $0x8] sm:$0xff]
        %v4265 = vld [vmem:[#allocation44 + $0x10] sm:$0xff]
        %v4266 = vld [vmem:[#allocation44 + $0x18] sm:$0xff]
        %v4267 = vld [vmem:[#allocation44 + $0x20] sm:$0xff]
        %v4268 = vld [vmem:[#allocation44 + $0x28] sm:$0xff]
        %v4269 = vld [vmem:[#allocation44 + $0x30] sm:$0xff]
        %v4270 = vld [vmem:[#allocation44 + $0x38] sm:$0xff]
        %v4271 = vld [vmem:[#allocation44 + $0x40] sm:$0xff]
        %v4272 = vld [vmem:[#allocation44 + $0x48] sm:$0xff]
        %v4273 = vld [vmem:[#allocation44 + $0x50] sm:$0xff]
        %v4274 = vld [vmem:[#allocation44 + $0x58] sm:$0xff]
        %v4275 = vld [vmem:[#allocation44 + $0x60] sm:$0xff]
        %v4276 = vld [vmem:[#allocation44 + $0x68] sm:$0xff]
        %v4277 = vld [vmem:[#allocation44 + $0x70] sm:$0xff]
        %v4278 = vld [vmem:[#allocation44 + $0x78] sm:$0xff]
        %v4279 = vld [vmem:[#allocation46] sm:$0x1]
        %v4281 = vlaneseq
        %v4282 = vshrl.u32 %v4281, 7
        %v4283 = vsub.s32 0, %v4282
        %v4284 = vrot.slane %v4279, %v4283
        %v4288 = vsel %vm2238, %v4262, %v4261
        %4290 = vmatprep.subr.mxu0 0.0
        %4291 = vmatpush1.msra.mxu0 %v4263
        %4292 = vmatprep.subr.mxu0 0.0
        %4293 = vmatpush1.msra.mxu0 %v4264
        %4294 = vmatprep.subr.mxu0 0.0
        %4295 = vmatpush1.msra.mxu0 %v4265
        %4296 = vmatprep.subr.mxu0 0.0
        %4297 = vmatpush1.msra.mxu0 %v4266
        %4298 = vmatprep.subr.mxu0 0.0
        %4299 = vmatpush1.msra.mxu0 %v4267
        %4300 = vmatprep.subr.mxu0 0.0
        %4301 = vmatpush1.msra.mxu0 %v4268
        %4302 = vmatprep.subr.mxu0 0.0
        %4303 = vmatpush1.msra.mxu0 %v4269
        %4304 = vmatprep.subr.mxu0 0.0
        %4305 = vmatpush1.msra.mxu0 %v4270
        %4306 = vmatprep.subr.mxu0 0.0
        %4307 = vmatpush1.msra.mxu0 %v4271
        %4308 = vmatprep.subr.mxu0 0.0
        %4309 = vmatpush1.msra.mxu0 %v4272
        %4310 = vmatprep.subr.mxu0 0.0
        %4311 = vmatpush1.msra.mxu0 %v4273
        %4312 = vmatprep.subr.mxu0 0.0
        %4313 = vmatpush1.msra.mxu0 %v4274
        %4314 = vmatprep.subr.mxu0 0.0
        %4315 = vmatpush1.msra.mxu0 %v4275
        %4316 = vmatprep.subr.mxu0 0.0
        %4317 = vmatpush1.msra.mxu0 %v4276
        %4318 = vmatprep.subr.mxu0 0.0
        %4319 = vmatpush1.msra.mxu0 %v4277
        %4320 = vmatprep.subr.mxu0 0.0
        %4321 = vmatpush1.msra.mxu0 %v4278
        %4322 = vmatprep.subr.mxu0 0.0
        %4323 = vmatpush1.msra.mxu0 0.0
        %4324 = vmatprep.subr.mxu0 0.0
        %4325 = vmatpush1.msra.mxu0 0.0
        %4326 = vmatprep.subr.mxu0 0.0
        %4327 = vmatpush1.msra.mxu0 0.0
        %4328 = vmatprep.subr.mxu0 0.0
        %4329 = vmatpush1.msra.mxu0 0.0
        %4330 = vmatprep.subr.mxu0 0.0
        %4331 = vmatpush1.msra.mxu0 0.0
        %4332 = vmatprep.subr.mxu0 0.0
        %4333 = vmatpush1.msra.mxu0 0.0
        %4334 = vmatprep.subr.mxu0 0.0
        %4335 = vmatpush1.msra.mxu0 0.0
        %4336 = vmatprep.subr.mxu0 0.0
        %4337 = vmatpush1.msra.mxu0 0.0
        %4338 = vmatprep.subr.mxu0 0.0
        %4339 = vmatpush1.msra.mxu0 0.0
        %4340 = vmatprep.subr.mxu0 0.0
        %4341 = vmatpush1.msra.mxu0 0.0
        %4342 = vmatprep.subr.mxu0 0.0
        %4343 = vmatpush1.msra.mxu0 0.0
        %4344 = vmatprep.subr.mxu0 0.0
        %4345 = vmatpush1.msra.mxu0 0.0
        %4346 = vmatprep.subr.mxu0 0.0
        %4347 = vmatpush1.msra.mxu0 0.0
        %4348 = vmatprep.subr.mxu0 0.0
        %4349 = vmatpush1.msra.mxu0 0.0
        %4350 = vmatprep.subr.mxu0 0.0
        %4351 = vmatpush1.msra.mxu0 0.0
        %4352 = vmatprep.subr.mxu0 0.0
        %4353 = vmatpush1.msra.mxu0 0.0
        %4354 = vmatprep.mubr.f32.mxu0 0.0
        %4355 = vmatmul.mubr.f32.gmra.mrb[0].mxu0 %v4288
        %v4356 = vpop.f32.mrb[0].mxu0
        %v4357 = vadd.f32 %v4284, %v4356
        %v4358 = vpop.f32.mrb[0].mxu0
        %4359 = vdwg.mxu0
        %v4360 = vld [vmem:[#allocation49] sm:$0xff]
        %v4361 = vld [vmem:[#allocation49 + $0x8] sm:$0xff]
        %v4362 = vld [vmem:[#allocation49 + $0x10] sm:$0xff]
        %v4363 = vld [vmem:[#allocation49 + $0x18] sm:$0xff]
        %v4364 = vld [vmem:[#allocation49 + $0x20] sm:$0xff]
        %v4365 = vld [vmem:[#allocation49 + $0x28] sm:$0xff]
        %v4366 = vld [vmem:[#allocation49 + $0x30] sm:$0xff]
        %v4367 = vld [vmem:[#allocation49 + $0x38] sm:$0xff]
        %v4368 = vld [vmem:[#allocation49 + $0x40] sm:$0xff]
        %v4369 = vld [vmem:[#allocation49 + $0x48] sm:$0xff]
        %v4370 = vld [vmem:[#allocation49 + $0x50] sm:$0xff]
        %v4371 = vld [vmem:[#allocation49 + $0x58] sm:$0xff]
        %v4372 = vld [vmem:[#allocation49 + $0x60] sm:$0xff]
        %v4373 = vld [vmem:[#allocation49 + $0x68] sm:$0xff]
        %v4374 = vld [vmem:[#allocation49 + $0x70] sm:$0xff]
        %v4375 = vld [vmem:[#allocation49 + $0x78] sm:$0xff]
        %v4378 = vsel %vm2238, %v4260, %v4251
        %4380 = vmatprep.subr.mxu0 0.0
        %4381 = vmatpush1.msra.mxu0 %v4360
        %4382 = vmatprep.subr.mxu0 0.0
        %4383 = vmatpush1.msra.mxu0 %v4361
        %4384 = vmatprep.subr.mxu0 0.0
        %4385 = vmatpush1.msra.mxu0 %v4362
        %4386 = vmatprep.subr.mxu0 0.0
        %4387 = vmatpush1.msra.mxu0 %v4363
        %4388 = vmatprep.subr.mxu0 0.0
        %4389 = vmatpush1.msra.mxu0 %v4364
        %4390 = vmatprep.subr.mxu0 0.0
        %4391 = vmatpush1.msra.mxu0 %v4365
        %4392 = vmatprep.subr.mxu0 0.0
        %4393 = vmatpush1.msra.mxu0 %v4366
        %4394 = vmatprep.subr.mxu0 0.0
        %4395 = vmatpush1.msra.mxu0 %v4367
        %4396 = vmatprep.subr.mxu0 0.0
        %4397 = vmatpush1.msra.mxu0 %v4368
        %4398 = vmatprep.subr.mxu0 0.0
        %4399 = vmatpush1.msra.mxu0 %v4369
        %4400 = vmatprep.subr.mxu0 0.0
        %4401 = vmatpush1.msra.mxu0 %v4370
        %4402 = vmatprep.subr.mxu0 0.0
        %4403 = vmatpush1.msra.mxu0 %v4371
        %4404 = vmatprep.subr.mxu0 0.0
        %4405 = vmatpush1.msra.mxu0 %v4372
        %4406 = vmatprep.subr.mxu0 0.0
        %4407 = vmatpush1.msra.mxu0 %v4373
        %4408 = vmatprep.subr.mxu0 0.0
        %4409 = vmatpush1.msra.mxu0 %v4374
        %4410 = vmatprep.subr.mxu0 0.0
        %4411 = vmatpush1.msra.mxu0 %v4375
        %4412 = vmatprep.subr.mxu0 0.0
        %4413 = vmatpush1.msra.mxu0 0.0
        %4414 = vmatprep.subr.mxu0 0.0
        %4415 = vmatpush1.msra.mxu0 0.0
        %4416 = vmatprep.subr.mxu0 0.0
        %4417 = vmatpush1.msra.mxu0 0.0
        %4418 = vmatprep.subr.mxu0 0.0
        %4419 = vmatpush1.msra.mxu0 0.0
        %4420 = vmatprep.subr.mxu0 0.0
        %4421 = vmatpush1.msra.mxu0 0.0
        %4422 = vmatprep.subr.mxu0 0.0
        %4423 = vmatpush1.msra.mxu0 0.0
        %4424 = vmatprep.subr.mxu0 0.0
        %4425 = vmatpush1.msra.mxu0 0.0
        %4426 = vmatprep.subr.mxu0 0.0
        %4427 = vmatpush1.msra.mxu0 0.0
        %4428 = vmatprep.subr.mxu0 0.0
        %4429 = vmatpush1.msra.mxu0 0.0
        %4430 = vmatprep.subr.mxu0 0.0
        %4431 = vmatpush1.msra.mxu0 0.0
        %4432 = vmatprep.subr.mxu0 0.0
        %4433 = vmatpush1.msra.mxu0 0.0
        %4434 = vmatprep.subr.mxu0 0.0
        %4435 = vmatpush1.msra.mxu0 0.0
        %4436 = vmatprep.subr.mxu0 0.0
        %4437 = vmatpush1.msra.mxu0 0.0
        %4438 = vmatprep.subr.mxu0 0.0
        %4439 = vmatpush1.msra.mxu0 0.0
        %4440 = vmatprep.subr.mxu0 0.0
        %4441 = vmatpush1.msra.mxu0 0.0
        %4442 = vmatprep.subr.mxu0 0.0
        %4443 = vmatpush1.msra.mxu0 0.0
        %4444 = vmatprep.mubr.f32.mxu0 0.0
        %4445 = vmatmul.mubr.f32.gmra.mrb[0].mxu0 %v4378
        %v4446 = vpop.f32.mrb[0].mxu0
        %v4447 = vadd.f32 0.0, %v4446
        %v4448 = vpop.f32.mrb[0].mxu0
        %4449 = vdwg.mxu0
        %v4450 = vmax.f32 %v4235, 0.0
        %v4451 = vmax.f32 %v4236, 0.0
        %v4452 = vmax.f32 %v4237, 0.0
        %v4453 = vmax.f32 %v4238, 0.0
        %v4454 = vmax.f32 %v4239, 0.0
        %v4455 = vmax.f32 %v4240, 0.0
        %v4456 = vmax.f32 %v4241, 0.0
        %v4457 = vmax.f32 %v4242, 0.0
        %v4458 = vld [vmem:[#allocation43] sm:$0xff]
        %v4459 = vld [vmem:[#allocation43 + $0x8] sm:$0xff]
        %v4460 = vld [vmem:[#allocation43 + $0x10] sm:$0xff]
        %v4461 = vld [vmem:[#allocation43 + $0x18] sm:$0xff]
        %v4462 = vld [vmem:[#allocation43 + $0x20] sm:$0xff]
        %v4463 = vld [vmem:[#allocation43 + $0x28] sm:$0xff]
        %v4464 = vld [vmem:[#allocation43 + $0x30] sm:$0xff]
        %v4465 = vld [vmem:[#allocation43 + $0x38] sm:$0xff]
        %v4466 = vld [vmem:[#allocation43 + $0x40] sm:$0xff]
        %v4467 = vld [vmem:[#allocation43 + $0x48] sm:$0xff]
        %v4468 = vld [vmem:[#allocation43 + $0x50] sm:$0xff]
        %v4469 = vld [vmem:[#allocation43 + $0x58] sm:$0xff]
        %v4470 = vld [vmem:[#allocation43 + $0x60] sm:$0xff]
        %v4471 = vld [vmem:[#allocation43 + $0x68] sm:$0xff]
        %v4472 = vld [vmem:[#allocation43 + $0x70] sm:$0xff]
        %v4473 = vld [vmem:[#allocation43 + $0x78] sm:$0xff]
        %4474 = vmatprep.subr.mxu0 0.0
        %4475 = vmatpush1.msra.mxu0 %v4458
        %4476 = vmatprep.subr.mxu0 0.0
        %4477 = vmatpush1.msra.mxu0 %v4459
        %4478 = vmatprep.subr.mxu0 0.0
        %4479 = vmatpush1.msra.mxu0 %v4460
        %4480 = vmatprep.subr.mxu0 0.0
        %4481 = vmatpush1.msra.mxu0 %v4461
        %4482 = vmatprep.subr.mxu0 0.0
        %4483 = vmatpush1.msra.mxu0 %v4462
        %4484 = vmatprep.subr.mxu0 0.0
        %4485 = vmatpush1.msra.mxu0 %v4463
        %4486 = vmatprep.subr.mxu0 0.0
        %4487 = vmatpush1.msra.mxu0 %v4464
        %4488 = vmatprep.subr.mxu0 0.0
        %4489 = vmatpush1.msra.mxu0 %v4465
        %4490 = vmatprep.subr.mxu0 0.0
        %4491 = vmatpush1.msra.mxu0 %v4466
        %4492 = vmatprep.subr.mxu0 0.0
        %4493 = vmatpush1.msra.mxu0 %v4467
        %4494 = vmatprep.subr.mxu0 0.0
        %4495 = vmatpush1.msra.mxu0 %v4468
        %4496 = vmatprep.subr.mxu0 0.0
        %4497 = vmatpush1.msra.mxu0 %v4469
        %4498 = vmatprep.subr.mxu0 0.0
        %4499 = vmatpush1.msra.mxu0 %v4470
        %4500 = vmatprep.subr.mxu0 0.0
        %4501 = vmatpush1.msra.mxu0 %v4471
        %4502 = vmatprep.subr.mxu0 0.0
        %4503 = vmatpush1.msra.mxu0 %v4472
        %4504 = vmatprep.subr.mxu0 0.0
        %4505 = vmatpush1.msra.mxu0 %v4473
        %4506 = vmatprep.subr.mxu0 0.0
        %4507 = vmatpush1.msra.mxu0 0.0
        %4508 = vmatprep.subr.mxu0 0.0
        %4509 = vmatpush1.msra.mxu0 0.0
        %4510 = vmatprep.subr.mxu0 0.0
        %4511 = vmatpush1.msra.mxu0 0.0
        %4512 = vmatprep.subr.mxu0 0.0
        %4513 = vmatpush1.msra.mxu0 0.0
        %4514 = vmatprep.subr.mxu0 0.0
        %4515 = vmatpush1.msra.mxu0 0.0
        %4516 = vmatprep.subr.mxu0 0.0
        %4517 = vmatpush1.msra.mxu0 0.0
        %4518 = vmatprep.subr.mxu0 0.0
        %4519 = vmatpush1.msra.mxu0 0.0
        %4520 = vmatprep.subr.mxu0 0.0
        %4521 = vmatpush1.msra.mxu0 0.0
        %4522 = vmatprep.subr.mxu0 0.0
        %4523 = vmatpush1.msra.mxu0 0.0
        %4524 = vmatprep.subr.mxu0 0.0
        %4525 = vmatpush1.msra.mxu0 0.0
        %4526 = vmatprep.subr.mxu0 0.0
        %4527 = vmatpush1.msra.mxu0 0.0
        %4528 = vmatprep.subr.mxu0 0.0
        %4529 = vmatpush1.msra.mxu0 0.0
        %4530 = vmatprep.subr.mxu0 0.0
        %4531 = vmatpush1.msra.mxu0 0.0
        %4532 = vmatprep.subr.mxu0 0.0
        %4533 = vmatpush1.msra.mxu0 0.0
        %4534 = vmatprep.subr.mxu0 0.0
        %4535 = vmatpush1.msra.mxu0 0.0
        %4536 = vmatprep.subr.mxu0 0.0
        %4537 = vmatpush1.msra.mxu0 0.0
        %4538 = vmatprep.mubr.f32.mxu0 0.0
        %4539 = vmatmul.mubr.f32.gmra.mrb[0].mxu0 %v4450
        %v4540 = vpop.f32.mrb[0].mxu0
        %v4541 = vadd.f32 0.0, %v4540
        %v4542 = vpop.f32.mrb[0].mxu0
        %4543 = vmatprep.mubr.f32.mxu0 0.0
        %4544 = vmatmul.mubr.f32.gmra.mrb[0].mxu0 %v4451
        %v4545 = vpop.f32.mrb[0].mxu0
        %v4546 = vadd.f32 0.0, %v4545
        %v4547 = vpop.f32.mrb[0].mxu0
        %4548 = vmatprep.mubr.f32.mxu0 0.0
        %4549 = vmatmul.mubr.f32.gmra.mrb[0].mxu0 %v4452
        %v4550 = vpop.f32.mrb[0].mxu0
        %v4551 = vadd.f32 0.0, %v4550
        %v4552 = vpop.f32.mrb[0].mxu0
        %4553 = vmatprep.mubr.f32.mxu0 0.0
        %4554 = vmatmul.mubr.f32.gmra.mrb[0].mxu0 %v4453
        %v4555 = vpop.f32.mrb[0].mxu0
        %v4556 = vadd.f32 0.0, %v4555
        %v4557 = vpop.f32.mrb[0].mxu0
        %4558 = vmatprep.mubr.f32.mxu0 0.0
        %4559 = vmatmul.mubr.f32.gmra.mrb[0].mxu0 %v4454
        %v4560 = vpop.f32.mrb[0].mxu0
        %v4561 = vadd.f32 0.0, %v4560
        %v4562 = vpop.f32.mrb[0].mxu0
        %4563 = vmatprep.mubr.f32.mxu0 0.0
        %4564 = vmatmul.mubr.f32.gmra.mrb[0].mxu0 %v4455
        %v4565 = vpop.f32.mrb[0].mxu0
        %v4566 = vadd.f32 0.0, %v4565
        %v4567 = vpop.f32.mrb[0].mxu0
        %4568 = vmatprep.mubr.f32.mxu0 0.0
        %4569 = vmatmul.mubr.f32.gmra.mrb[0].mxu0 %v4456
        %v4570 = vpop.f32.mrb[0].mxu0
        %v4571 = vadd.f32 0.0, %v4570
        %v4572 = vpop.f32.mrb[0].mxu0
        %4573 = vmatprep.mubr.f32.mxu0 0.0
        %4574 = vmatmul.mubr.f32.gmra.mrb[0].mxu0 %v4457
        %v4575 = vpop.f32.mrb[0].mxu0
        %v4576 = vadd.f32 0.0, %v4575
        %v4577 = vpop.f32.mrb[0].mxu0
        %4578 = vdwg.mxu0
        %v4581 = vunpack.c.l.s4 1966171168
        %v4582 = vunpack.c.0.s8 %v4581
        %v4583 = vlaneseq
        %v4584 = vshrl.u32 %v4583, 7
        %v4585 = vsub.s32 %v4582, %v4584
        %v4586 = vrot.slane %v4357, %v4585
        %v4587 = vcombine.high %v4586, %v4586
        %v4589 = vunpack.c.l.s4 1966171168
        %v4590 = vunpack.c.0.s8 %v4589
        %v4591 = vlaneseq
        %v4592 = vshrl.u32 %v4591, 7
        %v4593 = vsub.s32 %v4590, %v4592
        %v4594 = vrot.slane %v4586, %v4593
        %v4596 = vunpack.c.l.s4 1966171168
        %v4597 = vunpack.c.0.s8 %v4596
        %v4598 = vlaneseq
        %v4599 = vshrl.u32 %v4598, 7
        %v4600 = vsub.s32 %v4597, %v4599
        %v4601 = vrot.slane %v4587, %v4600
        %v4602 = vlaneseq
        %v4603 = vshrl.u32 %v4602, 7
        %v4604 = vsub.s32 0, %v4603
        %v4605 = vrot.slane %v4594, %v4604
        %v4606 = vlaneseq
        %v4607 = vshrl.u32 %v4606, 7
        %v4608 = vsub.s32 0, %v4607
        %v4609 = vrot.slane %v4601, %v4608
        %v4612 = vadd.f32 %v4541, %v4605
        %v4613 = vadd.f32 %v4546, %v4605
        %v4614 = vadd.f32 %v4551, %v4605
        %v4615 = vadd.f32 %v4556, %v4605
        %v4616 = vadd.f32 %v4561, %v4609
        %v4617 = vadd.f32 %v4566, %v4609
        %v4618 = vadd.f32 %v4571, %v4609
        %v4619 = vadd.f32 %v4576, %v4609
        %v4620 = vmax.f32 %v4612, 0.0
        %v4621 = vmax.f32 %v4613, 0.0
        %v4622 = vmax.f32 %v4614, 0.0
        %v4623 = vmax.f32 %v4615, 0.0
        %v4624 = vmax.f32 %v4616, 0.0
        %v4625 = vmax.f32 %v4617, 0.0
        %v4626 = vmax.f32 %v4618, 0.0
        %v4627 = vmax.f32 %v4619, 0.0
        %v4628 = vld [vmem:[%s65] sm:$0xff]
        %v4629 = vld [vmem:[%s65 + $0x8] sm:$0xff]
        %v4630 = vld [vmem:[%s65 + $0x10] sm:$0xff]
        %v4631 = vld [vmem:[%s65 + $0x18] sm:$0xff]
        %v4632 = vld [vmem:[%s65 + $0x20] sm:$0xff]
        %v4633 = vld [vmem:[%s65 + $0x28] sm:$0xff]
        %v4634 = vld [vmem:[%s65 + $0x30] sm:$0xff]
        %v4635 = vld [vmem:[%s65 + $0x38] sm:$0xff]
        %v4636 = vld [vmem:[%s65 + $0x40] sm:$0xff]
        %v4637 = vld [vmem:[%s65 + $0x48] sm:$0xff]
        %v4638 = vld [vmem:[%s65 + $0x50] sm:$0xff]
        %v4639 = vld [vmem:[%s65 + $0x58] sm:$0xff]
        %v4640 = vld [vmem:[%s65 + $0x60] sm:$0xff]
        %v4641 = vld [vmem:[%s65 + $0x68] sm:$0xff]
        %v4642 = vld [vmem:[%s65 + $0x70] sm:$0xff]
        %v4643 = vld [vmem:[%s65 + $0x78] sm:$0xff]
        %v4644 = vld [vmem:[%s67] sm:$0x1]
        %v4646 = vlaneseq
        %v4647 = vshrl.u32 %v4646, 7
        %v4648 = vsub.s32 0, %v4647
        %v4649 = vrot.slane %v4644, %v4648
        %4651 = vmatprep.subr.mxu0 0.0
        %4652 = vmatpush1.msra.mxu0 %v4628
        %4653 = vmatprep.subr.mxu0 0.0
        %4654 = vmatpush1.msra.mxu0 %v4629
        %4655 = vmatprep.subr.mxu0 0.0
        %4656 = vmatpush1.msra.mxu0 %v4630
        %4657 = vmatprep.subr.mxu0 0.0
        %4658 = vmatpush1.msra.mxu0 %v4631
        %4659 = vmatprep.subr.mxu0 0.0
        %4660 = vmatpush1.msra.mxu0 %v4632
        %4661 = vmatprep.subr.mxu0 0.0
        %4662 = vmatpush1.msra.mxu0 %v4633
        %4663 = vmatprep.subr.mxu0 0.0
        %4664 = vmatpush1.msra.mxu0 %v4634
        %4665 = vmatprep.subr.mxu0 0.0
        %4666 = vmatpush1.msra.mxu0 %v4635
        %4667 = vmatprep.subr.mxu0 0.0
        %4668 = vmatpush1.msra.mxu0 %v4636
        %4669 = vmatprep.subr.mxu0 0.0
        %4670 = vmatpush1.msra.mxu0 %v4637
        %4671 = vmatprep.subr.mxu0 0.0
        %4672 = vmatpush1.msra.mxu0 %v4638
        %4673 = vmatprep.subr.mxu0 0.0
        %4674 = vmatpush1.msra.mxu0 %v4639
        %4675 = vmatprep.subr.mxu0 0.0
        %4676 = vmatpush1.msra.mxu0 %v4640
        %4677 = vmatprep.subr.mxu0 0.0
        %4678 = vmatpush1.msra.mxu0 %v4641
        %4679 = vmatprep.subr.mxu0 0.0
        %4680 = vmatpush1.msra.mxu0 %v4642
        %4681 = vmatprep.subr.mxu0 0.0
        %4682 = vmatpush1.msra.mxu0 %v4643
        %4683 = vmatprep.subr.mxu0 0.0
        %4684 = vmatpush1.msra.mxu0 0.0
        %4685 = vmatprep.subr.mxu0 0.0
        %4686 = vmatpush1.msra.mxu0 0.0
        %4687 = vmatprep.subr.mxu0 0.0
        %4688 = vmatpush1.msra.mxu0 0.0
        %4689 = vmatprep.subr.mxu0 0.0
        %4690 = vmatpush1.msra.mxu0 0.0
        %4691 = vmatprep.subr.mxu0 0.0
        %4692 = vmatpush1.msra.mxu0 0.0
        %4693 = vmatprep.subr.mxu0 0.0
        %4694 = vmatpush1.msra.mxu0 0.0
        %4695 = vmatprep.subr.mxu0 0.0
        %4696 = vmatpush1.msra.mxu0 0.0
        %4697 = vmatprep.subr.mxu0 0.0
        %4698 = vmatpush1.msra.mxu0 0.0
        %4699 = vmatprep.subr.mxu0 0.0
        %4700 = vmatpush1.msra.mxu0 0.0
        %4701 = vmatprep.subr.mxu0 0.0
        %4702 = vmatpush1.msra.mxu0 0.0
        %4703 = vmatprep.subr.mxu0 0.0
        %4704 = vmatpush1.msra.mxu0 0.0
        %4705 = vmatprep.subr.mxu0 0.0
        %4706 = vmatpush1.msra.mxu0 0.0
        %4707 = vmatprep.subr.mxu0 0.0
        %4708 = vmatpush1.msra.mxu0 0.0
        %4709 = vmatprep.subr.mxu0 0.0
        %4710 = vmatpush1.msra.mxu0 0.0
        %4711 = vmatprep.subr.mxu0 0.0
        %4712 = vmatpush1.msra.mxu0 0.0
        %4713 = vmatprep.subr.mxu0 0.0
        %4714 = vmatpush1.msra.mxu0 0.0
        %4715 = vmatprep.mubr.f32.mxu0 0.0
        %4716 = vmatmul.mubr.f32.gmra.mrb[0].mxu0 %v4620
        %v4717 = vpop.f32.mrb[0].mxu0
        %v4718 = vadd.f32 %v4649, %v4717
        %v4719 = vpop.f32.mrb[0].mxu0
        %4720 = vmatprep.mubr.f32.mxu0 0.0
        %4721 = vmatmul.mubr.f32.gmra.mrb[0].mxu0 %v4621
        %v4722 = vpop.f32.mrb[0].mxu0
        %v4723 = vadd.f32 %v4649, %v4722
        %v4724 = vpop.f32.mrb[0].mxu0
        %4725 = vmatprep.mubr.f32.mxu0 0.0
        %4726 = vmatmul.mubr.f32.gmra.mrb[0].mxu0 %v4622
        %v4727 = vpop.f32.mrb[0].mxu0
        %v4728 = vadd.f32 %v4649, %v4727
        %v4729 = vpop.f32.mrb[0].mxu0
        %4730 = vmatprep.mubr.f32.mxu0 0.0
        %4731 = vmatmul.mubr.f32.gmra.mrb[0].mxu0 %v4623
        %v4732 = vpop.f32.mrb[0].mxu0
        %v4733 = vadd.f32 %v4649, %v4732
        %v4734 = vpop.f32.mrb[0].mxu0
        %4735 = vmatprep.mubr.f32.mxu0 0.0
        %4736 = vmatmul.mubr.f32.gmra.mrb[0].mxu0 %v4624
        %v4737 = vpop.f32.mrb[0].mxu0
        %v4738 = vadd.f32 %v4649, %v4737
        %v4739 = vpop.f32.mrb[0].mxu0
        %4740 = vmatprep.mubr.f32.mxu0 0.0
        %4741 = vmatmul.mubr.f32.gmra.mrb[0].mxu0 %v4625
        %v4742 = vpop.f32.mrb[0].mxu0
        %v4743 = vadd.f32 %v4649, %v4742
        %v4744 = vpop.f32.mrb[0].mxu0
        %4745 = vmatprep.mubr.f32.mxu0 0.0
        %4746 = vmatmul.mubr.f32.gmra.mrb[0].mxu0 %v4626
        %v4747 = vpop.f32.mrb[0].mxu0
        %v4748 = vadd.f32 %v4649, %v4747
        %v4749 = vpop.f32.mrb[0].mxu0
        %4750 = vmatprep.mubr.f32.mxu0 0.0
        %4751 = vmatmul.mubr.f32.gmra.mrb[0].mxu0 %v4627
        %v4752 = vpop.f32.mrb[0].mxu0
        %v4753 = vadd.f32 %v4649, %v4752
        %v4754 = vpop.f32.mrb[0].mxu0
        %4755 = vdwg.mxu0
        %v4756 = vld [vmem:[#allocation47] sm:$0xff]
        %v4757 = vld [vmem:[#allocation47 + $0x8] sm:$0xff]
        %v4758 = vld [vmem:[#allocation47 + $0x10] sm:$0xff]
        %v4759 = vld [vmem:[#allocation47 + $0x18] sm:$0xff]
        %v4760 = vld [vmem:[#allocation47 + $0x20] sm:$0xff]
        %v4761 = vld [vmem:[#allocation47 + $0x28] sm:$0xff]
        %v4762 = vld [vmem:[#allocation47 + $0x30] sm:$0xff]
        %v4763 = vld [vmem:[#allocation47 + $0x38] sm:$0xff]
        %v4764 = vld [vmem:[#allocation47 + $0x40] sm:$0xff]
        %v4765 = vld [vmem:[#allocation47 + $0x48] sm:$0xff]
        %v4766 = vld [vmem:[#allocation47 + $0x50] sm:$0xff]
        %v4767 = vld [vmem:[#allocation47 + $0x58] sm:$0xff]
        %v4768 = vld [vmem:[#allocation47 + $0x60] sm:$0xff]
        %v4769 = vld [vmem:[#allocation47 + $0x68] sm:$0xff]
        %v4770 = vld [vmem:[#allocation47 + $0x70] sm:$0xff]
        %v4771 = vld [vmem:[#allocation47 + $0x78] sm:$0xff]
        %4772 = vmatprep.subr.mxu0 0.0
        %4773 = vmatpush1.msra.mxu0 %v4756
        %4774 = vmatprep.subr.mxu0 0.0
        %4775 = vmatpush1.msra.mxu0 %v4757
        %4776 = vmatprep.subr.mxu0 0.0
        %4777 = vmatpush1.msra.mxu0 %v4758
        %4778 = vmatprep.subr.mxu0 0.0
        %4779 = vmatpush1.msra.mxu0 %v4759
        %4780 = vmatprep.subr.mxu0 0.0
        %4781 = vmatpush1.msra.mxu0 %v4760
        %4782 = vmatprep.subr.mxu0 0.0
        %4783 = vmatpush1.msra.mxu0 %v4761
        %4784 = vmatprep.subr.mxu0 0.0
        %4785 = vmatpush1.msra.mxu0 %v4762
        %4786 = vmatprep.subr.mxu0 0.0
        %4787 = vmatpush1.msra.mxu0 %v4763
        %4788 = vmatprep.subr.mxu0 0.0
        %4789 = vmatpush1.msra.mxu0 %v4764
        %4790 = vmatprep.subr.mxu0 0.0
        %4791 = vmatpush1.msra.mxu0 %v4765
        %4792 = vmatprep.subr.mxu0 0.0
        %4793 = vmatpush1.msra.mxu0 %v4766
        %4794 = vmatprep.subr.mxu0 0.0
        %4795 = vmatpush1.msra.mxu0 %v4767
        %4796 = vmatprep.subr.mxu0 0.0
        %4797 = vmatpush1.msra.mxu0 %v4768
        %4798 = vmatprep.subr.mxu0 0.0
        %4799 = vmatpush1.msra.mxu0 %v4769
        %4800 = vmatprep.subr.mxu0 0.0
        %4801 = vmatpush1.msra.mxu0 %v4770
        %4802 = vmatprep.subr.mxu0 0.0
        %4803 = vmatpush1.msra.mxu0 %v4771
        %4804 = vmatprep.subr.mxu0 0.0
        %4805 = vmatpush1.msra.mxu0 0.0
        %4806 = vmatprep.subr.mxu0 0.0
        %4807 = vmatpush1.msra.mxu0 0.0
        %4808 = vmatprep.subr.mxu0 0.0
        %4809 = vmatpush1.msra.mxu0 0.0
        %4810 = vmatprep.subr.mxu0 0.0
        %4811 = vmatpush1.msra.mxu0 0.0
        %4812 = vmatprep.subr.mxu0 0.0
        %4813 = vmatpush1.msra.mxu0 0.0
        %4814 = vmatprep.subr.mxu0 0.0
        %4815 = vmatpush1.msra.mxu0 0.0
        %4816 = vmatprep.subr.mxu0 0.0
        %4817 = vmatpush1.msra.mxu0 0.0
        %4818 = vmatprep.subr.mxu0 0.0
        %4819 = vmatpush1.msra.mxu0 0.0
        %4820 = vmatprep.subr.mxu0 0.0
        %4821 = vmatpush1.msra.mxu0 0.0
        %4822 = vmatprep.subr.mxu0 0.0
        %4823 = vmatpush1.msra.mxu0 0.0
        %4824 = vmatprep.subr.mxu0 0.0
        %4825 = vmatpush1.msra.mxu0 0.0
        %4826 = vmatprep.subr.mxu0 0.0
        %4827 = vmatpush1.msra.mxu0 0.0
        %4828 = vmatprep.subr.mxu0 0.0
        %4829 = vmatpush1.msra.mxu0 0.0
        %4830 = vmatprep.subr.mxu0 0.0
        %4831 = vmatpush1.msra.mxu0 0.0
        %4832 = vmatprep.subr.mxu0 0.0
        %4833 = vmatpush1.msra.mxu0 0.0
        %4834 = vmatprep.subr.mxu0 0.0
        %4835 = vmatpush1.msra.mxu0 0.0
        %4836 = vmatprep.mubr.f32.mxu0 0.0
        %4837 = vmatmul.mubr.f32.gmra.mrb[0].mxu0 %v4235
        %v4838 = vpop.f32.mrb[0].mxu0
        %v4839 = vadd.f32 0.0, %v4838
        %v4840 = vpop.f32.mrb[0].mxu0
        %4841 = vmatprep.mubr.f32.mxu0 0.0
        %4842 = vmatmul.mubr.f32.gmra.mrb[0].mxu0 %v4236
        %v4843 = vpop.f32.mrb[0].mxu0
        %v4844 = vadd.f32 0.0, %v4843
        %v4845 = vpop.f32.mrb[0].mxu0
        %4846 = vmatprep.mubr.f32.mxu0 0.0
        %4847 = vmatmul.mubr.f32.gmra.mrb[0].mxu0 %v4237
        %v4848 = vpop.f32.mrb[0].mxu0
        %v4849 = vadd.f32 0.0, %v4848
        %v4850 = vpop.f32.mrb[0].mxu0
        %4851 = vmatprep.mubr.f32.mxu0 0.0
        %4852 = vmatmul.mubr.f32.gmra.mrb[0].mxu0 %v4238
        %v4853 = vpop.f32.mrb[0].mxu0
        %v4854 = vadd.f32 0.0, %v4853
        %v4855 = vpop.f32.mrb[0].mxu0
        %4856 = vmatprep.mubr.f32.mxu0 0.0
        %4857 = vmatmul.mubr.f32.gmra.mrb[0].mxu0 %v4239
        %v4858 = vpop.f32.mrb[0].mxu0
        %v4859 = vadd.f32 0.0, %v4858
        %v4860 = vpop.f32.mrb[0].mxu0
        %4861 = vmatprep.mubr.f32.mxu0 0.0
        %4862 = vmatmul.mubr.f32.gmra.mrb[0].mxu0 %v4240
        %v4863 = vpop.f32.mrb[0].mxu0
        %v4864 = vadd.f32 0.0, %v4863
        %v4865 = vpop.f32.mrb[0].mxu0
        %4866 = vmatprep.mubr.f32.mxu0 0.0
        %4867 = vmatmul.mubr.f32.gmra.mrb[0].mxu0 %v4241
        %v4868 = vpop.f32.mrb[0].mxu0
        %v4869 = vadd.f32 0.0, %v4868
        %v4870 = vpop.f32.mrb[0].mxu0
        %4871 = vmatprep.mubr.f32.mxu0 0.0
        %4872 = vmatmul.mubr.f32.gmra.mrb[0].mxu0 %v4242
        %v4873 = vpop.f32.mrb[0].mxu0
        %v4874 = vadd.f32 0.0, %v4873
        %v4875 = vpop.f32.mrb[0].mxu0
        %4876 = vdwg.mxu0
        %v4879 = vunpack.c.l.s4 1966171168
        %v4880 = vunpack.c.0.s8 %v4879
        %v4881 = vlaneseq
        %v4882 = vshrl.u32 %v4881, 7
        %v4883 = vsub.s32 %v4880, %v4882
        %v4884 = vrot.slane %v4447, %v4883
        %v4885 = vcombine.high %v4884, %v4884
        %v4887 = vunpack.c.l.s4 1966171168
        %v4888 = vunpack.c.0.s8 %v4887
        %v4889 = vlaneseq
        %v4890 = vshrl.u32 %v4889, 7
        %v4891 = vsub.s32 %v4888, %v4890
        %v4892 = vrot.slane %v4884, %v4891
        %v4894 = vunpack.c.l.s4 1966171168
        %v4895 = vunpack.c.0.s8 %v4894
        %v4896 = vlaneseq
        %v4897 = vshrl.u32 %v4896, 7
        %v4898 = vsub.s32 %v4895, %v4897
        %v4899 = vrot.slane %v4885, %v4898
        %v4900 = vlaneseq
        %v4901 = vshrl.u32 %v4900, 7
        %v4902 = vsub.s32 0, %v4901
        %v4903 = vrot.slane %v4892, %v4902
        %v4904 = vlaneseq
        %v4905 = vshrl.u32 %v4904, 7
        %v4906 = vsub.s32 0, %v4905
        %v4907 = vrot.slane %v4899, %v4906
        %v4910 = vadd.f32 %v4839, %v4903
        %v4911 = vadd.f32 %v4844, %v4903
        %v4912 = vadd.f32 %v4849, %v4903
        %v4913 = vadd.f32 %v4854, %v4903
        %v4914 = vadd.f32 %v4859, %v4907
        %v4915 = vadd.f32 %v4864, %v4907
        %v4916 = vadd.f32 %v4869, %v4907
        %v4917 = vadd.f32 %v4874, %v4907
        %v4918 = vadd.f32 %v4910, %v4718
        %v4919 = vadd.f32 %v4911, %v4723
        %v4920 = vadd.f32 %v4912, %v4728
        %v4921 = vadd.f32 %v4913, %v4733
        %v4922 = vadd.f32 %v4914, %v4738
        %v4923 = vadd.f32 %v4915, %v4743
        %v4924 = vadd.f32 %v4916, %v4748
        %v4925 = vadd.f32 %v4917, %v4753
        %v4926 = vmax.f32 %v4918, %v4920
        %v4927 = vmax.f32 %v4919, %v4921
        %v4928 = vmax.f32 %v4926, %v4927
        %v4929 = vrot.slane %v4928, 4
        %v4930 = vmax.f32 %v4928, %v4929
        %v4931 = vrot.slane %v4930, 2
        %v4932 = vmax.f32 %v4930, %v4931
        %v4933 = vrot.slane %v4932, 1
        %v4934 = vmax.f32 %v4932, %v4933
        %v4935 = vmax.f32 %v4922, %v4924
        %v4936 = vmax.f32 %v4923, %v4925
        %v4937 = vmax.f32 %v4935, %v4936
        %v4938 = vrot.slane %v4937, 4
        %v4939 = vmax.f32 %v4937, %v4938
        %v4940 = vrot.slane %v4939, 2
        %v4941 = vmax.f32 %v4939, %v4940
        %v4942 = vrot.slane %v4941, 1
        %v4943 = vmax.f32 %v4941, %v4942
        %v4944 = vmax.f32 %v4934, 0.0
        %v4945 = vmax.f32 %v4943, 0.0
        %v4946 = vld [vmem:[#allocation50] sm:$0xff]
        %v4947 = vld [vmem:[#allocation50 + $0x8] sm:$0xff]
        %v4948 = vld [vmem:[#allocation50 + $0x10] sm:$0xff]
        %v4949 = vld [vmem:[#allocation50 + $0x18] sm:$0xff]
        %v4950 = vld [vmem:[#allocation50 + $0x20] sm:$0xff]
        %v4951 = vld [vmem:[#allocation50 + $0x28] sm:$0xff]
        %v4952 = vld [vmem:[#allocation50 + $0x30] sm:$0xff]
        %v4953 = vld [vmem:[#allocation50 + $0x38] sm:$0xff]
        %v4954 = vld [vmem:[#allocation50 + $0x40] sm:$0xff]
        %v4955 = vld [vmem:[#allocation50 + $0x48] sm:$0xff]
        %v4956 = vld [vmem:[#allocation50 + $0x50] sm:$0xff]
        %v4957 = vld [vmem:[#allocation50 + $0x58] sm:$0xff]
        %v4958 = vld [vmem:[#allocation50 + $0x60] sm:$0xff]
        %v4959 = vld [vmem:[#allocation50 + $0x68] sm:$0xff]
        %v4960 = vld [vmem:[#allocation50 + $0x70] sm:$0xff]
        %v4961 = vld [vmem:[#allocation50 + $0x78] sm:$0xff]
        %v4962 = vld [vmem:[%s75] sm:$0x1]
        %v4964 = vlaneseq
        %v4965 = vshrl.u32 %v4964, 7
        %v4966 = vsub.s32 0, %v4965
        %v4967 = vrot.slane %v4962, %v4966
        %v4971 = vsel %vm2238, %v4945, %v4944
        %4973 = vmatprep.subr.mxu0 0.0
        %4974 = vmatpush1.msra.mxu0 %v4946
        %4975 = vmatprep.subr.mxu0 0.0
        %4976 = vmatpush1.msra.mxu0 %v4947
        %4977 = vmatprep.subr.mxu0 0.0
        %4978 = vmatpush1.msra.mxu0 %v4948
        %4979 = vmatprep.subr.mxu0 0.0
        %4980 = vmatpush1.msra.mxu0 %v4949
        %4981 = vmatprep.subr.mxu0 0.0
        %4982 = vmatpush1.msra.mxu0 %v4950
        %4983 = vmatprep.subr.mxu0 0.0
        %4984 = vmatpush1.msra.mxu0 %v4951
        %4985 = vmatprep.subr.mxu0 0.0
        %4986 = vmatpush1.msra.mxu0 %v4952
        %4987 = vmatprep.subr.mxu0 0.0
        %4988 = vmatpush1.msra.mxu0 %v4953
        %4989 = vmatprep.subr.mxu0 0.0
        %4990 = vmatpush1.msra.mxu0 %v4954
        %4991 = vmatprep.subr.mxu0 0.0
        %4992 = vmatpush1.msra.mxu0 %v4955
        %4993 = vmatprep.subr.mxu0 0.0
        %4994 = vmatpush1.msra.mxu0 %v4956
        %4995 = vmatprep.subr.mxu0 0.0
        %4996 = vmatpush1.msra.mxu0 %v4957
        %4997 = vmatprep.subr.mxu0 0.0
        %4998 = vmatpush1.msra.mxu0 %v4958
        %4999 = vmatprep.subr.mxu0 0.0
        %5000 = vmatpush1.msra.mxu0 %v4959
        %5001 = vmatprep.subr.mxu0 0.0
        %5002 = vmatpush1.msra.mxu0 %v4960
        %5003 = vmatprep.subr.mxu0 0.0
        %5004 = vmatpush1.msra.mxu0 %v4961
        %5005 = vmatprep.subr.mxu0 0.0
        %5006 = vmatpush1.msra.mxu0 0.0
        %5007 = vmatprep.subr.mxu0 0.0
        %5008 = vmatpush1.msra.mxu0 0.0
        %5009 = vmatprep.subr.mxu0 0.0
        %5010 = vmatpush1.msra.mxu0 0.0
        %5011 = vmatprep.subr.mxu0 0.0
        %5012 = vmatpush1.msra.mxu0 0.0
        %5013 = vmatprep.subr.mxu0 0.0
        %5014 = vmatpush1.msra.mxu0 0.0
        %5015 = vmatprep.subr.mxu0 0.0
        %5016 = vmatpush1.msra.mxu0 0.0
        %5017 = vmatprep.subr.mxu0 0.0
        %5018 = vmatpush1.msra.mxu0 0.0
        %5019 = vmatprep.subr.mxu0 0.0
        %5020 = vmatpush1.msra.mxu0 0.0
        %5021 = vmatprep.subr.mxu0 0.0
        %5022 = vmatpush1.msra.mxu0 0.0
        %5023 = vmatprep.subr.mxu0 0.0
        %5024 = vmatpush1.msra.mxu0 0.0
        %5025 = vmatprep.subr.mxu0 0.0
        %5026 = vmatpush1.msra.mxu0 0.0
        %5027 = vmatprep.subr.mxu0 0.0
        %5028 = vmatpush1.msra.mxu0 0.0
        %5029 = vmatprep.subr.mxu0 0.0
        %5030 = vmatpush1.msra.mxu0 0.0
        %5031 = vmatprep.subr.mxu0 0.0
        %5032 = vmatpush1.msra.mxu0 0.0
        %5033 = vmatprep.subr.mxu0 0.0
        %5034 = vmatpush1.msra.mxu0 0.0
        %5035 = vmatprep.subr.mxu0 0.0
        %5036 = vmatpush1.msra.mxu0 0.0
        %5037 = vmatprep.mubr.f32.mxu0 0.0
        %5038 = vmatmul.mubr.f32.gmra.mrb[0].mxu0 %v4971
        %v5039 = vpop.f32.mrb[0].mxu0
        %v5040 = vadd.f32 %v4967, %v5039
        %v5041 = vpop.f32.mrb[0].mxu0
        %5042 = vdwg.mxu0
        %5043 = vst [vmem:[%s1593] sm:$0x3] %v5040
        %s5044 = sand.u32 %s919, 1
        %s5045 = scalar_lea.sflag [#allocation4], %s5044
        %s5046 = sand.u32 %s919, 1
        %s5047 = smul.addr %s5046, 2
        %s5048 = scalar_lea.vmem [#allocation52], %s5047
        // Predicated region
        $region301: #{tpu_custom_call.1} parent=171 // pred_check
          %p5049 = pneg %p929
        $region302: #{tpu_custom_call.1} parent=171 // pred_check_branch
          %5051 = sbr.rel (%p5049) target = $region304
        $region303: #{tpu_custom_call.1} parent=171 // pred_region
          %s5053 = ssub.s32 32, 32
          %5054 = vsyncadd %s5045, %s5053
          %s5055 = smul.addr %s108, 32
          %s5056 = scalar_lea.hbm %s77, %s5055
          %s5058 = sshll.u32 %s5048, 4
          %s5059 = int_to_ptr.vmem [resolvable:$true] %s5058
          %5061 = dma.vmem_to_hbm [thread:$0]  %s5059, 32, %s5056, %s5045
        $region304: #{tpu_custom_call.1} parent=171 // pred_fallthru
          _
      $region172: #{tpu_custom_call.1} parent=5 // pred_fallthru
        _
      %p5062 = scmp.le.s32.totalorder 2, %s103
      // Predicated region
      $region305: #{tpu_custom_call.1} parent=5 // pred_check
        %p5063 = pneg %p5062
      $region306: #{tpu_custom_call.1} parent=5 // pred_check_branch
        %5065 = sbr.rel (%p5063) target = $region308
      $region307: #{tpu_custom_call.1} parent=5 // pred_region
        %s5066 = ssub.s32 %s103, 2
        // Predicated region
        $region309: #{tpu_custom_call.1} parent=307 // pred_check
          %p5067 = pneg %p935
        $region310: #{tpu_custom_call.1} parent=307 // pred_check_branch
          %5069 = sbr.rel (%p5067) target = $region312
        $region311: #{tpu_custom_call.1} parent=307 // pred_region
          %s5070 = sand.u32 %s920, 1
          %s5071 = scalar_lea.sflag [#allocation4], %s5070
          %s5072 = sand.u32 %s920, 1
          %s5073 = smul.addr %s5072, 2
          %s5074 = scalar_lea.vmem [#allocation52], %s5073
          %5075 = dma.done %s5071, 32
        $region312: #{tpu_custom_call.1} parent=307 // pred_fallthru
          _
      $region308: #{tpu_custom_call.1} parent=5 // pred_fallthru
        _
    $region6: #{tpu_custom_call.1} parent=1 // loop_footer
      %s107 = sadd.s32 1, %s103
    $region7: #{tpu_custom_call.1} parent=1 // loop_footer_branch
      %102 = sbr.rel target = $region3
    $region8: #{tpu_custom_call.1} parent=1 // loop_exit
      _
    %5076 = vsyncpa [#allocation3], 1
    %s5077 = scalar_lea.sflag [#allocation3], 1
    %5078 = vsyncpa %s5077, 1
    %5079 = vsyncpa [#allocation6], 1
    %5080 = vsyncpa [#allocation9], 1
    %5081 = vsyncpa [#allocation12], 1
    %5082 = vsyncpa [#allocation15], 1
    %5083 = vsyncpa [#allocation18], 1
    %5084 = vsyncpa [#allocation21], 1
    %5085 = vsyncpa [#allocation24], 1
    %5086 = vsyncpa [#allocation27], 1
    %5087 = vsyncpa [#allocation30], 1
    %5088 = vsyncpa [#allocation33], 1
    %5089 = vsyncpa [#allocation36], 1
    %5090 = vsyncpa [#allocation39], 1
    %5091 = vsyncpa [#allocation42], 1
    %5092 = vsyncpa [#allocation45], 1
    %5093 = vsyncpa [#allocation48], 1
    %5094 = vsyncpa [#allocation51], 1
    %5095 = vsyncpa [#allocation4], 1
    %s5096 = scalar_lea.sflag [#allocation4], 1
    %5097 = vsyncpa %s5096, 1

</llo_original>
